<compile_context>
chip_gen: v5e
topology: v5e:2x2
jax: 0.10.0
libtpu: 0.0.40
codegen_flags: <defaults>
</compile_context>

<pallas_src>
import numpy as np
import jax
import jax.numpy as jnp
from jax.experimental import pallas as pl
from jax.experimental.pallas import tpu as pltpu

# ---------------- configuration ----------------
DIM_IN = 32
EXPANSION = 4
WIDTH = DIM_IN // EXPANSION          # 8
DIM_OUT = DIM_IN                     # dim_out=None -> dim_in
C_OUT = DIM_OUT * EXPANSION          # 128
HEADS = 2
DIM_HEAD = 16
INNER = HEADS * DIM_HEAD             # 32
P = 4                                # window_size
P2 = P * P                           # 16
SCALE = float(DIM_HEAD) ** -0.5
BN_EPS = 1e-5
INV_SQRT2 = float(1.0 / np.sqrt(2.0))
NEG_INF = -1e9                       # finite "minus infinity" (exp underflows to 0)
QKV_PAD = 128                        # packed q/k/v columns zero-padded to 128 lanes

B, H, W = 2, 16, 16                  # input spatial, divisible by window_size
WB = 16                              # windows per grid step -> 256 rows per matmul
                                     # (keeps the (rows,rows) score tile at 256x256,
                                     #  the v7x-safe cap; raise for larger workloads)


# ---------------- Pallas kernel ----------------
def _attention_block_kernel(x_ref, s1_ref, t1_ref, wqkv_ref, bqkv_ref,
                            mask_ref, wtail_ref, bout_ref, o_ref):
    x = x_ref[...]                                            # (rows, DIM_IN) f32

    # norm1 (BatchNorm2d eval, folded to scale/shift) + exact (erf) GELU.
    h = x * s1_ref[...] + t1_ref[...]
    h = 0.5 * h * (1.0 + jax.lax.erf(h * INV_SQRT2))
    hb = h.astype(jnp.bfloat16)                               # bf16 MXU input

    # One packed projection: columns [q_h0 q_h1 | k_h0 k_h1 | v_h0 v_h1 | pad].
    # norm2 + the dim_in->width conv + the attention scale are pre-folded on
    # the host into this weight/bias.
    qkv = jnp.dot(hb, wqkv_ref[...],
                  preferred_element_type=jnp.float32) + bqkv_ref[...]   # (rows, 128) f32

    mask = mask_ref[...]                                      # (rows, rows) block-diag

    ao_heads = []
    for hh in range(HEADS):                                   # 2 iterations, unrolled
        q = qkv[:, hh * DIM_HEAD:(hh + 1) * DIM_HEAD].astype(jnp.bfloat16)
        k = qkv[:, INNER + hh * DIM_HEAD: INNER + (hh + 1) * DIM_HEAD].astype(jnp.bfloat16)
        v = qkv[:, 2 * INNER + hh * DIM_HEAD: 2 * INNER + (hh + 1) * DIM_HEAD].astype(jnp.bfloat16)

        # Block-diagonal scores: one big matmul instead of 16 per-window ones.
        dots = jax.lax.dot_general(q, k, (((1,), (1,)), ((), ())),
                                   preferred_element_type=jnp.float32)  # (rows, rows)
        dots = dots + mask

        # Lane-dense softmax over 256 keys (off-window entries underflow to 0).
        m = jnp.max(dots, axis=-1, keepdims=True)
        e = jnp.exp(dots - m)
        denom = jnp.sum(e, axis=-1, keepdims=True)
        attn = (e * pl.reciprocal(denom, approx=True)).astype(jnp.bfloat16)

        ao_heads.append(jnp.dot(attn, v, preferred_element_type=jnp.float32))  # (rows, 16)

    # Fused tail: [h | attn_out] @ [shortcut ; to_out]  (+ bias) in one matmul.
    ao = jnp.concatenate(ao_heads, axis=1).astype(jnp.bfloat16)          # (rows, INNER)
    hcat = jnp.concatenate([hb, ao], axis=1)                             # (rows, DIM_IN+INNER)
    out = jnp.dot(hcat, wtail_ref[...],
                  preferred_element_type=jnp.float32) + bout_ref[...]    # (rows, C_OUT)
    o_ref[...] = out


# ---------------- wrapper ----------------
def attention_block_b(x_nchw, kp, wb=WB):
    b, c, h, w = x_nchw.shape
    assert c == DIM_IN and h % P == 0 and w % P == 0
    n1, n2 = h // P, w // P
    bw = b * n1 * n2
    assert bw % wb == 0, "number of windows must be divisible by the window batch"
    rows = wb * P2

    # NCHW -> window-major rows: row = ((b*n1+i1)*n2+i2)*P2 + p1*P + p2, channels last.
    # TODO(synk): in a full network keep activations window-major across layers to
    #             avoid this host-side HBM transpose on every block.
    xwin = (x_nchw.reshape(b, c, n1, P, n2, P)
                  .transpose(0, 2, 4, 3, 5, 1)
                  .reshape(bw * P2, c))

    out = pl.pallas_call(
        _attention_block_kernel,
        out_shape=jax.ShapeDtypeStruct((bw * P2, C_OUT), jnp.float32),
        grid=(bw // wb,),
        in_specs=[
            pl.BlockSpec((rows, DIM_IN), lambda i: (i, 0)),            # x windows
            pl.BlockSpec((1, DIM_IN), lambda i: (0, 0)),               # BN1 scale
            pl.BlockSpec((1, DIM_IN), lambda i: (0, 0)),               # BN1 shift
            pl.BlockSpec((DIM_IN, QKV_PAD), lambda i: (0, 0)),         # packed qkv w (bf16)
            pl.BlockSpec((1, QKV_PAD), lambda i: (0, 0)),              # packed qkv bias
            pl.BlockSpec((rows, rows), lambda i: (0, 0)),              # block-diag rel-pos mask
            pl.BlockSpec((DIM_IN + INNER, C_OUT), lambda i: (0, 0)),   # [shortcut;to_out] w (bf16)
            pl.BlockSpec((1, C_OUT), lambda i: (0, 0)),                # to_out bias
        ],
        out_specs=pl.BlockSpec((rows, C_OUT), lambda i: (i, 0)),
        compiler_params=pltpu.CompilerParams(dimension_semantics=("parallel",)),
    )(xwin, kp["s1"], kp["t1"], kp["wqkv"], kp["bqkv"],
      kp["mask"], kp["w_tail"], kp["bout"])

    # window-major -> NCHW
    y = (out.reshape(b, n1, n2, P, P, C_OUT)
            .transpose(0, 5, 1, 3, 2, 4)
            .reshape(b, C_OUT, h, w))
    return y


# ---------------- pure-JAX reference (NCHW, mirrors PyTorch semantics) ----------------
def reference(x, r):
    hp = jax.lax.Precision.HIGHEST
    b, c, hh, ww = x.shape
    n1, n2 = hh // P, ww // P
    s1, t1, s2, t2 = r["s1v"], r["t1v"], r["s2v"], r["t2v"]

    h = x * s1[None, :, None, None] + t1[None, :, None, None]
    h = 0.5 * h * (1.0 + jax.lax.erf(h * INV_SQRT2))
    skip = jnp.einsum('oc,bchw->bohw', r["ws"], h, precision=hp)
    xw = jnp.einsum('oc,bchw->bohw', r["wc"], h, precision=hp)
    xw = xw * s2[None, :, None, None] + t2[None, :, None, None]

    xwin = (xw.reshape(b, WIDTH, n1, P, n2, P)
              .transpose(0, 2, 4, 1, 3, 5)
              .reshape(b * n1 * n2, WIDTH, P, P))
    q = jnp.einsum('oc,bchw->bohw', r["wq"], xwin, precision=hp)
    kv = jnp.einsum('oc,bchw->bohw', r["wkv"], xwin, precision=hp)
    kk, vv = kv[:, :INNER], kv[:, INNER:]

    def to_heads(t):  # b (h d) x y -> b h (x y) d
        return t.reshape(t.shape[0], HEADS, DIM_HEAD, P2).transpose(0, 1, 3, 2)

    qh, kh, vh = map(to_heads, (q, kk, vv))
    dots = jnp.einsum('bhid,bhjd->bhij', qh, kh, precision=hp) * SCALE + r["mask"][None, None]
    attn = jax.nn.softmax(dots, axis=-1)
    o = jnp.einsum('bhij,bhjd->bhid', attn, vh, precision=hp)
    o = o.transpose(0, 1, 3, 2).reshape(-1, INNER, P, P)        # b (h d) x y
    o = jnp.einsum('oc,bchw->bohw', r["wout"], o, precision=hp) + r["boutv"][None, :, None, None]
    o = (o.reshape(b, n1, n2, C_OUT, P, P)
          .transpose(0, 3, 1, 4, 2, 5)
          .reshape(b, C_OUT, hh, ww))
    return o + skip


# ---------------- deterministic parameter init ----------------
def make_params(key):
    ks = jax.random.split(key, 16)
    f = jnp.float32

    # BatchNorm2d(dim_in) / BatchNorm2d(width): eval-mode -> per-channel scale/shift
    g1 = 1.0 + 0.1 * jax.random.normal(ks[0], (DIM_IN,), f)
    b1 = 0.1 * jax.random.normal(ks[1], (DIM_IN,), f)
    m1 = 0.1 * jax.random.normal(ks[2], (DIM_IN,), f)
    v1 = jax.random.uniform(ks[3], (DIM_IN,), f, 0.5, 1.5)
    g2 = 1.0 + 0.1 * jax.random.normal(ks[4], (WIDTH,), f)
    b2 = 0.1 * jax.random.normal(ks[5], (WIDTH,), f)
    m2 = 0.1 * jax.random.normal(ks[6], (WIDTH,), f)
    v2 = jax.random.uniform(ks[7], (WIDTH,), f, 0.5, 1.5)
    s1 = g1 / jnp.sqrt(v1 + BN_EPS); t1 = b1 - m1 * s1
    s2 = g2 / jnp.sqrt(v2 + BN_EPS); t2 = b2 - m2 * s2

    # conv weights stored PyTorch-style (out, in)
    ws = 0.05 * jax.random.normal(ks[8], (C_OUT, DIM_IN), f)        # shortcut conv1x1
    wc = 0.05 * jax.random.normal(ks[9], (WIDTH, DIM_IN), f)        # conv 1x1
    wq = 0.05 * jax.random.normal(ks[10], (INNER, WIDTH), f)        # to_q
    wkv = 0.05 * jax.random.normal(ks[11], (2 * INNER, WIDTH), f)   # to_kv
    wout = 0.05 * jax.random.normal(ks[12], (C_OUT, INNER), f)      # to_out conv
    bout = 0.05 * jax.random.normal(ks[13], (C_OUT,), f)            # to_out bias

    # LocalAttention relative-position mask: pos_embedding[rel_index] (+ zeros mask)
    pos = 0.02 * jax.random.normal(ks[14], (2 * P - 1, 2 * P - 1), f)
    coords = np.array([[xx, yy] for xx in range(P) for yy in range(P)])
    rel = coords[None, :, :] - coords[:, None, :] + P - 1            # (P2, P2, 2)
    mask = pos[rel[:, :, 0], rel[:, :, 1]]                           # (P2, P2)

    raw = dict(s1v=s1, t1v=t1, s2v=s2, t2v=t2, ws=ws, wc=wc, wq=wq,
               wkv=wkv, wout=wout, boutv=bout, mask=mask)
    return raw, ks[15]


def prepare_kernel_params(raw, wb=WB):
    """Host-side folding: norm2 + width conv + scale folded into a single packed
    q/k/v weight; shortcut + to_out stacked into one tail weight; block-diagonal
    rel-pos mask for the batched-window attention."""
    bf16 = jnp.bfloat16

    # h @ wc^T, then BN2, then @ w^T  ==  h @ ((wc^T * s2) @ w^T) + t2 @ w^T
    A = raw["wc"].T * raw["s2v"][None, :]                     # (DIM_IN, WIDTH)
    wq_t = raw["wq"].T                                        # (WIDTH, INNER)
    wk_t = raw["wkv"][:INNER].T                               # (WIDTH, INNER)
    wv_t = raw["wkv"][INNER:].T                               # (WIDTH, INNER)

    wq_eff = (A @ wq_t) * SCALE                               # scale folded into q
    bq = (raw["t2v"] @ wq_t) * SCALE
    wk_eff = A @ wk_t; bk = raw["t2v"] @ wk_t
    wv_eff = A @ wv_t; bv = raw["t2v"] @ wv_t

    wqkv = jnp.concatenate([wq_eff, wk_eff, wv_eff], axis=1)  # (DIM_IN, 96)
    bqkv = jnp.concatenate([bq, bk, bv], axis=0)              # (96,)
    wqkv = jnp.pad(wqkv, ((0, 0), (0, QKV_PAD - 3 * INNER)))  # zero-pad to 128 lanes
    bqkv = jnp.pad(bqkv, (0, QKV_PAD - 3 * INNER))

    # tail: [shortcut weight ; to_out weight] stacked on the contraction axis
    w_tail = jnp.concatenate([raw["ws"].T, raw["wout"].T], axis=0)   # (64, C_OUT)

    # block-diagonal rel-pos mask over wb windows (off-window -> -1e9 -> softmax 0)
    diag = jnp.asarray(np.kron(np.eye(wb, dtype=np.float32),
                               np.ones((P2, P2), np.float32)))
    big = jnp.tile(raw["mask"], (wb, wb))
    mask = jnp.where(diag > 0, big, jnp.float32(NEG_INF))            # (wb*P2, wb*P2)

    return dict(
        s1=raw["s1v"].reshape(1, DIM_IN), t1=raw["t1v"].reshape(1, DIM_IN),
        wqkv=wqkv.astype(bf16), bqkv=bqkv.reshape(1, QKV_PAD),
        mask=mask,
        w_tail=w_tail.astype(bf16),
        bout=raw["boutv"].reshape(1, C_OUT),
    )


if __name__ == "__main__":
    raw, xkey = make_params(jax.random.PRNGKey(0))
    kp = prepare_kernel_params(raw)
    x = jax.random.normal(xkey, (B, DIM_IN, H, W), jnp.float32)      # NCHW, like PyTorch

    y = jax.block_until_ready(attention_block_b(x, kp))

    y_ref = jax.block_until_ready(reference(x, raw))
    # bf16 MXU inputs with f32 accumulation vs f32 HIGHEST reference -> 2e-2 tolerance.
    np.testing.assert_allclose(np.asarray(y), np.asarray(y_ref), rtol=2e-2, atol=2e-2)
    assert y.shape == (B, C_OUT, H, W)

    print("KERNEL_OK")
</pallas_src>

<mosaic_0001>
module attributes {stable_mosaic.version = 11 : i64} {
  func.func @_attention_block_kernel(%arg0: i32, %arg1: memref<256x32xf32, #tpu.memory_space<vmem>>, %arg2: memref<1x32xf32, #tpu.memory_space<vmem>>, %arg3: memref<1x32xf32, #tpu.memory_space<vmem>>, %arg4: memref<32x128xbf16, #tpu.memory_space<vmem>>, %arg5: memref<1x128xf32, #tpu.memory_space<vmem>>, %arg6: memref<256x256xf32, #tpu.memory_space<vmem>>, %arg7: memref<64x128xbf16, #tpu.memory_space<vmem>>, %arg8: memref<1x128xf32, #tpu.memory_space<vmem>>, %arg9: memref<256x128xf32, #tpu.memory_space<vmem>>) attributes {dimension_semantics = [#tpu.dimension_semantics<parallel>], iteration_bounds = array<i64: 2>, scalar_prefetch = 0 : i64, scratch_operands = 0 : i64, tpu.core_type = #tpu.core_type<tc>, window_params = [{transform_indices = @transform_0, window_bounds = array<i64: 256, 32>}, {pipeline_mode = #tpu.pipeline_mode<synchronous>, transform_indices = @transform_1, window_bounds = array<i64: 1, 32>}, {pipeline_mode = #tpu.pipeline_mode<synchronous>, transform_indices = @transform_2, window_bounds = array<i64: 1, 32>}, {pipeline_mode = #tpu.pipeline_mode<synchronous>, transform_indices = @transform_3, window_bounds = array<i64: 32, 128>}, {pipeline_mode = #tpu.pipeline_mode<synchronous>, transform_indices = @transform_4, window_bounds = array<i64: 1, 128>}, {pipeline_mode = #tpu.pipeline_mode<synchronous>, transform_indices = @transform_5, window_bounds = array<i64: 256, 256>}, {pipeline_mode = #tpu.pipeline_mode<synchronous>, transform_indices = @transform_6, window_bounds = array<i64: 64, 128>}, {pipeline_mode = #tpu.pipeline_mode<synchronous>, transform_indices = @transform_7, window_bounds = array<i64: 1, 128>}, {transform_indices = @transform_8, window_bounds = array<i64: 256, 128>}]} {
    %c0 = arith.constant 0 : index
    %c0_0 = arith.constant 0 : index
    %0 = vector.load %arg1[%c0, %c0_0] : memref<256x32xf32, #tpu.memory_space<vmem>>, vector<256x32xf32>
    %c0_1 = arith.constant 0 : index
    %c0_2 = arith.constant 0 : index
    %1 = vector.load %arg2[%c0_1, %c0_2] : memref<1x32xf32, #tpu.memory_space<vmem>>, vector<1x32xf32>
    %2 = vector.broadcast %1 : vector<1x32xf32> to vector<256x32xf32>
    %3 = arith.mulf %0, %2 : vector<256x32xf32>
    %c0_3 = arith.constant 0 : index
    %c0_4 = arith.constant 0 : index
    %4 = vector.load %arg3[%c0_3, %c0_4] : memref<1x32xf32, #tpu.memory_space<vmem>>, vector<1x32xf32>
    %5 = vector.broadcast %4 : vector<1x32xf32> to vector<256x32xf32>
    %6 = arith.addf %3, %5 : vector<256x32xf32>
    %cst = arith.constant 5.000000e-01 : f32
    %7 = vector.broadcast %cst : f32 to vector<256x32xf32>
    %8 = arith.mulf %7, %6 : vector<256x32xf32>
    %cst_5 = arith.constant 0.707106769 : f32
    %9 = vector.broadcast %cst_5 : f32 to vector<256x32xf32>
    %10 = arith.mulf %6, %9 : vector<256x32xf32>
    %11 = math.erf %10 : vector<256x32xf32>
    %cst_6 = arith.constant 1.000000e+00 : f32
    %12 = vector.broadcast %cst_6 : f32 to vector<256x32xf32>
    %13 = arith.addf %12, %11 : vector<256x32xf32>
    %14 = arith.mulf %8, %13 : vector<256x32xf32>
    %15 = arith.truncf %14 : vector<256x32xf32> to vector<256x32xbf16>
    %c0_7 = arith.constant 0 : index
    %c0_8 = arith.constant 0 : index
    %16 = vector.load %arg4[%c0_7, %c0_8] : memref<32x128xbf16, #tpu.memory_space<vmem>>, vector<32x128xbf16>
    %cst_9 = arith.constant dense<0.000000e+00> : vector<256x128xf32>
    %17 = tpu.matmul %15, %16, %cst_9 {dimension_numbers = #tpu.dot_dimension_numbers<[1], [0], [0], [1], [0, 0, 1, 1], [], []>} : vector<256x32xbf16>, vector<32x128xbf16>, vector<256x128xf32> -> vector<256x128xf32>
    %c0_10 = arith.constant 0 : index
    %c0_11 = arith.constant 0 : index
    %18 = vector.load %arg5[%c0_10, %c0_11] : memref<1x128xf32, #tpu.memory_space<vmem>>, vector<1x128xf32>
    %19 = vector.broadcast %18 : vector<1x128xf32> to vector<256x128xf32>
    %20 = arith.addf %17, %19 : vector<256x128xf32>
    %c0_12 = arith.constant 0 : index
    %c0_13 = arith.constant 0 : index
    %21 = vector.load %arg6[%c0_12, %c0_13] : memref<256x256xf32, #tpu.memory_space<vmem>>, vector<256x256xf32>
    %22 = vector.extract_strided_slice %20 {offsets = [0, 0], sizes = [256, 16], strides = [1, 1]} : vector<256x128xf32> to vector<256x16xf32>
    %23 = arith.truncf %22 : vector<256x16xf32> to vector<256x16xbf16>
    %24 = vector.extract_strided_slice %20 {offsets = [0, 32], sizes = [256, 16], strides = [1, 1]} : vector<256x128xf32> to vector<256x16xf32>
    %25 = arith.truncf %24 : vector<256x16xf32> to vector<256x16xbf16>
    %26 = vector.extract_strided_slice %20 {offsets = [0, 64], sizes = [256, 16], strides = [1, 1]} : vector<256x128xf32> to vector<256x16xf32>
    %27 = arith.truncf %26 : vector<256x16xf32> to vector<256x16xbf16>
    %cst_14 = arith.constant dense<0.000000e+00> : vector<256x256xf32>
    %28 = tpu.matmul %23, %25, %cst_14 {dimension_numbers = #tpu.dot_dimension_numbers<[1], [1], [0], [0], [0, 0, 1, 0], [], []>} : vector<256x16xbf16>, vector<256x16xbf16>, vector<256x256xf32> -> vector<256x256xf32>
    %29 = arith.addf %28, %21 : vector<256x256xf32>
    %cst_15 = arith.constant dense<0xFF800000> : vector<256xf32>
    %30 = vector.multi_reduction <maximumf>, %29, %cst_15 [1] : vector<256x256xf32> to vector<256xf32>
    %31 = vector.shape_cast %30 : vector<256xf32> to vector<256x1xf32>
    %32 = vector.broadcast %31 : vector<256x1xf32> to vector<256x256xf32>
    %33 = arith.subf %29, %32 : vector<256x256xf32>
    %34 = math.exp %33 : vector<256x256xf32>
    %cst_16 = arith.constant dense<0.000000e+00> : vector<256xf32>
    %35 = vector.multi_reduction <add>, %34, %cst_16 [1] : vector<256x256xf32> to vector<256xf32>
    %36 = vector.shape_cast %35 : vector<256xf32> to vector<256x1xf32>
    %37 = tpu.reciprocal %36 {approx = true} : vector<256x1xf32> -> vector<256x1xf32>
    %38 = vector.broadcast %37 : vector<256x1xf32> to vector<256x256xf32>
    %39 = arith.mulf %34, %38 : vector<256x256xf32>
    %40 = arith.truncf %39 : vector<256x256xf32> to vector<256x256xbf16>
    %cst_17 = arith.constant dense<0.000000e+00> : vector<256x16xf32>
    %41 = tpu.matmul %40, %27, %cst_17 {dimension_numbers = #tpu.dot_dimension_numbers<[1], [0], [0], [1], [0, 0, 1, 1], [], []>} : vector<256x256xbf16>, vector<256x16xbf16>, vector<256x16xf32> -> vector<256x16xf32>
    %42 = vector.extract_strided_slice %20 {offsets = [0, 16], sizes = [256, 16], strides = [1, 1]} : vector<256x128xf32> to vector<256x16xf32>
    %43 = arith.truncf %42 : vector<256x16xf32> to vector<256x16xbf16>
    %44 = vector.extract_strided_slice %20 {offsets = [0, 48], sizes = [256, 16], strides = [1, 1]} : vector<256x128xf32> to vector<256x16xf32>
    %45 = arith.truncf %44 : vector<256x16xf32> to vector<256x16xbf16>
    %46 = vector.extract_strided_slice %20 {offsets = [0, 80], sizes = [256, 16], strides = [1, 1]} : vector<256x128xf32> to vector<256x16xf32>
    %47 = arith.truncf %46 : vector<256x16xf32> to vector<256x16xbf16>
    %cst_18 = arith.constant dense<0.000000e+00> : vector<256x256xf32>
    %48 = tpu.matmul %43, %45, %cst_18 {dimension_numbers = #tpu.dot_dimension_numbers<[1], [1], [0], [0], [0, 0, 1, 0], [], []>} : vector<256x16xbf16>, vector<256x16xbf16>, vector<256x256xf32> -> vector<256x256xf32>
    %49 = arith.addf %48, %21 : vector<256x256xf32>
    %cst_19 = arith.constant dense<0xFF800000> : vector<256xf32>
    %50 = vector.multi_reduction <maximumf>, %49, %cst_19 [1] : vector<256x256xf32> to vector<256xf32>
    %51 = vector.shape_cast %50 : vector<256xf32> to vector<256x1xf32>
    %52 = vector.broadcast %51 : vector<256x1xf32> to vector<256x256xf32>
    %53 = arith.subf %49, %52 : vector<256x256xf32>
    %54 = math.exp %53 : vector<256x256xf32>
    %cst_20 = arith.constant dense<0.000000e+00> : vector<256xf32>
    %55 = vector.multi_reduction <add>, %54, %cst_20 [1] : vector<256x256xf32> to vector<256xf32>
    %56 = vector.shape_cast %55 : vector<256xf32> to vector<256x1xf32>
    %57 = tpu.reciprocal %56 {approx = true} : vector<256x1xf32> -> vector<256x1xf32>
    %58 = vector.broadcast %57 : vector<256x1xf32> to vector<256x256xf32>
    %59 = arith.mulf %54, %58 : vector<256x256xf32>
    %60 = arith.truncf %59 : vector<256x256xf32> to vector<256x256xbf16>
    %cst_21 = arith.constant dense<0.000000e+00> : vector<256x16xf32>
    %61 = tpu.matmul %60, %47, %cst_21 {dimension_numbers = #tpu.dot_dimension_numbers<[1], [0], [0], [1], [0, 0, 1, 1], [], []>} : vector<256x256xbf16>, vector<256x16xbf16>, vector<256x16xf32> -> vector<256x16xf32>
    %62 = tpu.concatenate %41, %61 in 1 : vector<256x16xf32>, vector<256x16xf32> -> vector<256x32xf32>
    %63 = arith.truncf %62 : vector<256x32xf32> to vector<256x32xbf16>
    %64 = tpu.concatenate %15, %63 in 1 : vector<256x32xbf16>, vector<256x32xbf16> -> vector<256x64xbf16>
    %c0_22 = arith.constant 0 : index
    %c0_23 = arith.constant 0 : index
    %65 = vector.load %arg7[%c0_22, %c0_23] : memref<64x128xbf16, #tpu.memory_space<vmem>>, vector<64x128xbf16>
    %cst_24 = arith.constant dense<0.000000e+00> : vector<256x128xf32>
    %66 = tpu.matmul %64, %65, %cst_24 {dimension_numbers = #tpu.dot_dimension_numbers<[1], [0], [0], [1], [0, 0, 1, 1], [], []>} : vector<256x64xbf16>, vector<64x128xbf16>, vector<256x128xf32> -> vector<256x128xf32>
    %c0_25 = arith.constant 0 : index
    %c0_26 = arith.constant 0 : index
    %67 = vector.load %arg8[%c0_25, %c0_26] : memref<1x128xf32, #tpu.memory_space<vmem>>, vector<1x128xf32>
    %68 = vector.broadcast %67 : vector<1x128xf32> to vector<256x128xf32>
    %69 = arith.addf %66, %68 : vector<256x128xf32>
    %c0_27 = arith.constant 0 : index
    %c0_28 = arith.constant 0 : index
    %70 = vector.load %arg9[%c0_27, %c0_28] : memref<256x128xf32, #tpu.memory_space<vmem>>, vector<256x128xf32>
    tpu.vector_store %arg9[%c0_27, %c0_28], %69 {strides = array<i32>} : memref<256x128xf32, #tpu.memory_space<vmem>>, vector<256x128xf32>,
    return
  }
  func.func @transform_0(%arg0: i32) -> (i32, i32) {
    %c0_i32 = arith.constant 0 : i32
    %c0_i32_0 = arith.constant 0 : i32
    return %arg0, %c0_i32 : i32, i32
  }
  func.func @transform_1(%arg0: i32) -> (i32, i32) {
    %c0_i32 = arith.constant 0 : i32
    %c0_i32_0 = arith.constant 0 : i32
    %c0_i32_1 = arith.constant 0 : i32
    return %c0_i32, %c0_i32_0 : i32, i32
  }
  func.func @transform_2(%arg0: i32) -> (i32, i32) {
    %c0_i32 = arith.constant 0 : i32
    %c0_i32_0 = arith.constant 0 : i32
    %c0_i32_1 = arith.constant 0 : i32
    return %c0_i32, %c0_i32_0 : i32, i32
  }
  func.func @transform_3(%arg0: i32) -> (i32, i32) {
    %c0_i32 = arith.constant 0 : i32
    %c0_i32_0 = arith.constant 0 : i32
    %c0_i32_1 = arith.constant 0 : i32
    return %c0_i32, %c0_i32_0 : i32, i32
  }
  func.func @transform_4(%arg0: i32) -> (i32, i32) {
    %c0_i32 = arith.constant 0 : i32
    %c0_i32_0 = arith.constant 0 : i32
    %c0_i32_1 = arith.constant 0 : i32
    return %c0_i32, %c0_i32_0 : i32, i32
  }
  func.func @transform_5(%arg0: i32) -> (i32, i32) {
    %c0_i32 = arith.constant 0 : i32
    %c0_i32_0 = arith.constant 0 : i32
    %c0_i32_1 = arith.constant 0 : i32
    return %c0_i32, %c0_i32_0 : i32, i32
  }
  func.func @transform_6(%arg0: i32) -> (i32, i32) {
    %c0_i32 = arith.constant 0 : i32
    %c0_i32_0 = arith.constant 0 : i32
    %c0_i32_1 = arith.constant 0 : i32
    return %c0_i32, %c0_i32_0 : i32, i32
  }
  func.func @transform_7(%arg0: i32) -> (i32, i32) {
    %c0_i32 = arith.constant 0 : i32
    %c0_i32_0 = arith.constant 0 : i32
    %c0_i32_1 = arith.constant 0 : i32
    return %c0_i32, %c0_i32_0 : i32, i32
  }
  func.func @transform_8(%arg0: i32) -> (i32, i32) {
    %c0_i32 = arith.constant 0 : i32
    %c0_i32_0 = arith.constant 0 : i32
    return %arg0, %c0_i32 : i32, i32
  }
}

</mosaic_0001>

<llo_original>
// kernel: tpu_custom_call.1
$region0: #{tpu_custom_call.1}
  #allocation0 [shape = 'u32[]', space=smem, size = 0x4, offset = 0x4, fixed_abs, tag = 'smem constant byte address 0x4 - core index']
  #allocation1 [shape = 'u32[72,128]{1,0:T(1,128)}', space=vmem, size = 0x9000, scoped, tag = 'internal scratch']
  %s0 = inlined_call_operand.vmem [shape: f32[512,32], index: 0, kind: input, shape index: {}]
  %s1 = inlined_call_operand.vmem [shape: f32[1,32], index: 1, kind: input, shape index: {}]
  %s2 = inlined_call_operand.vmem [shape: f32[1,32], index: 2, kind: input, shape index: {}]
  %s3 = inlined_call_operand.vmem [shape: bf16[32,128], index: 3, kind: input, shape index: {}]
  %s4 = inlined_call_operand.vmem [shape: f32[1,128], index: 4, kind: input, shape index: {}]
  %s5 = inlined_call_operand.vmem [shape: f32[256,256], index: 5, kind: input, shape index: {}]
  %s6 = inlined_call_operand.vmem [shape: bf16[64,128], index: 6, kind: input, shape index: {}]
  %s7 = inlined_call_operand.vmem [shape: f32[1,128], index: 7, kind: input, shape index: {}]
  %s8 = inlined_call_operand.hbm [shape: f32[512,128], index: 8, kind: output, shape index: {}]
  %s9 = sld [smem:[#allocation0]]
  $region65: #{tpu_custom_call.1} parent=0
    _
  %s11 = ssub.s32 1, %s9
  %s12 = scalar_select 0, %s11, %s9
  $region1: #{tpu_custom_call.1} parent=0
    #allocation2 [shape = 'u8[262144]{0}', space=vmem, size = 0x40000, scoped, tag = 'output window, operand 0']
    #allocation3 [shape = 's32[2]{0}', space=sflag, size = 0x8, scoped, tag = 'scoped memory for tpu_custom_call.1']
    %13 = vsyncpa [#allocation3], 0
    %s14 = scalar_lea.sflag [#allocation3], 1
    %15 = vsyncpa %s14, 0
    loop: start=0, step=1, limit=4
    $region2: #{tpu_custom_call.1} parent=1 // loop_pre_header
      _
    $region3: #{tpu_custom_call.1} parent=1 // loop_header
      %s17 = sphi 0, %s21
      %p18 = scmp.ge.s32.totalorder %s17, 4
      %s27 = sphi 0, %s29
      %s30 = sphi 0, %s27
      %s31 = sphi 0, %s30
      %s47 = sphi 0, %s31
      %s51 = sphi 0, %s51
      %s53 = sphi 0, %s51
      %s54 = sphi 0, %s53
      %s68 = sphi 0, %s54
      %s72 = sphi 0, %s72
      %s74 = sphi 0, %s72
      %s75 = sphi 0, %s74
      %s89 = sphi 0, %s75
      %s93 = sphi 0, %s93
      %s95 = sphi 0, %s93
      %s96 = sphi 0, %s95
      %s110 = sphi 0, %s96
      %s114 = sphi 0, %s114
      %s116 = sphi 0, %s114
      %s117 = sphi 0, %s116
      %s131 = sphi 0, %s117
      %s135 = sphi 0, %s135
      %s137 = sphi 0, %s135
      %s138 = sphi 0, %s137
      %s152 = sphi 0, %s138
      %s156 = sphi 0, %s156
      %s158 = sphi 0, %s156
      %s159 = sphi 0, %s158
      %s173 = sphi 0, %s159
      %s177 = sphi 0, %s177
      %s179 = sphi 0, %s177
      %s180 = sphi 0, %s179
      %s194 = sphi 0, %s180
      %s200 = sphi 0, %s202
      %s203 = sphi 0, %s200
      %s204 = sphi 0, %s203
      %s220 = sphi 0, %s204
    $region4: #{tpu_custom_call.1} parent=1 // loop_header_branch
      %20 = sbr.rel (%p18) target = $region8
    $region5: #{tpu_custom_call.1} parent=1 // loop_body
      %s22 = ssub.s32 %s17, 1
      %s23 = ssub.s32 %s17, 2
      %s24 = sadd.s32 %s17, 1
      %s25 = ssub.s32 %s17, %s24
      %p26 = scmp.eq.s32.totalorder %s25, 0
      %s28 = sadd.s32 %s27, 1
      %s29 = scalar_select %p26, %s27, %s28
      %p32 = pneg %p26
      %p33 = scmp.eq.s32.totalorder %s17, 1
      %p34 = por %p32, %p33
      %p35 = scmp.ne.s32.totalorder %s27, %s30
      %p36 = scmp.eq.s32.totalorder %s17, 0
      %p37 = por %p35, %p36
      %p38 = scmp.ne.s32.totalorder %s27, %s30
      %p39 = scmp.eq.s32.totalorder %s22, 1
      %p40 = por %p38, %p39
      %p41 = scmp.ne.s32.totalorder %s30, %s31
      %p42 = scmp.eq.s32.totalorder %s22, 0
      %p43 = por %p41, %p42
      %p44 = scmp.ne.s32.totalorder %s30, %s31
      %p45 = scmp.eq.s32.totalorder %s23, 1
      %p46 = por %p44, %p45
      %p48 = scmp.ne.s32.totalorder %s31, %s47
      %p49 = scmp.eq.s32.totalorder %s23, 0
      %p50 = por %p48, %p49
      %s52 = sadd.s32 %s51, 1
      %p55 = scmp.eq.s32.totalorder %s17, 1
      %p56 = scmp.ne.s32.totalorder %s51, %s53
      %p57 = scmp.eq.s32.totalorder %s17, 0
      %p58 = por %p56, %p57
      %p59 = scmp.ne.s32.totalorder %s51, %s53
      %p60 = scmp.eq.s32.totalorder %s22, 1
      %p61 = por %p59, %p60
      %p62 = scmp.ne.s32.totalorder %s53, %s54
      %p63 = scmp.eq.s32.totalorder %s22, 0
      %p64 = por %p62, %p63
      %p65 = scmp.ne.s32.totalorder %s53, %s54
      %p66 = scmp.eq.s32.totalorder %s23, 1
      %p67 = por %p65, %p66
      %p69 = scmp.ne.s32.totalorder %s54, %s68
      %p70 = scmp.eq.s32.totalorder %s23, 0
      %p71 = por %p69, %p70
      %s73 = sadd.s32 %s72, 1
      %p76 = scmp.eq.s32.totalorder %s17, 1
      %p77 = scmp.ne.s32.totalorder %s72, %s74
      %p78 = scmp.eq.s32.totalorder %s17, 0
      %p79 = por %p77, %p78
      %p80 = scmp.ne.s32.totalorder %s72, %s74
      %p81 = scmp.eq.s32.totalorder %s22, 1
      %p82 = por %p80, %p81
      %p83 = scmp.ne.s32.totalorder %s74, %s75
      %p84 = scmp.eq.s32.totalorder %s22, 0
      %p85 = por %p83, %p84
      %p86 = scmp.ne.s32.totalorder %s74, %s75
      %p87 = scmp.eq.s32.totalorder %s23, 1
      %p88 = por %p86, %p87
      %p90 = scmp.ne.s32.totalorder %s75, %s89
      %p91 = scmp.eq.s32.totalorder %s23, 0
      %p92 = por %p90, %p91
      %s94 = sadd.s32 %s93, 1
      %p97 = scmp.eq.s32.totalorder %s17, 1
      %p98 = scmp.ne.s32.totalorder %s93, %s95
      %p99 = scmp.eq.s32.totalorder %s17, 0
      %p100 = por %p98, %p99
      %p101 = scmp.ne.s32.totalorder %s93, %s95
      %p102 = scmp.eq.s32.totalorder %s22, 1
      %p103 = por %p101, %p102
      %p104 = scmp.ne.s32.totalorder %s95, %s96
      %p105 = scmp.eq.s32.totalorder %s22, 0
      %p106 = por %p104, %p105
      %p107 = scmp.ne.s32.totalorder %s95, %s96
      %p108 = scmp.eq.s32.totalorder %s23, 1
      %p109 = por %p107, %p108
      %p111 = scmp.ne.s32.totalorder %s96, %s110
      %p112 = scmp.eq.s32.totalorder %s23, 0
      %p113 = por %p111, %p112
      %s115 = sadd.s32 %s114, 1
      %p118 = scmp.eq.s32.totalorder %s17, 1
      %p119 = scmp.ne.s32.totalorder %s114, %s116
      %p120 = scmp.eq.s32.totalorder %s17, 0
      %p121 = por %p119, %p120
      %p122 = scmp.ne.s32.totalorder %s114, %s116
      %p123 = scmp.eq.s32.totalorder %s22, 1
      %p124 = por %p122, %p123
      %p125 = scmp.ne.s32.totalorder %s116, %s117
      %p126 = scmp.eq.s32.totalorder %s22, 0
      %p127 = por %p125, %p126
      %p128 = scmp.ne.s32.totalorder %s116, %s117
      %p129 = scmp.eq.s32.totalorder %s23, 1
      %p130 = por %p128, %p129
      %p132 = scmp.ne.s32.totalorder %s117, %s131
      %p133 = scmp.eq.s32.totalorder %s23, 0
      %p134 = por %p132, %p133
      %s136 = sadd.s32 %s135, 1
      %p139 = scmp.eq.s32.totalorder %s17, 1
      %p140 = scmp.ne.s32.totalorder %s135, %s137
      %p141 = scmp.eq.s32.totalorder %s17, 0
      %p142 = por %p140, %p141
      %p143 = scmp.ne.s32.totalorder %s135, %s137
      %p144 = scmp.eq.s32.totalorder %s22, 1
      %p145 = por %p143, %p144
      %p146 = scmp.ne.s32.totalorder %s137, %s138
      %p147 = scmp.eq.s32.totalorder %s22, 0
      %p148 = por %p146, %p147
      %p149 = scmp.ne.s32.totalorder %s137, %s138
      %p150 = scmp.eq.s32.totalorder %s23, 1
      %p151 = por %p149, %p150
      %p153 = scmp.ne.s32.totalorder %s138, %s152
      %p154 = scmp.eq.s32.totalorder %s23, 0
      %p155 = por %p153, %p154
      %s157 = sadd.s32 %s156, 1
      %p160 = scmp.eq.s32.totalorder %s17, 1
      %p161 = scmp.ne.s32.totalorder %s156, %s158
      %p162 = scmp.eq.s32.totalorder %s17, 0
      %p163 = por %p161, %p162
      %p164 = scmp.ne.s32.totalorder %s156, %s158
      %p165 = scmp.eq.s32.totalorder %s22, 1
      %p166 = por %p164, %p165
      %p167 = scmp.ne.s32.totalorder %s158, %s159
      %p168 = scmp.eq.s32.totalorder %s22, 0
      %p169 = por %p167, %p168
      %p170 = scmp.ne.s32.totalorder %s158, %s159
      %p171 = scmp.eq.s32.totalorder %s23, 1
      %p172 = por %p170, %p171
      %p174 = scmp.ne.s32.totalorder %s159, %s173
      %p175 = scmp.eq.s32.totalorder %s23, 0
      %p176 = por %p174, %p175
      %s178 = sadd.s32 %s177, 1
      %p181 = scmp.eq.s32.totalorder %s17, 1
      %p182 = scmp.ne.s32.totalorder %s177, %s179
      %p183 = scmp.eq.s32.totalorder %s17, 0
      %p184 = por %p182, %p183
      %p185 = scmp.ne.s32.totalorder %s177, %s179
      %p186 = scmp.eq.s32.totalorder %s22, 1
      %p187 = por %p185, %p186
      %p188 = scmp.ne.s32.totalorder %s179, %s180
      %p189 = scmp.eq.s32.totalorder %s22, 0
      %p190 = por %p188, %p189
      %p191 = scmp.ne.s32.totalorder %s179, %s180
      %p192 = scmp.eq.s32.totalorder %s23, 1
      %p193 = por %p191, %p192
      %p195 = scmp.ne.s32.totalorder %s180, %s194
      %p196 = scmp.eq.s32.totalorder %s23, 0
      %p197 = por %p195, %p196
      %s198 = ssub.s32 %s17, %s24
      %p199 = scmp.eq.s32.totalorder %s198, 0
      %s201 = sadd.s32 %s200, 1
      %s202 = scalar_select %p199, %s200, %s201
      %p205 = pneg %p199
      %p206 = scmp.eq.s32.totalorder %s17, 1
      %p207 = por %p205, %p206
      %p208 = scmp.ne.s32.totalorder %s200, %s203
      %p209 = scmp.eq.s32.totalorder %s17, 0
      %p210 = por %p208, %p209
      %p211 = scmp.ne.s32.totalorder %s200, %s203
      %p212 = scmp.eq.s32.totalorder %s22, 1
      %p213 = por %p211, %p212
      %p214 = scmp.ne.s32.totalorder %s203, %s204
      %p215 = scmp.eq.s32.totalorder %s22, 0
      %p216 = por %p214, %p215
      %p217 = scmp.ne.s32.totalorder %s203, %s204
      %p218 = scmp.eq.s32.totalorder %s23, 1
      %p219 = por %p217, %p218
      %p221 = scmp.ne.s32.totalorder %s204, %s220
      %p222 = scmp.eq.s32.totalorder %s23, 0
      %p223 = por %p221, %p222
      %p224 = scmp.le.s32.totalorder 1, %s17
      %p225 = scmp.lt.s32.totalorder %s17, 3
      %p226 = pnand %p224, %p225
      %p227 = pneg %p226
      // Predicated region
      $region9: #{tpu_custom_call.1} parent=5 // pred_check
        _
      $region10: #{tpu_custom_call.1} parent=5 // pred_check_branch
        %229 = sbr.rel (%p226) target = $region12
      $region11: #{tpu_custom_call.1} parent=5 // pred_region
        %s230 = ssub.s32 %s17, 1
        // Predicated region
        $region13: #{tpu_custom_call.1} parent=11 // pred_check
          %p231 = pneg %p64
        $region14: #{tpu_custom_call.1} parent=11 // pred_check_branch
          %233 = sbr.rel (%p231) target = $region16
        $region15: #{tpu_custom_call.1} parent=11 // pred_region
          _
        $region16: #{tpu_custom_call.1} parent=11 // pred_fallthru
          _
        // Predicated region
        $region17: #{tpu_custom_call.1} parent=11 // pred_check
          %p234 = pneg %p85
        $region18: #{tpu_custom_call.1} parent=11 // pred_check_branch
          %236 = sbr.rel (%p234) target = $region20
        $region19: #{tpu_custom_call.1} parent=11 // pred_region
          _
        $region20: #{tpu_custom_call.1} parent=11 // pred_fallthru
          _
        // Predicated region
        $region21: #{tpu_custom_call.1} parent=11 // pred_check
          %p237 = pneg %p106
        $region22: #{tpu_custom_call.1} parent=11 // pred_check_branch
          %239 = sbr.rel (%p237) target = $region24
        $region23: #{tpu_custom_call.1} parent=11 // pred_region
          _
        $region24: #{tpu_custom_call.1} parent=11 // pred_fallthru
          _
        // Predicated region
        $region25: #{tpu_custom_call.1} parent=11 // pred_check
          %p240 = pneg %p127
        $region26: #{tpu_custom_call.1} parent=11 // pred_check_branch
          %242 = sbr.rel (%p240) target = $region28
        $region27: #{tpu_custom_call.1} parent=11 // pred_region
          _
        $region28: #{tpu_custom_call.1} parent=11 // pred_fallthru
          _
        // Predicated region
        $region29: #{tpu_custom_call.1} parent=11 // pred_check
          %p243 = pneg %p148
        $region30: #{tpu_custom_call.1} parent=11 // pred_check_branch
          %245 = sbr.rel (%p243) target = $region32
        $region31: #{tpu_custom_call.1} parent=11 // pred_region
          _
        $region32: #{tpu_custom_call.1} parent=11 // pred_fallthru
          _
        // Predicated region
        $region33: #{tpu_custom_call.1} parent=11 // pred_check
          %p246 = pneg %p169
        $region34: #{tpu_custom_call.1} parent=11 // pred_check_branch
          %248 = sbr.rel (%p246) target = $region36
        $region35: #{tpu_custom_call.1} parent=11 // pred_region
          _
        $region36: #{tpu_custom_call.1} parent=11 // pred_fallthru
          _
        // Predicated region
        $region37: #{tpu_custom_call.1} parent=11 // pred_check
          %p249 = pneg %p190
        $region38: #{tpu_custom_call.1} parent=11 // pred_check_branch
          %251 = sbr.rel (%p249) target = $region40
        $region39: #{tpu_custom_call.1} parent=11 // pred_region
          _
        $region40: #{tpu_custom_call.1} parent=11 // pred_fallthru
          _
      $region12: #{tpu_custom_call.1} parent=5 // pred_fallthru
        _
      %p252 = scmp.lt.s32.totalorder %s17, 2
      // Predicated region
      $region41: #{tpu_custom_call.1} parent=5 // pred_check
        %p253 = pneg %p252
      $region42: #{tpu_custom_call.1} parent=5 // pred_check_branch
        %255 = sbr.rel (%p253) target = $region44
      $region43: #{tpu_custom_call.1} parent=5 // pred_region
        // Predicated region
        $region45: #{tpu_custom_call.1} parent=43 // pred_check
          %p256 = pneg %p37
        $region46: #{tpu_custom_call.1} parent=43 // pred_check_branch
          %258 = sbr.rel (%p256) target = $region48
        $region47: #{tpu_custom_call.1} parent=43 // pred_region
          %s259 = smul.u32 32, %s17
          %p260 = scmp.lt.s32.totalorder %s259, 63
          %s261 = scalar_select %p260, %s259, 63
          %s262 = smul.addr %s261, 8
          %s263 = scalar_lea.vmem %s0, %s262
          %s264 = smul.u32 32, %s17
        $region48: #{tpu_custom_call.1} parent=43 // pred_fallthru
          _
      $region44: #{tpu_custom_call.1} parent=5 // pred_fallthru
        _
      %p265 = scmp.le.s32.totalorder 1, %s17
      %p266 = scmp.lt.s32.totalorder %s17, 3
      %p267 = pnand %p265, %p266
      %p268 = pneg %p267
      // Predicated region
      $region49: #{tpu_custom_call.1} parent=5 // pred_check
        _
      $region50: #{tpu_custom_call.1} parent=5 // pred_check_branch
        %270 = sbr.rel (%p267) target = $region52
      $region51: #{tpu_custom_call.1} parent=5 // pred_region
        %s271 = ssub.s32 %s17, 1
        %s272 = smul.u32 32, %s22
        %p273 = scmp.lt.s32.totalorder %s272, 63
        %s274 = scalar_select %p273, %s272, 63
        %s275 = smul.addr %s274, 8
        %s276 = scalar_lea.vmem %s0, %s275
        %p277 = pneg %p43
        %p278 = pneg %p40
        %p279 = pneg %p64
        %p280 = pneg %p61
        %p281 = pneg %p85
        %p282 = pneg %p82
        %p283 = pneg %p106
        %p284 = pneg %p103
        %p285 = pneg %p127
        %p286 = pneg %p124
        %p287 = pneg %p148
        %p288 = pneg %p145
        %p289 = pneg %p169
        %p290 = pneg %p166
        %p291 = pneg %p190
        %p292 = pneg %p187
        %p293 = pneg %p216
        %p294 = pneg %p213
        %s295 = sand.u32 %s203, 1
        %s296 = scalar_lea.sflag [#allocation3], %s295
        %s297 = sand.u32 %s203, 1
        %s298 = smul.addr %s297, 256
        %s299 = scalar_lea.vmem [#allocation2], %s298
        %s300 = smul.u32 32, %s22
        %p301 = scmp.lt.s32.totalorder %s300, 63
        %s302 = scalar_select %p301, %s300, 63
        %s303 = smul.addr %s302, 8
        %s304 = scalar_lea.vmem %s0, %s303
        %s305 = smul.u32 32, %s22
        %s306 = smul.u32 32, %s22
        %v308 = vld [vmem:[%s304] sm:$0xff]
        %v309 = vld [vmem:[%s304 + $0x8] sm:$0xff]
        %v310 = vld [vmem:[%s304 + $0x10] sm:$0xff]
        %v311 = vld [vmem:[%s304 + $0x18] sm:$0xff]
        %v312 = vld [vmem:[%s304 + $0x20] sm:$0xff]
        %v313 = vld [vmem:[%s304 + $0x28] sm:$0xff]
        %v314 = vld [vmem:[%s304 + $0x30] sm:$0xff]
        %v315 = vld [vmem:[%s304 + $0x38] sm:$0xff]
        %v316 = vld [vmem:[%s304 + $0x40] sm:$0xff]
        %v317 = vld [vmem:[%s304 + $0x48] sm:$0xff]
        %v318 = vld [vmem:[%s304 + $0x50] sm:$0xff]
        %v319 = vld [vmem:[%s304 + $0x58] sm:$0xff]
        %v320 = vld [vmem:[%s304 + $0x60] sm:$0xff]
        %v321 = vld [vmem:[%s304 + $0x68] sm:$0xff]
        %v322 = vld [vmem:[%s304 + $0x70] sm:$0xff]
        %v323 = vld [vmem:[%s304 + $0x78] sm:$0xff]
        %v324 = vld [vmem:[%s304 + $0x80] sm:$0xff]
        %v325 = vld [vmem:[%s304 + $0x88] sm:$0xff]
        %v326 = vld [vmem:[%s304 + $0x90] sm:$0xff]
        %v327 = vld [vmem:[%s304 + $0x98] sm:$0xff]
        %v328 = vld [vmem:[%s304 + $0xa0] sm:$0xff]
        %v329 = vld [vmem:[%s304 + $0xa8] sm:$0xff]
        %v330 = vld [vmem:[%s304 + $0xb0] sm:$0xff]
        %v331 = vld [vmem:[%s304 + $0xb8] sm:$0xff]
        %v332 = vld [vmem:[%s304 + $0xc0] sm:$0xff]
        %v333 = vld [vmem:[%s304 + $0xc8] sm:$0xff]
        %v334 = vld [vmem:[%s304 + $0xd0] sm:$0xff]
        %v335 = vld [vmem:[%s304 + $0xd8] sm:$0xff]
        %v336 = vld [vmem:[%s304 + $0xe0] sm:$0xff]
        %v337 = vld [vmem:[%s304 + $0xe8] sm:$0xff]
        %v338 = vld [vmem:[%s304 + $0xf0] sm:$0xff]
        %v339 = vld [vmem:[%s304 + $0xf8] sm:$0xff]
        %v340 = vld [vmem:[%s1] sm:$0x1]
        %v342 = vperm.slane %v340, 0
        %v344 = vmul.f32 %v308, %v342
        %v345 = vmul.f32 %v309, %v342
        %v346 = vmul.f32 %v310, %v342
        %v347 = vmul.f32 %v311, %v342
        %v348 = vmul.f32 %v312, %v342
        %v349 = vmul.f32 %v313, %v342
        %v350 = vmul.f32 %v314, %v342
        %v351 = vmul.f32 %v315, %v342
        %v352 = vmul.f32 %v316, %v342
        %v353 = vmul.f32 %v317, %v342
        %v354 = vmul.f32 %v318, %v342
        %v355 = vmul.f32 %v319, %v342
        %v356 = vmul.f32 %v320, %v342
        %v357 = vmul.f32 %v321, %v342
        %v358 = vmul.f32 %v322, %v342
        %v359 = vmul.f32 %v323, %v342
        %v360 = vmul.f32 %v324, %v342
        %v361 = vmul.f32 %v325, %v342
        %v362 = vmul.f32 %v326, %v342
        %v363 = vmul.f32 %v327, %v342
        %v364 = vmul.f32 %v328, %v342
        %v365 = vmul.f32 %v329, %v342
        %v366 = vmul.f32 %v330, %v342
        %v367 = vmul.f32 %v331, %v342
        %v368 = vmul.f32 %v332, %v342
        %v369 = vmul.f32 %v333, %v342
        %v370 = vmul.f32 %v334, %v342
        %v371 = vmul.f32 %v335, %v342
        %v372 = vmul.f32 %v336, %v342
        %v373 = vmul.f32 %v337, %v342
        %v374 = vmul.f32 %v338, %v342
        %v375 = vmul.f32 %v339, %v342
        %v376 = vld [vmem:[%s2] sm:$0x1]
        %v378 = vperm.slane %v376, 0
        %v380 = vadd.f32 %v344, %v378
        %v381 = vadd.f32 %v345, %v378
        %v382 = vadd.f32 %v346, %v378
        %v383 = vadd.f32 %v347, %v378
        %v384 = vadd.f32 %v348, %v378
        %v385 = vadd.f32 %v349, %v378
        %v386 = vadd.f32 %v350, %v378
        %v387 = vadd.f32 %v351, %v378
        %v388 = vadd.f32 %v352, %v378
        %v389 = vadd.f32 %v353, %v378
        %v390 = vadd.f32 %v354, %v378
        %v391 = vadd.f32 %v355, %v378
        %v392 = vadd.f32 %v356, %v378
        %v393 = vadd.f32 %v357, %v378
        %v394 = vadd.f32 %v358, %v378
        %v395 = vadd.f32 %v359, %v378
        %v396 = vadd.f32 %v360, %v378
        %v397 = vadd.f32 %v361, %v378
        %v398 = vadd.f32 %v362, %v378
        %v399 = vadd.f32 %v363, %v378
        %v400 = vadd.f32 %v364, %v378
        %v401 = vadd.f32 %v365, %v378
        %v402 = vadd.f32 %v366, %v378
        %v403 = vadd.f32 %v367, %v378
        %v404 = vadd.f32 %v368, %v378
        %v405 = vadd.f32 %v369, %v378
        %v406 = vadd.f32 %v370, %v378
        %v407 = vadd.f32 %v371, %v378
        %v408 = vadd.f32 %v372, %v378
        %v409 = vadd.f32 %v373, %v378
        %v410 = vadd.f32 %v374, %v378
        %v411 = vadd.f32 %v375, %v378
        %v412 = vmul.f32 %v380, 0.5
        %v413 = vmul.f32 %v381, 0.5
        %v414 = vmul.f32 %v382, 0.5
        %v415 = vmul.f32 %v383, 0.5
        %v416 = vmul.f32 %v384, 0.5
        %v417 = vmul.f32 %v385, 0.5
        %v418 = vmul.f32 %v386, 0.5
        %v419 = vmul.f32 %v387, 0.5
        %v420 = vmul.f32 %v388, 0.5
        %v421 = vmul.f32 %v389, 0.5
        %v422 = vmul.f32 %v390, 0.5
        %v423 = vmul.f32 %v391, 0.5
        %v424 = vmul.f32 %v392, 0.5
        %v425 = vmul.f32 %v393, 0.5
        %v426 = vmul.f32 %v394, 0.5
        %v427 = vmul.f32 %v395, 0.5
        %v428 = vmul.f32 %v396, 0.5
        %v429 = vmul.f32 %v397, 0.5
        %v430 = vmul.f32 %v398, 0.5
        %v431 = vmul.f32 %v399, 0.5
        %v432 = vmul.f32 %v400, 0.5
        %v433 = vmul.f32 %v401, 0.5
        %v434 = vmul.f32 %v402, 0.5
        %v435 = vmul.f32 %v403, 0.5
        %v436 = vmul.f32 %v404, 0.5
        %v437 = vmul.f32 %v405, 0.5
        %v438 = vmul.f32 %v406, 0.5
        %v439 = vmul.f32 %v407, 0.5
        %v440 = vmul.f32 %v408, 0.5
        %v441 = vmul.f32 %v409, 0.5
        %v442 = vmul.f32 %v410, 0.5
        %v443 = vmul.f32 %v411, 0.5
        %v444 = vmul.f32 %v380, 0.70710677
        %v445 = vmul.f32 %v381, 0.70710677
        %v446 = vmul.f32 %v382, 0.70710677
        %v447 = vmul.f32 %v383, 0.70710677
        %v448 = vmul.f32 %v384, 0.70710677
        %v449 = vmul.f32 %v385, 0.70710677
        %v450 = vmul.f32 %v386, 0.70710677
        %v451 = vmul.f32 %v387, 0.70710677
        %v452 = vmul.f32 %v388, 0.70710677
        %v453 = vmul.f32 %v389, 0.70710677
        %v454 = vmul.f32 %v390, 0.70710677
        %v455 = vmul.f32 %v391, 0.70710677
        %v456 = vmul.f32 %v392, 0.70710677
        %v457 = vmul.f32 %v393, 0.70710677
        %v458 = vmul.f32 %v394, 0.70710677
        %v459 = vmul.f32 %v395, 0.70710677
        %v460 = vmul.f32 %v396, 0.70710677
        %v461 = vmul.f32 %v397, 0.70710677
        %v462 = vmul.f32 %v398, 0.70710677
        %v463 = vmul.f32 %v399, 0.70710677
        %v464 = vmul.f32 %v400, 0.70710677
        %v465 = vmul.f32 %v401, 0.70710677
        %v466 = vmul.f32 %v402, 0.70710677
        %v467 = vmul.f32 %v403, 0.70710677
        %v468 = vmul.f32 %v404, 0.70710677
        %v469 = vmul.f32 %v405, 0.70710677
        %v470 = vmul.f32 %v406, 0.70710677
        %v471 = vmul.f32 %v407, 0.70710677
        %v472 = vmul.f32 %v408, 0.70710677
        %v473 = vmul.f32 %v409, 0.70710677
        %v474 = vmul.f32 %v410, 0.70710677
        %v475 = vmul.f32 %v411, 0.70710677
        %v476 = vmul.f32 %v444, %v444
        %v477 = vmin.f32 16.0, %v476
        %v478 = vmul.f32 %v477, 2.1237322e-06
        %v479 = vadd.f32 %v478, 0.00028619796
        %v480 = vmul.f32 %v477, %v479
        %v481 = vadd.f32 %v480, 0.0036580483
        %v482 = vmul.f32 %v477, %v481
        %v483 = vadd.f32 %v482, 0.05243302
        %v484 = vmul.f32 %v477, %v483
        %v485 = vadd.f32 %v484, 0.18741608
        %v486 = vmul.f32 %v477, %v485
        %v487 = vadd.f32 %v486, 1.1283791
        %v488 = vmul.f32 %v444, %v487
        %v489 = vmul.f32 %v477, 3.8918573e-05
        %v490 = vadd.f32 %v489, 0.001143296
        %v491 = vmul.f32 %v477, %v490
        %v492 = vadd.f32 %v491, 0.014752088
        %v493 = vmul.f32 %v477, %v492
        %v494 = vadd.f32 %v493, 0.112945676
        %v495 = vmul.f32 %v477, %v494
        %v496 = vadd.f32 %v495, 0.4994258
        %v497 = vmul.f32 %v477, %v496
        %v498 = vadd.f32 %v497, 1.0
        %v499 = vrcp.pop %v498
        %v500 = vmul.f32 %v498, %v499
        %v501 = vsub.f32 1.0, %v500
        %v502 = vmul.f32 %v499, %v501
        %v503 = vadd.f32 %v499, %v502
        %vm504 = vweird.f32 %v498
        %vm505 = vweird.f32 %v499
        %vm506 = vmor %vm504, %vm505
        %v507 = vsel %vm506, %v499, %v503
        %v508 = vand.u32 2147483647, %v498
        %vm509 = vcmp.eq.f32.partialorder %v508, 8.507059e+37
        %v510 = vand.u32 %v498, 2147483648
        %v511 = vor.u32 1.1754944e-38, %v510
        %v512 = vsel %vm509, %v511, %v507
        %v513 = vmul.f32 %v488, %v512
        %v514 = vmin.f32 %v513, 1.0
        %v515 = vmax.f32 %v514, -1.0
        %v516 = vmul.f32 %v445, %v445
        %v517 = vmin.f32 16.0, %v516
        %v518 = vmul.f32 %v517, 2.1237322e-06
        %v519 = vadd.f32 %v518, 0.00028619796
        %v520 = vmul.f32 %v517, %v519
        %v521 = vadd.f32 %v520, 0.0036580483
        %v522 = vmul.f32 %v517, %v521
        %v523 = vadd.f32 %v522, 0.05243302
        %v524 = vmul.f32 %v517, %v523
        %v525 = vadd.f32 %v524, 0.18741608
        %v526 = vmul.f32 %v517, %v525
        %v527 = vadd.f32 %v526, 1.1283791
        %v528 = vmul.f32 %v445, %v527
        %v529 = vmul.f32 %v517, 3.8918573e-05
        %v530 = vadd.f32 %v529, 0.001143296
        %v531 = vmul.f32 %v517, %v530
        %v532 = vadd.f32 %v531, 0.014752088
        %v533 = vmul.f32 %v517, %v532
        %v534 = vadd.f32 %v533, 0.112945676
        %v535 = vmul.f32 %v517, %v534
        %v536 = vadd.f32 %v535, 0.4994258
        %v537 = vmul.f32 %v517, %v536
        %v538 = vadd.f32 %v537, 1.0
        %v539 = vrcp.pop %v538
        %v540 = vmul.f32 %v538, %v539
        %v541 = vsub.f32 1.0, %v540
        %v542 = vmul.f32 %v539, %v541
        %v543 = vadd.f32 %v539, %v542
        %vm544 = vweird.f32 %v538
        %vm545 = vweird.f32 %v539
        %vm546 = vmor %vm544, %vm545
        %v547 = vsel %vm546, %v539, %v543
        %v548 = vand.u32 2147483647, %v538
        %vm549 = vcmp.eq.f32.partialorder %v548, 8.507059e+37
        %v550 = vand.u32 %v538, 2147483648
        %v551 = vor.u32 1.1754944e-38, %v550
        %v552 = vsel %vm549, %v551, %v547
        %v553 = vmul.f32 %v528, %v552
        %v554 = vmin.f32 %v553, 1.0
        %v555 = vmax.f32 %v554, -1.0
        %v556 = vmul.f32 %v446, %v446
        %v557 = vmin.f32 16.0, %v556
        %v558 = vmul.f32 %v557, 2.1237322e-06
        %v559 = vadd.f32 %v558, 0.00028619796
        %v560 = vmul.f32 %v557, %v559
        %v561 = vadd.f32 %v560, 0.0036580483
        %v562 = vmul.f32 %v557, %v561
        %v563 = vadd.f32 %v562, 0.05243302
        %v564 = vmul.f32 %v557, %v563
        %v565 = vadd.f32 %v564, 0.18741608
        %v566 = vmul.f32 %v557, %v565
        %v567 = vadd.f32 %v566, 1.1283791
        %v568 = vmul.f32 %v446, %v567
        %v569 = vmul.f32 %v557, 3.8918573e-05
        %v570 = vadd.f32 %v569, 0.001143296
        %v571 = vmul.f32 %v557, %v570
        %v572 = vadd.f32 %v571, 0.014752088
        %v573 = vmul.f32 %v557, %v572
        %v574 = vadd.f32 %v573, 0.112945676
        %v575 = vmul.f32 %v557, %v574
        %v576 = vadd.f32 %v575, 0.4994258
        %v577 = vmul.f32 %v557, %v576
        %v578 = vadd.f32 %v577, 1.0
        %v579 = vrcp.pop %v578
        %v580 = vmul.f32 %v578, %v579
        %v581 = vsub.f32 1.0, %v580
        %v582 = vmul.f32 %v579, %v581
        %v583 = vadd.f32 %v579, %v582
        %vm584 = vweird.f32 %v578
        %vm585 = vweird.f32 %v579
        %vm586 = vmor %vm584, %vm585
        %v587 = vsel %vm586, %v579, %v583
        %v588 = vand.u32 2147483647, %v578
        %vm589 = vcmp.eq.f32.partialorder %v588, 8.507059e+37
        %v590 = vand.u32 %v578, 2147483648
        %v591 = vor.u32 1.1754944e-38, %v590
        %v592 = vsel %vm589, %v591, %v587
        %v593 = vmul.f32 %v568, %v592
        %v594 = vmin.f32 %v593, 1.0
        %v595 = vmax.f32 %v594, -1.0
        %v596 = vmul.f32 %v447, %v447
        %v597 = vmin.f32 16.0, %v596
        %v598 = vmul.f32 %v597, 2.1237322e-06
        %v599 = vadd.f32 %v598, 0.00028619796
        %v600 = vmul.f32 %v597, %v599
        %v601 = vadd.f32 %v600, 0.0036580483
        %v602 = vmul.f32 %v597, %v601
        %v603 = vadd.f32 %v602, 0.05243302
        %v604 = vmul.f32 %v597, %v603
        %v605 = vadd.f32 %v604, 0.18741608
        %v606 = vmul.f32 %v597, %v605
        %v607 = vadd.f32 %v606, 1.1283791
        %v608 = vmul.f32 %v447, %v607
        %v609 = vmul.f32 %v597, 3.8918573e-05
        %v610 = vadd.f32 %v609, 0.001143296
        %v611 = vmul.f32 %v597, %v610
        %v612 = vadd.f32 %v611, 0.014752088
        %v613 = vmul.f32 %v597, %v612
        %v614 = vadd.f32 %v613, 0.112945676
        %v615 = vmul.f32 %v597, %v614
        %v616 = vadd.f32 %v615, 0.4994258
        %v617 = vmul.f32 %v597, %v616
        %v618 = vadd.f32 %v617, 1.0
        %v619 = vrcp.pop %v618
        %v620 = vmul.f32 %v618, %v619
        %v621 = vsub.f32 1.0, %v620
        %v622 = vmul.f32 %v619, %v621
        %v623 = vadd.f32 %v619, %v622
        %vm624 = vweird.f32 %v618
        %vm625 = vweird.f32 %v619
        %vm626 = vmor %vm624, %vm625
        %v627 = vsel %vm626, %v619, %v623
        %v628 = vand.u32 2147483647, %v618
        %vm629 = vcmp.eq.f32.partialorder %v628, 8.507059e+37
        %v630 = vand.u32 %v618, 2147483648
        %v631 = vor.u32 1.1754944e-38, %v630
        %v632 = vsel %vm629, %v631, %v627
        %v633 = vmul.f32 %v608, %v632
        %v634 = vmin.f32 %v633, 1.0
        %v635 = vmax.f32 %v634, -1.0
        %v636 = vmul.f32 %v448, %v448
        %v637 = vmin.f32 16.0, %v636
        %v638 = vmul.f32 %v637, 2.1237322e-06
        %v639 = vadd.f32 %v638, 0.00028619796
        %v640 = vmul.f32 %v637, %v639
        %v641 = vadd.f32 %v640, 0.0036580483
        %v642 = vmul.f32 %v637, %v641
        %v643 = vadd.f32 %v642, 0.05243302
        %v644 = vmul.f32 %v637, %v643
        %v645 = vadd.f32 %v644, 0.18741608
        %v646 = vmul.f32 %v637, %v645
        %v647 = vadd.f32 %v646, 1.1283791
        %v648 = vmul.f32 %v448, %v647
        %v649 = vmul.f32 %v637, 3.8918573e-05
        %v650 = vadd.f32 %v649, 0.001143296
        %v651 = vmul.f32 %v637, %v650
        %v652 = vadd.f32 %v651, 0.014752088
        %v653 = vmul.f32 %v637, %v652
        %v654 = vadd.f32 %v653, 0.112945676
        %v655 = vmul.f32 %v637, %v654
        %v656 = vadd.f32 %v655, 0.4994258
        %v657 = vmul.f32 %v637, %v656
        %v658 = vadd.f32 %v657, 1.0
        %v659 = vrcp.pop %v658
        %v660 = vmul.f32 %v658, %v659
        %v661 = vsub.f32 1.0, %v660
        %v662 = vmul.f32 %v659, %v661
        %v663 = vadd.f32 %v659, %v662
        %vm664 = vweird.f32 %v658
        %vm665 = vweird.f32 %v659
        %vm666 = vmor %vm664, %vm665
        %v667 = vsel %vm666, %v659, %v663
        %v668 = vand.u32 2147483647, %v658
        %vm669 = vcmp.eq.f32.partialorder %v668, 8.507059e+37
        %v670 = vand.u32 %v658, 2147483648
        %v671 = vor.u32 1.1754944e-38, %v670
        %v672 = vsel %vm669, %v671, %v667
        %v673 = vmul.f32 %v648, %v672
        %v674 = vmin.f32 %v673, 1.0
        %v675 = vmax.f32 %v674, -1.0
        %v676 = vmul.f32 %v449, %v449
        %v677 = vmin.f32 16.0, %v676
        %v678 = vmul.f32 %v677, 2.1237322e-06
        %v679 = vadd.f32 %v678, 0.00028619796
        %v680 = vmul.f32 %v677, %v679
        %v681 = vadd.f32 %v680, 0.0036580483
        %v682 = vmul.f32 %v677, %v681
        %v683 = vadd.f32 %v682, 0.05243302
        %v684 = vmul.f32 %v677, %v683
        %v685 = vadd.f32 %v684, 0.18741608
        %v686 = vmul.f32 %v677, %v685
        %v687 = vadd.f32 %v686, 1.1283791
        %v688 = vmul.f32 %v449, %v687
        %v689 = vmul.f32 %v677, 3.8918573e-05
        %v690 = vadd.f32 %v689, 0.001143296
        %v691 = vmul.f32 %v677, %v690
        %v692 = vadd.f32 %v691, 0.014752088
        %v693 = vmul.f32 %v677, %v692
        %v694 = vadd.f32 %v693, 0.112945676
        %v695 = vmul.f32 %v677, %v694
        %v696 = vadd.f32 %v695, 0.4994258
        %v697 = vmul.f32 %v677, %v696
        %v698 = vadd.f32 %v697, 1.0
        %v699 = vrcp.pop %v698
        %v700 = vmul.f32 %v698, %v699
        %v701 = vsub.f32 1.0, %v700
        %v702 = vmul.f32 %v699, %v701
        %v703 = vadd.f32 %v699, %v702
        %vm704 = vweird.f32 %v698
        %vm705 = vweird.f32 %v699
        %vm706 = vmor %vm704, %vm705
        %v707 = vsel %vm706, %v699, %v703
        %v708 = vand.u32 2147483647, %v698
        %vm709 = vcmp.eq.f32.partialorder %v708, 8.507059e+37
        %v710 = vand.u32 %v698, 2147483648
        %v711 = vor.u32 1.1754944e-38, %v710
        %v712 = vsel %vm709, %v711, %v707
        %v713 = vmul.f32 %v688, %v712
        %v714 = vmin.f32 %v713, 1.0
        %v715 = vmax.f32 %v714, -1.0
        %v716 = vmul.f32 %v450, %v450
        %v717 = vmin.f32 16.0, %v716
        %v718 = vmul.f32 %v717, 2.1237322e-06
        %v719 = vadd.f32 %v718, 0.00028619796
        %v720 = vmul.f32 %v717, %v719
        %v721 = vadd.f32 %v720, 0.0036580483
        %v722 = vmul.f32 %v717, %v721
        %v723 = vadd.f32 %v722, 0.05243302
        %v724 = vmul.f32 %v717, %v723
        %v725 = vadd.f32 %v724, 0.18741608
        %v726 = vmul.f32 %v717, %v725
        %v727 = vadd.f32 %v726, 1.1283791
        %v728 = vmul.f32 %v450, %v727
        %v729 = vmul.f32 %v717, 3.8918573e-05
        %v730 = vadd.f32 %v729, 0.001143296
        %v731 = vmul.f32 %v717, %v730
        %v732 = vadd.f32 %v731, 0.014752088
        %v733 = vmul.f32 %v717, %v732
        %v734 = vadd.f32 %v733, 0.112945676
        %v735 = vmul.f32 %v717, %v734
        %v736 = vadd.f32 %v735, 0.4994258
        %v737 = vmul.f32 %v717, %v736
        %v738 = vadd.f32 %v737, 1.0
        %v739 = vrcp.pop %v738
        %v740 = vmul.f32 %v738, %v739
        %v741 = vsub.f32 1.0, %v740
        %v742 = vmul.f32 %v739, %v741
        %v743 = vadd.f32 %v739, %v742
        %vm744 = vweird.f32 %v738
        %vm745 = vweird.f32 %v739
        %vm746 = vmor %vm744, %vm745
        %v747 = vsel %vm746, %v739, %v743
        %v748 = vand.u32 2147483647, %v738
        %vm749 = vcmp.eq.f32.partialorder %v748, 8.507059e+37
        %v750 = vand.u32 %v738, 2147483648
        %v751 = vor.u32 1.1754944e-38, %v750
        %v752 = vsel %vm749, %v751, %v747
        %v753 = vmul.f32 %v728, %v752
        %v754 = vmin.f32 %v753, 1.0
        %v755 = vmax.f32 %v754, -1.0
        %v756 = vmul.f32 %v451, %v451
        %v757 = vmin.f32 16.0, %v756
        %v758 = vmul.f32 %v757, 2.1237322e-06
        %v759 = vadd.f32 %v758, 0.00028619796
        %v760 = vmul.f32 %v757, %v759
        %v761 = vadd.f32 %v760, 0.0036580483
        %v762 = vmul.f32 %v757, %v761
        %v763 = vadd.f32 %v762, 0.05243302
        %v764 = vmul.f32 %v757, %v763
        %v765 = vadd.f32 %v764, 0.18741608
        %v766 = vmul.f32 %v757, %v765
        %v767 = vadd.f32 %v766, 1.1283791
        %v768 = vmul.f32 %v451, %v767
        %v769 = vmul.f32 %v757, 3.8918573e-05
        %v770 = vadd.f32 %v769, 0.001143296
        %v771 = vmul.f32 %v757, %v770
        %v772 = vadd.f32 %v771, 0.014752088
        %v773 = vmul.f32 %v757, %v772
        %v774 = vadd.f32 %v773, 0.112945676
        %v775 = vmul.f32 %v757, %v774
        %v776 = vadd.f32 %v775, 0.4994258
        %v777 = vmul.f32 %v757, %v776
        %v778 = vadd.f32 %v777, 1.0
        %v779 = vrcp.pop %v778
        %v780 = vmul.f32 %v778, %v779
        %v781 = vsub.f32 1.0, %v780
        %v782 = vmul.f32 %v779, %v781
        %v783 = vadd.f32 %v779, %v782
        %vm784 = vweird.f32 %v778
        %vm785 = vweird.f32 %v779
        %vm786 = vmor %vm784, %vm785
        %v787 = vsel %vm786, %v779, %v783
        %v788 = vand.u32 2147483647, %v778
        %vm789 = vcmp.eq.f32.partialorder %v788, 8.507059e+37
        %v790 = vand.u32 %v778, 2147483648
        %v791 = vor.u32 1.1754944e-38, %v790
        %v792 = vsel %vm789, %v791, %v787
        %v793 = vmul.f32 %v768, %v792
        %v794 = vmin.f32 %v793, 1.0
        %v795 = vmax.f32 %v794, -1.0
        %v796 = vmul.f32 %v452, %v452
        %v797 = vmin.f32 16.0, %v796
        %v798 = vmul.f32 %v797, 2.1237322e-06
        %v799 = vadd.f32 %v798, 0.00028619796
        %v800 = vmul.f32 %v797, %v799
        %v801 = vadd.f32 %v800, 0.0036580483
        %v802 = vmul.f32 %v797, %v801
        %v803 = vadd.f32 %v802, 0.05243302
        %v804 = vmul.f32 %v797, %v803
        %v805 = vadd.f32 %v804, 0.18741608
        %v806 = vmul.f32 %v797, %v805
        %v807 = vadd.f32 %v806, 1.1283791
        %v808 = vmul.f32 %v452, %v807
        %v809 = vmul.f32 %v797, 3.8918573e-05
        %v810 = vadd.f32 %v809, 0.001143296
        %v811 = vmul.f32 %v797, %v810
        %v812 = vadd.f32 %v811, 0.014752088
        %v813 = vmul.f32 %v797, %v812
        %v814 = vadd.f32 %v813, 0.112945676
        %v815 = vmul.f32 %v797, %v814
        %v816 = vadd.f32 %v815, 0.4994258
        %v817 = vmul.f32 %v797, %v816
        %v818 = vadd.f32 %v817, 1.0
        %v819 = vrcp.pop %v818
        %v820 = vmul.f32 %v818, %v819
        %v821 = vsub.f32 1.0, %v820
        %v822 = vmul.f32 %v819, %v821
        %v823 = vadd.f32 %v819, %v822
        %vm824 = vweird.f32 %v818
        %vm825 = vweird.f32 %v819
        %vm826 = vmor %vm824, %vm825
        %v827 = vsel %vm826, %v819, %v823
        %v828 = vand.u32 2147483647, %v818
        %vm829 = vcmp.eq.f32.partialorder %v828, 8.507059e+37
        %v830 = vand.u32 %v818, 2147483648
        %v831 = vor.u32 1.1754944e-38, %v830
        %v832 = vsel %vm829, %v831, %v827
        %v833 = vmul.f32 %v808, %v832
        %v834 = vmin.f32 %v833, 1.0
        %v835 = vmax.f32 %v834, -1.0
        %v836 = vmul.f32 %v453, %v453
        %v837 = vmin.f32 16.0, %v836
        %v838 = vmul.f32 %v837, 2.1237322e-06
        %v839 = vadd.f32 %v838, 0.00028619796
        %v840 = vmul.f32 %v837, %v839
        %v841 = vadd.f32 %v840, 0.0036580483
        %v842 = vmul.f32 %v837, %v841
        %v843 = vadd.f32 %v842, 0.05243302
        %v844 = vmul.f32 %v837, %v843
        %v845 = vadd.f32 %v844, 0.18741608
        %v846 = vmul.f32 %v837, %v845
        %v847 = vadd.f32 %v846, 1.1283791
        %v848 = vmul.f32 %v453, %v847
        %v849 = vmul.f32 %v837, 3.8918573e-05
        %v850 = vadd.f32 %v849, 0.001143296
        %v851 = vmul.f32 %v837, %v850
        %v852 = vadd.f32 %v851, 0.014752088
        %v853 = vmul.f32 %v837, %v852
        %v854 = vadd.f32 %v853, 0.112945676
        %v855 = vmul.f32 %v837, %v854
        %v856 = vadd.f32 %v855, 0.4994258
        %v857 = vmul.f32 %v837, %v856
        %v858 = vadd.f32 %v857, 1.0
        %v859 = vrcp.pop %v858
        %v860 = vmul.f32 %v858, %v859
        %v861 = vsub.f32 1.0, %v860
        %v862 = vmul.f32 %v859, %v861
        %v863 = vadd.f32 %v859, %v862
        %vm864 = vweird.f32 %v858
        %vm865 = vweird.f32 %v859
        %vm866 = vmor %vm864, %vm865
        %v867 = vsel %vm866, %v859, %v863
        %v868 = vand.u32 2147483647, %v858
        %vm869 = vcmp.eq.f32.partialorder %v868, 8.507059e+37
        %v870 = vand.u32 %v858, 2147483648
        %v871 = vor.u32 1.1754944e-38, %v870
        %v872 = vsel %vm869, %v871, %v867
        %v873 = vmul.f32 %v848, %v872
        %v874 = vmin.f32 %v873, 1.0
        %v875 = vmax.f32 %v874, -1.0
        %v876 = vmul.f32 %v454, %v454
        %v877 = vmin.f32 16.0, %v876
        %v878 = vmul.f32 %v877, 2.1237322e-06
        %v879 = vadd.f32 %v878, 0.00028619796
        %v880 = vmul.f32 %v877, %v879
        %v881 = vadd.f32 %v880, 0.0036580483
        %v882 = vmul.f32 %v877, %v881
        %v883 = vadd.f32 %v882, 0.05243302
        %v884 = vmul.f32 %v877, %v883
        %v885 = vadd.f32 %v884, 0.18741608
        %v886 = vmul.f32 %v877, %v885
        %v887 = vadd.f32 %v886, 1.1283791
        %v888 = vmul.f32 %v454, %v887
        %v889 = vmul.f32 %v877, 3.8918573e-05
        %v890 = vadd.f32 %v889, 0.001143296
        %v891 = vmul.f32 %v877, %v890
        %v892 = vadd.f32 %v891, 0.014752088
        %v893 = vmul.f32 %v877, %v892
        %v894 = vadd.f32 %v893, 0.112945676
        %v895 = vmul.f32 %v877, %v894
        %v896 = vadd.f32 %v895, 0.4994258
        %v897 = vmul.f32 %v877, %v896
        %v898 = vadd.f32 %v897, 1.0
        %v899 = vrcp.pop %v898
        %v900 = vmul.f32 %v898, %v899
        %v901 = vsub.f32 1.0, %v900
        %v902 = vmul.f32 %v899, %v901
        %v903 = vadd.f32 %v899, %v902
        %vm904 = vweird.f32 %v898
        %vm905 = vweird.f32 %v899
        %vm906 = vmor %vm904, %vm905
        %v907 = vsel %vm906, %v899, %v903
        %v908 = vand.u32 2147483647, %v898
        %vm909 = vcmp.eq.f32.partialorder %v908, 8.507059e+37
        %v910 = vand.u32 %v898, 2147483648
        %v911 = vor.u32 1.1754944e-38, %v910
        %v912 = vsel %vm909, %v911, %v907
        %v913 = vmul.f32 %v888, %v912
        %v914 = vmin.f32 %v913, 1.0
        %v915 = vmax.f32 %v914, -1.0
        %v916 = vmul.f32 %v455, %v455
        %v917 = vmin.f32 16.0, %v916
        %v918 = vmul.f32 %v917, 2.1237322e-06
        %v919 = vadd.f32 %v918, 0.00028619796
        %v920 = vmul.f32 %v917, %v919
        %v921 = vadd.f32 %v920, 0.0036580483
        %v922 = vmul.f32 %v917, %v921
        %v923 = vadd.f32 %v922, 0.05243302
        %v924 = vmul.f32 %v917, %v923
        %v925 = vadd.f32 %v924, 0.18741608
        %v926 = vmul.f32 %v917, %v925
        %v927 = vadd.f32 %v926, 1.1283791
        %v928 = vmul.f32 %v455, %v927
        %v929 = vmul.f32 %v917, 3.8918573e-05
        %v930 = vadd.f32 %v929, 0.001143296
        %v931 = vmul.f32 %v917, %v930
        %v932 = vadd.f32 %v931, 0.014752088
        %v933 = vmul.f32 %v917, %v932
        %v934 = vadd.f32 %v933, 0.112945676
        %v935 = vmul.f32 %v917, %v934
        %v936 = vadd.f32 %v935, 0.4994258
        %v937 = vmul.f32 %v917, %v936
        %v938 = vadd.f32 %v937, 1.0
        %v939 = vrcp.pop %v938
        %v940 = vmul.f32 %v938, %v939
        %v941 = vsub.f32 1.0, %v940
        %v942 = vmul.f32 %v939, %v941
        %v943 = vadd.f32 %v939, %v942
        %vm944 = vweird.f32 %v938
        %vm945 = vweird.f32 %v939
        %vm946 = vmor %vm944, %vm945
        %v947 = vsel %vm946, %v939, %v943
        %v948 = vand.u32 2147483647, %v938
        %vm949 = vcmp.eq.f32.partialorder %v948, 8.507059e+37
        %v950 = vand.u32 %v938, 2147483648
        %v951 = vor.u32 1.1754944e-38, %v950
        %v952 = vsel %vm949, %v951, %v947
        %v953 = vmul.f32 %v928, %v952
        %v954 = vmin.f32 %v953, 1.0
        %v955 = vmax.f32 %v954, -1.0
        %v956 = vmul.f32 %v456, %v456
        %v957 = vmin.f32 16.0, %v956
        %v958 = vmul.f32 %v957, 2.1237322e-06
        %v959 = vadd.f32 %v958, 0.00028619796
        %v960 = vmul.f32 %v957, %v959
        %v961 = vadd.f32 %v960, 0.0036580483
        %v962 = vmul.f32 %v957, %v961
        %v963 = vadd.f32 %v962, 0.05243302
        %v964 = vmul.f32 %v957, %v963
        %v965 = vadd.f32 %v964, 0.18741608
        %v966 = vmul.f32 %v957, %v965
        %v967 = vadd.f32 %v966, 1.1283791
        %v968 = vmul.f32 %v456, %v967
        %v969 = vmul.f32 %v957, 3.8918573e-05
        %v970 = vadd.f32 %v969, 0.001143296
        %v971 = vmul.f32 %v957, %v970
        %v972 = vadd.f32 %v971, 0.014752088
        %v973 = vmul.f32 %v957, %v972
        %v974 = vadd.f32 %v973, 0.112945676
        %v975 = vmul.f32 %v957, %v974
        %v976 = vadd.f32 %v975, 0.4994258
        %v977 = vmul.f32 %v957, %v976
        %v978 = vadd.f32 %v977, 1.0
        %v979 = vrcp.pop %v978
        %v980 = vmul.f32 %v978, %v979
        %v981 = vsub.f32 1.0, %v980
        %v982 = vmul.f32 %v979, %v981
        %v983 = vadd.f32 %v979, %v982
        %vm984 = vweird.f32 %v978
        %vm985 = vweird.f32 %v979
        %vm986 = vmor %vm984, %vm985
        %v987 = vsel %vm986, %v979, %v983
        %v988 = vand.u32 2147483647, %v978
        %vm989 = vcmp.eq.f32.partialorder %v988, 8.507059e+37
        %v990 = vand.u32 %v978, 2147483648
        %v991 = vor.u32 1.1754944e-38, %v990
        %v992 = vsel %vm989, %v991, %v987
        %v993 = vmul.f32 %v968, %v992
        %v994 = vmin.f32 %v993, 1.0
        %v995 = vmax.f32 %v994, -1.0
        %v996 = vmul.f32 %v457, %v457
        %v997 = vmin.f32 16.0, %v996
        %v998 = vmul.f32 %v997, 2.1237322e-06
        %v999 = vadd.f32 %v998, 0.00028619796
        %v1000 = vmul.f32 %v997, %v999
        %v1001 = vadd.f32 %v1000, 0.0036580483
        %v1002 = vmul.f32 %v997, %v1001
        %v1003 = vadd.f32 %v1002, 0.05243302
        %v1004 = vmul.f32 %v997, %v1003
        %v1005 = vadd.f32 %v1004, 0.18741608
        %v1006 = vmul.f32 %v997, %v1005
        %v1007 = vadd.f32 %v1006, 1.1283791
        %v1008 = vmul.f32 %v457, %v1007
        %v1009 = vmul.f32 %v997, 3.8918573e-05
        %v1010 = vadd.f32 %v1009, 0.001143296
        %v1011 = vmul.f32 %v997, %v1010
        %v1012 = vadd.f32 %v1011, 0.014752088
        %v1013 = vmul.f32 %v997, %v1012
        %v1014 = vadd.f32 %v1013, 0.112945676
        %v1015 = vmul.f32 %v997, %v1014
        %v1016 = vadd.f32 %v1015, 0.4994258
        %v1017 = vmul.f32 %v997, %v1016
        %v1018 = vadd.f32 %v1017, 1.0
        %v1019 = vrcp.pop %v1018
        %v1020 = vmul.f32 %v1018, %v1019
        %v1021 = vsub.f32 1.0, %v1020
        %v1022 = vmul.f32 %v1019, %v1021
        %v1023 = vadd.f32 %v1019, %v1022
        %vm1024 = vweird.f32 %v1018
        %vm1025 = vweird.f32 %v1019
        %vm1026 = vmor %vm1024, %vm1025
        %v1027 = vsel %vm1026, %v1019, %v1023
        %v1028 = vand.u32 2147483647, %v1018
        %vm1029 = vcmp.eq.f32.partialorder %v1028, 8.507059e+37
        %v1030 = vand.u32 %v1018, 2147483648
        %v1031 = vor.u32 1.1754944e-38, %v1030
        %v1032 = vsel %vm1029, %v1031, %v1027
        %v1033 = vmul.f32 %v1008, %v1032
        %v1034 = vmin.f32 %v1033, 1.0
        %v1035 = vmax.f32 %v1034, -1.0
        %v1036 = vmul.f32 %v458, %v458
        %v1037 = vmin.f32 16.0, %v1036
        %v1038 = vmul.f32 %v1037, 2.1237322e-06
        %v1039 = vadd.f32 %v1038, 0.00028619796
        %v1040 = vmul.f32 %v1037, %v1039
        %v1041 = vadd.f32 %v1040, 0.0036580483
        %v1042 = vmul.f32 %v1037, %v1041
        %v1043 = vadd.f32 %v1042, 0.05243302
        %v1044 = vmul.f32 %v1037, %v1043
        %v1045 = vadd.f32 %v1044, 0.18741608
        %v1046 = vmul.f32 %v1037, %v1045
        %v1047 = vadd.f32 %v1046, 1.1283791
        %v1048 = vmul.f32 %v458, %v1047
        %v1049 = vmul.f32 %v1037, 3.8918573e-05
        %v1050 = vadd.f32 %v1049, 0.001143296
        %v1051 = vmul.f32 %v1037, %v1050
        %v1052 = vadd.f32 %v1051, 0.014752088
        %v1053 = vmul.f32 %v1037, %v1052
        %v1054 = vadd.f32 %v1053, 0.112945676
        %v1055 = vmul.f32 %v1037, %v1054
        %v1056 = vadd.f32 %v1055, 0.4994258
        %v1057 = vmul.f32 %v1037, %v1056
        %v1058 = vadd.f32 %v1057, 1.0
        %v1059 = vrcp.pop %v1058
        %v1060 = vmul.f32 %v1058, %v1059
        %v1061 = vsub.f32 1.0, %v1060
        %v1062 = vmul.f32 %v1059, %v1061
        %v1063 = vadd.f32 %v1059, %v1062
        %vm1064 = vweird.f32 %v1058
        %vm1065 = vweird.f32 %v1059
        %vm1066 = vmor %vm1064, %vm1065
        %v1067 = vsel %vm1066, %v1059, %v1063
        %v1068 = vand.u32 2147483647, %v1058
        %vm1069 = vcmp.eq.f32.partialorder %v1068, 8.507059e+37
        %v1070 = vand.u32 %v1058, 2147483648
        %v1071 = vor.u32 1.1754944e-38, %v1070
        %v1072 = vsel %vm1069, %v1071, %v1067
        %v1073 = vmul.f32 %v1048, %v1072
        %v1074 = vmin.f32 %v1073, 1.0
        %v1075 = vmax.f32 %v1074, -1.0
        %v1076 = vmul.f32 %v459, %v459
        %v1077 = vmin.f32 16.0, %v1076
        %v1078 = vmul.f32 %v1077, 2.1237322e-06
        %v1079 = vadd.f32 %v1078, 0.00028619796
        %v1080 = vmul.f32 %v1077, %v1079
        %v1081 = vadd.f32 %v1080, 0.0036580483
        %v1082 = vmul.f32 %v1077, %v1081
        %v1083 = vadd.f32 %v1082, 0.05243302
        %v1084 = vmul.f32 %v1077, %v1083
        %v1085 = vadd.f32 %v1084, 0.18741608
        %v1086 = vmul.f32 %v1077, %v1085
        %v1087 = vadd.f32 %v1086, 1.1283791
        %v1088 = vmul.f32 %v459, %v1087
        %v1089 = vmul.f32 %v1077, 3.8918573e-05
        %v1090 = vadd.f32 %v1089, 0.001143296
        %v1091 = vmul.f32 %v1077, %v1090
        %v1092 = vadd.f32 %v1091, 0.014752088
        %v1093 = vmul.f32 %v1077, %v1092
        %v1094 = vadd.f32 %v1093, 0.112945676
        %v1095 = vmul.f32 %v1077, %v1094
        %v1096 = vadd.f32 %v1095, 0.4994258
        %v1097 = vmul.f32 %v1077, %v1096
        %v1098 = vadd.f32 %v1097, 1.0
        %v1099 = vrcp.pop %v1098
        %v1100 = vmul.f32 %v1098, %v1099
        %v1101 = vsub.f32 1.0, %v1100
        %v1102 = vmul.f32 %v1099, %v1101
        %v1103 = vadd.f32 %v1099, %v1102
        %vm1104 = vweird.f32 %v1098
        %vm1105 = vweird.f32 %v1099
        %vm1106 = vmor %vm1104, %vm1105
        %v1107 = vsel %vm1106, %v1099, %v1103
        %v1108 = vand.u32 2147483647, %v1098
        %vm1109 = vcmp.eq.f32.partialorder %v1108, 8.507059e+37
        %v1110 = vand.u32 %v1098, 2147483648
        %v1111 = vor.u32 1.1754944e-38, %v1110
        %v1112 = vsel %vm1109, %v1111, %v1107
        %v1113 = vmul.f32 %v1088, %v1112
        %v1114 = vmin.f32 %v1113, 1.0
        %v1115 = vmax.f32 %v1114, -1.0
        %v1116 = vmul.f32 %v460, %v460
        %v1117 = vmin.f32 16.0, %v1116
        %v1118 = vmul.f32 %v1117, 2.1237322e-06
        %v1119 = vadd.f32 %v1118, 0.00028619796
        %v1120 = vmul.f32 %v1117, %v1119
        %v1121 = vadd.f32 %v1120, 0.0036580483
        %v1122 = vmul.f32 %v1117, %v1121
        %v1123 = vadd.f32 %v1122, 0.05243302
        %v1124 = vmul.f32 %v1117, %v1123
        %v1125 = vadd.f32 %v1124, 0.18741608
        %v1126 = vmul.f32 %v1117, %v1125
        %v1127 = vadd.f32 %v1126, 1.1283791
        %v1128 = vmul.f32 %v460, %v1127
        %v1129 = vmul.f32 %v1117, 3.8918573e-05
        %v1130 = vadd.f32 %v1129, 0.001143296
        %v1131 = vmul.f32 %v1117, %v1130
        %v1132 = vadd.f32 %v1131, 0.014752088
        %v1133 = vmul.f32 %v1117, %v1132
        %v1134 = vadd.f32 %v1133, 0.112945676
        %v1135 = vmul.f32 %v1117, %v1134
        %v1136 = vadd.f32 %v1135, 0.4994258
        %v1137 = vmul.f32 %v1117, %v1136
        %v1138 = vadd.f32 %v1137, 1.0
        %v1139 = vrcp.pop %v1138
        %v1140 = vmul.f32 %v1138, %v1139
        %v1141 = vsub.f32 1.0, %v1140
        %v1142 = vmul.f32 %v1139, %v1141
        %v1143 = vadd.f32 %v1139, %v1142
        %vm1144 = vweird.f32 %v1138
        %vm1145 = vweird.f32 %v1139
        %vm1146 = vmor %vm1144, %vm1145
        %v1147 = vsel %vm1146, %v1139, %v1143
        %v1148 = vand.u32 2147483647, %v1138
        %vm1149 = vcmp.eq.f32.partialorder %v1148, 8.507059e+37
        %v1150 = vand.u32 %v1138, 2147483648
        %v1151 = vor.u32 1.1754944e-38, %v1150
        %v1152 = vsel %vm1149, %v1151, %v1147
        %v1153 = vmul.f32 %v1128, %v1152
        %v1154 = vmin.f32 %v1153, 1.0
        %v1155 = vmax.f32 %v1154, -1.0
        %v1156 = vmul.f32 %v461, %v461
        %v1157 = vmin.f32 16.0, %v1156
        %v1158 = vmul.f32 %v1157, 2.1237322e-06
        %v1159 = vadd.f32 %v1158, 0.00028619796
        %v1160 = vmul.f32 %v1157, %v1159
        %v1161 = vadd.f32 %v1160, 0.0036580483
        %v1162 = vmul.f32 %v1157, %v1161
        %v1163 = vadd.f32 %v1162, 0.05243302
        %v1164 = vmul.f32 %v1157, %v1163
        %v1165 = vadd.f32 %v1164, 0.18741608
        %v1166 = vmul.f32 %v1157, %v1165
        %v1167 = vadd.f32 %v1166, 1.1283791
        %v1168 = vmul.f32 %v461, %v1167
        %v1169 = vmul.f32 %v1157, 3.8918573e-05
        %v1170 = vadd.f32 %v1169, 0.001143296
        %v1171 = vmul.f32 %v1157, %v1170
        %v1172 = vadd.f32 %v1171, 0.014752088
        %v1173 = vmul.f32 %v1157, %v1172
        %v1174 = vadd.f32 %v1173, 0.112945676
        %v1175 = vmul.f32 %v1157, %v1174
        %v1176 = vadd.f32 %v1175, 0.4994258
        %v1177 = vmul.f32 %v1157, %v1176
        %v1178 = vadd.f32 %v1177, 1.0
        %v1179 = vrcp.pop %v1178
        %v1180 = vmul.f32 %v1178, %v1179
        %v1181 = vsub.f32 1.0, %v1180
        %v1182 = vmul.f32 %v1179, %v1181
        %v1183 = vadd.f32 %v1179, %v1182
        %vm1184 = vweird.f32 %v1178
        %vm1185 = vweird.f32 %v1179
        %vm1186 = vmor %vm1184, %vm1185
        %v1187 = vsel %vm1186, %v1179, %v1183
        %v1188 = vand.u32 2147483647, %v1178
        %vm1189 = vcmp.eq.f32.partialorder %v1188, 8.507059e+37
        %v1190 = vand.u32 %v1178, 2147483648
        %v1191 = vor.u32 1.1754944e-38, %v1190
        %v1192 = vsel %vm1189, %v1191, %v1187
        %v1193 = vmul.f32 %v1168, %v1192
        %v1194 = vmin.f32 %v1193, 1.0
        %v1195 = vmax.f32 %v1194, -1.0
        %v1196 = vmul.f32 %v462, %v462
        %v1197 = vmin.f32 16.0, %v1196
        %v1198 = vmul.f32 %v1197, 2.1237322e-06
        %v1199 = vadd.f32 %v1198, 0.00028619796
        %v1200 = vmul.f32 %v1197, %v1199
        %v1201 = vadd.f32 %v1200, 0.0036580483
        %v1202 = vmul.f32 %v1197, %v1201
        %v1203 = vadd.f32 %v1202, 0.05243302
        %v1204 = vmul.f32 %v1197, %v1203
        %v1205 = vadd.f32 %v1204, 0.18741608
        %v1206 = vmul.f32 %v1197, %v1205
        %v1207 = vadd.f32 %v1206, 1.1283791
        %v1208 = vmul.f32 %v462, %v1207
        %v1209 = vmul.f32 %v1197, 3.8918573e-05
        %v1210 = vadd.f32 %v1209, 0.001143296
        %v1211 = vmul.f32 %v1197, %v1210
        %v1212 = vadd.f32 %v1211, 0.014752088
        %v1213 = vmul.f32 %v1197, %v1212
        %v1214 = vadd.f32 %v1213, 0.112945676
        %v1215 = vmul.f32 %v1197, %v1214
        %v1216 = vadd.f32 %v1215, 0.4994258
        %v1217 = vmul.f32 %v1197, %v1216
        %v1218 = vadd.f32 %v1217, 1.0
        %v1219 = vrcp.pop %v1218
        %v1220 = vmul.f32 %v1218, %v1219
        %v1221 = vsub.f32 1.0, %v1220
        %v1222 = vmul.f32 %v1219, %v1221
        %v1223 = vadd.f32 %v1219, %v1222
        %vm1224 = vweird.f32 %v1218
        %vm1225 = vweird.f32 %v1219
        %vm1226 = vmor %vm1224, %vm1225
        %v1227 = vsel %vm1226, %v1219, %v1223
        %v1228 = vand.u32 2147483647, %v1218
        %vm1229 = vcmp.eq.f32.partialorder %v1228, 8.507059e+37
        %v1230 = vand.u32 %v1218, 2147483648
        %v1231 = vor.u32 1.1754944e-38, %v1230
        %v1232 = vsel %vm1229, %v1231, %v1227
        %v1233 = vmul.f32 %v1208, %v1232
        %v1234 = vmin.f32 %v1233, 1.0
        %v1235 = vmax.f32 %v1234, -1.0
        %v1236 = vmul.f32 %v463, %v463
        %v1237 = vmin.f32 16.0, %v1236
        %v1238 = vmul.f32 %v1237, 2.1237322e-06
        %v1239 = vadd.f32 %v1238, 0.00028619796
        %v1240 = vmul.f32 %v1237, %v1239
        %v1241 = vadd.f32 %v1240, 0.0036580483
        %v1242 = vmul.f32 %v1237, %v1241
        %v1243 = vadd.f32 %v1242, 0.05243302
        %v1244 = vmul.f32 %v1237, %v1243
        %v1245 = vadd.f32 %v1244, 0.18741608
        %v1246 = vmul.f32 %v1237, %v1245
        %v1247 = vadd.f32 %v1246, 1.1283791
        %v1248 = vmul.f32 %v463, %v1247
        %v1249 = vmul.f32 %v1237, 3.8918573e-05
        %v1250 = vadd.f32 %v1249, 0.001143296
        %v1251 = vmul.f32 %v1237, %v1250
        %v1252 = vadd.f32 %v1251, 0.014752088
        %v1253 = vmul.f32 %v1237, %v1252
        %v1254 = vadd.f32 %v1253, 0.112945676
        %v1255 = vmul.f32 %v1237, %v1254
        %v1256 = vadd.f32 %v1255, 0.4994258
        %v1257 = vmul.f32 %v1237, %v1256
        %v1258 = vadd.f32 %v1257, 1.0
        %v1259 = vrcp.pop %v1258
        %v1260 = vmul.f32 %v1258, %v1259
        %v1261 = vsub.f32 1.0, %v1260
        %v1262 = vmul.f32 %v1259, %v1261
        %v1263 = vadd.f32 %v1259, %v1262
        %vm1264 = vweird.f32 %v1258
        %vm1265 = vweird.f32 %v1259
        %vm1266 = vmor %vm1264, %vm1265
        %v1267 = vsel %vm1266, %v1259, %v1263
        %v1268 = vand.u32 2147483647, %v1258
        %vm1269 = vcmp.eq.f32.partialorder %v1268, 8.507059e+37
        %v1270 = vand.u32 %v1258, 2147483648
        %v1271 = vor.u32 1.1754944e-38, %v1270
        %v1272 = vsel %vm1269, %v1271, %v1267
        %v1273 = vmul.f32 %v1248, %v1272
        %v1274 = vmin.f32 %v1273, 1.0
        %v1275 = vmax.f32 %v1274, -1.0
        %v1276 = vmul.f32 %v464, %v464
        %v1277 = vmin.f32 16.0, %v1276
        %v1278 = vmul.f32 %v1277, 2.1237322e-06
        %v1279 = vadd.f32 %v1278, 0.00028619796
        %v1280 = vmul.f32 %v1277, %v1279
        %v1281 = vadd.f32 %v1280, 0.0036580483
        %v1282 = vmul.f32 %v1277, %v1281
        %v1283 = vadd.f32 %v1282, 0.05243302
        %v1284 = vmul.f32 %v1277, %v1283
        %v1285 = vadd.f32 %v1284, 0.18741608
        %v1286 = vmul.f32 %v1277, %v1285
        %v1287 = vadd.f32 %v1286, 1.1283791
        %v1288 = vmul.f32 %v464, %v1287
        %v1289 = vmul.f32 %v1277, 3.8918573e-05
        %v1290 = vadd.f32 %v1289, 0.001143296
        %v1291 = vmul.f32 %v1277, %v1290
        %v1292 = vadd.f32 %v1291, 0.014752088
        %v1293 = vmul.f32 %v1277, %v1292
        %v1294 = vadd.f32 %v1293, 0.112945676
        %v1295 = vmul.f32 %v1277, %v1294
        %v1296 = vadd.f32 %v1295, 0.4994258
        %v1297 = vmul.f32 %v1277, %v1296
        %v1298 = vadd.f32 %v1297, 1.0
        %v1299 = vrcp.pop %v1298
        %v1300 = vmul.f32 %v1298, %v1299
        %v1301 = vsub.f32 1.0, %v1300
        %v1302 = vmul.f32 %v1299, %v1301
        %v1303 = vadd.f32 %v1299, %v1302
        %vm1304 = vweird.f32 %v1298
        %vm1305 = vweird.f32 %v1299
        %vm1306 = vmor %vm1304, %vm1305
        %v1307 = vsel %vm1306, %v1299, %v1303
        %v1308 = vand.u32 2147483647, %v1298
        %vm1309 = vcmp.eq.f32.partialorder %v1308, 8.507059e+37
        %v1310 = vand.u32 %v1298, 2147483648
        %v1311 = vor.u32 1.1754944e-38, %v1310
        %v1312 = vsel %vm1309, %v1311, %v1307
        %v1313 = vmul.f32 %v1288, %v1312
        %v1314 = vmin.f32 %v1313, 1.0
        %v1315 = vmax.f32 %v1314, -1.0
        %v1316 = vmul.f32 %v465, %v465
        %v1317 = vmin.f32 16.0, %v1316
        %v1318 = vmul.f32 %v1317, 2.1237322e-06
        %v1319 = vadd.f32 %v1318, 0.00028619796
        %v1320 = vmul.f32 %v1317, %v1319
        %v1321 = vadd.f32 %v1320, 0.0036580483
        %v1322 = vmul.f32 %v1317, %v1321
        %v1323 = vadd.f32 %v1322, 0.05243302
        %v1324 = vmul.f32 %v1317, %v1323
        %v1325 = vadd.f32 %v1324, 0.18741608
        %v1326 = vmul.f32 %v1317, %v1325
        %v1327 = vadd.f32 %v1326, 1.1283791
        %v1328 = vmul.f32 %v465, %v1327
        %v1329 = vmul.f32 %v1317, 3.8918573e-05
        %v1330 = vadd.f32 %v1329, 0.001143296
        %v1331 = vmul.f32 %v1317, %v1330
        %v1332 = vadd.f32 %v1331, 0.014752088
        %v1333 = vmul.f32 %v1317, %v1332
        %v1334 = vadd.f32 %v1333, 0.112945676
        %v1335 = vmul.f32 %v1317, %v1334
        %v1336 = vadd.f32 %v1335, 0.4994258
        %v1337 = vmul.f32 %v1317, %v1336
        %v1338 = vadd.f32 %v1337, 1.0
        %v1339 = vrcp.pop %v1338
        %v1340 = vmul.f32 %v1338, %v1339
        %v1341 = vsub.f32 1.0, %v1340
        %v1342 = vmul.f32 %v1339, %v1341
        %v1343 = vadd.f32 %v1339, %v1342
        %vm1344 = vweird.f32 %v1338
        %vm1345 = vweird.f32 %v1339
        %vm1346 = vmor %vm1344, %vm1345
        %v1347 = vsel %vm1346, %v1339, %v1343
        %v1348 = vand.u32 2147483647, %v1338
        %vm1349 = vcmp.eq.f32.partialorder %v1348, 8.507059e+37
        %v1350 = vand.u32 %v1338, 2147483648
        %v1351 = vor.u32 1.1754944e-38, %v1350
        %v1352 = vsel %vm1349, %v1351, %v1347
        %v1353 = vmul.f32 %v1328, %v1352
        %v1354 = vmin.f32 %v1353, 1.0
        %v1355 = vmax.f32 %v1354, -1.0
        %v1356 = vmul.f32 %v466, %v466
        %v1357 = vmin.f32 16.0, %v1356
        %v1358 = vmul.f32 %v1357, 2.1237322e-06
        %v1359 = vadd.f32 %v1358, 0.00028619796
        %v1360 = vmul.f32 %v1357, %v1359
        %v1361 = vadd.f32 %v1360, 0.0036580483
        %v1362 = vmul.f32 %v1357, %v1361
        %v1363 = vadd.f32 %v1362, 0.05243302
        %v1364 = vmul.f32 %v1357, %v1363
        %v1365 = vadd.f32 %v1364, 0.18741608
        %v1366 = vmul.f32 %v1357, %v1365
        %v1367 = vadd.f32 %v1366, 1.1283791
        %v1368 = vmul.f32 %v466, %v1367
        %v1369 = vmul.f32 %v1357, 3.8918573e-05
        %v1370 = vadd.f32 %v1369, 0.001143296
        %v1371 = vmul.f32 %v1357, %v1370
        %v1372 = vadd.f32 %v1371, 0.014752088
        %v1373 = vmul.f32 %v1357, %v1372
        %v1374 = vadd.f32 %v1373, 0.112945676
        %v1375 = vmul.f32 %v1357, %v1374
        %v1376 = vadd.f32 %v1375, 0.4994258
        %v1377 = vmul.f32 %v1357, %v1376
        %v1378 = vadd.f32 %v1377, 1.0
        %v1379 = vrcp.pop %v1378
        %v1380 = vmul.f32 %v1378, %v1379
        %v1381 = vsub.f32 1.0, %v1380
        %v1382 = vmul.f32 %v1379, %v1381
        %v1383 = vadd.f32 %v1379, %v1382
        %vm1384 = vweird.f32 %v1378
        %vm1385 = vweird.f32 %v1379
        %vm1386 = vmor %vm1384, %vm1385
        %v1387 = vsel %vm1386, %v1379, %v1383
        %v1388 = vand.u32 2147483647, %v1378
        %vm1389 = vcmp.eq.f32.partialorder %v1388, 8.507059e+37
        %v1390 = vand.u32 %v1378, 2147483648
        %v1391 = vor.u32 1.1754944e-38, %v1390
        %v1392 = vsel %vm1389, %v1391, %v1387
        %v1393 = vmul.f32 %v1368, %v1392
        %v1394 = vmin.f32 %v1393, 1.0
        %v1395 = vmax.f32 %v1394, -1.0
        %v1396 = vmul.f32 %v467, %v467
        %v1397 = vmin.f32 16.0, %v1396
        %v1398 = vmul.f32 %v1397, 2.1237322e-06
        %v1399 = vadd.f32 %v1398, 0.00028619796
        %v1400 = vmul.f32 %v1397, %v1399
        %v1401 = vadd.f32 %v1400, 0.0036580483
        %v1402 = vmul.f32 %v1397, %v1401
        %v1403 = vadd.f32 %v1402, 0.05243302
        %v1404 = vmul.f32 %v1397, %v1403
        %v1405 = vadd.f32 %v1404, 0.18741608
        %v1406 = vmul.f32 %v1397, %v1405
        %v1407 = vadd.f32 %v1406, 1.1283791
        %v1408 = vmul.f32 %v467, %v1407
        %v1409 = vmul.f32 %v1397, 3.8918573e-05
        %v1410 = vadd.f32 %v1409, 0.001143296
        %v1411 = vmul.f32 %v1397, %v1410
        %v1412 = vadd.f32 %v1411, 0.014752088
        %v1413 = vmul.f32 %v1397, %v1412
        %v1414 = vadd.f32 %v1413, 0.112945676
        %v1415 = vmul.f32 %v1397, %v1414
        %v1416 = vadd.f32 %v1415, 0.4994258
        %v1417 = vmul.f32 %v1397, %v1416
        %v1418 = vadd.f32 %v1417, 1.0
        %v1419 = vrcp.pop %v1418
        %v1420 = vmul.f32 %v1418, %v1419
        %v1421 = vsub.f32 1.0, %v1420
        %v1422 = vmul.f32 %v1419, %v1421
        %v1423 = vadd.f32 %v1419, %v1422
        %vm1424 = vweird.f32 %v1418
        %vm1425 = vweird.f32 %v1419
        %vm1426 = vmor %vm1424, %vm1425
        %v1427 = vsel %vm1426, %v1419, %v1423
        %v1428 = vand.u32 2147483647, %v1418
        %vm1429 = vcmp.eq.f32.partialorder %v1428, 8.507059e+37
        %v1430 = vand.u32 %v1418, 2147483648
        %v1431 = vor.u32 1.1754944e-38, %v1430
        %v1432 = vsel %vm1429, %v1431, %v1427
        %v1433 = vmul.f32 %v1408, %v1432
        %v1434 = vmin.f32 %v1433, 1.0
        %v1435 = vmax.f32 %v1434, -1.0
        %v1436 = vmul.f32 %v468, %v468
        %v1437 = vmin.f32 16.0, %v1436
        %v1438 = vmul.f32 %v1437, 2.1237322e-06
        %v1439 = vadd.f32 %v1438, 0.00028619796
        %v1440 = vmul.f32 %v1437, %v1439
        %v1441 = vadd.f32 %v1440, 0.0036580483
        %v1442 = vmul.f32 %v1437, %v1441
        %v1443 = vadd.f32 %v1442, 0.05243302
        %v1444 = vmul.f32 %v1437, %v1443
        %v1445 = vadd.f32 %v1444, 0.18741608
        %v1446 = vmul.f32 %v1437, %v1445
        %v1447 = vadd.f32 %v1446, 1.1283791
        %v1448 = vmul.f32 %v468, %v1447
        %v1449 = vmul.f32 %v1437, 3.8918573e-05
        %v1450 = vadd.f32 %v1449, 0.001143296
        %v1451 = vmul.f32 %v1437, %v1450
        %v1452 = vadd.f32 %v1451, 0.014752088
        %v1453 = vmul.f32 %v1437, %v1452
        %v1454 = vadd.f32 %v1453, 0.112945676
        %v1455 = vmul.f32 %v1437, %v1454
        %v1456 = vadd.f32 %v1455, 0.4994258
        %v1457 = vmul.f32 %v1437, %v1456
        %v1458 = vadd.f32 %v1457, 1.0
        %v1459 = vrcp.pop %v1458
        %v1460 = vmul.f32 %v1458, %v1459
        %v1461 = vsub.f32 1.0, %v1460
        %v1462 = vmul.f32 %v1459, %v1461
        %v1463 = vadd.f32 %v1459, %v1462
        %vm1464 = vweird.f32 %v1458
        %vm1465 = vweird.f32 %v1459
        %vm1466 = vmor %vm1464, %vm1465
        %v1467 = vsel %vm1466, %v1459, %v1463
        %v1468 = vand.u32 2147483647, %v1458
        %vm1469 = vcmp.eq.f32.partialorder %v1468, 8.507059e+37
        %v1470 = vand.u32 %v1458, 2147483648
        %v1471 = vor.u32 1.1754944e-38, %v1470
        %v1472 = vsel %vm1469, %v1471, %v1467
        %v1473 = vmul.f32 %v1448, %v1472
        %v1474 = vmin.f32 %v1473, 1.0
        %v1475 = vmax.f32 %v1474, -1.0
        %v1476 = vmul.f32 %v469, %v469
        %v1477 = vmin.f32 16.0, %v1476
        %v1478 = vmul.f32 %v1477, 2.1237322e-06
        %v1479 = vadd.f32 %v1478, 0.00028619796
        %v1480 = vmul.f32 %v1477, %v1479
        %v1481 = vadd.f32 %v1480, 0.0036580483
        %v1482 = vmul.f32 %v1477, %v1481
        %v1483 = vadd.f32 %v1482, 0.05243302
        %v1484 = vmul.f32 %v1477, %v1483
        %v1485 = vadd.f32 %v1484, 0.18741608
        %v1486 = vmul.f32 %v1477, %v1485
        %v1487 = vadd.f32 %v1486, 1.1283791
        %v1488 = vmul.f32 %v469, %v1487
        %v1489 = vmul.f32 %v1477, 3.8918573e-05
        %v1490 = vadd.f32 %v1489, 0.001143296
        %v1491 = vmul.f32 %v1477, %v1490
        %v1492 = vadd.f32 %v1491, 0.014752088
        %v1493 = vmul.f32 %v1477, %v1492
        %v1494 = vadd.f32 %v1493, 0.112945676
        %v1495 = vmul.f32 %v1477, %v1494
        %v1496 = vadd.f32 %v1495, 0.4994258
        %v1497 = vmul.f32 %v1477, %v1496
        %v1498 = vadd.f32 %v1497, 1.0
        %v1499 = vrcp.pop %v1498
        %v1500 = vmul.f32 %v1498, %v1499
        %v1501 = vsub.f32 1.0, %v1500
        %v1502 = vmul.f32 %v1499, %v1501
        %v1503 = vadd.f32 %v1499, %v1502
        %vm1504 = vweird.f32 %v1498
        %vm1505 = vweird.f32 %v1499
        %vm1506 = vmor %vm1504, %vm1505
        %v1507 = vsel %vm1506, %v1499, %v1503
        %v1508 = vand.u32 2147483647, %v1498
        %vm1509 = vcmp.eq.f32.partialorder %v1508, 8.507059e+37
        %v1510 = vand.u32 %v1498, 2147483648
        %v1511 = vor.u32 1.1754944e-38, %v1510
        %v1512 = vsel %vm1509, %v1511, %v1507
        %v1513 = vmul.f32 %v1488, %v1512
        %v1514 = vmin.f32 %v1513, 1.0
        %v1515 = vmax.f32 %v1514, -1.0
        %v1516 = vmul.f32 %v470, %v470
        %v1517 = vmin.f32 16.0, %v1516
        %v1518 = vmul.f32 %v1517, 2.1237322e-06
        %v1519 = vadd.f32 %v1518, 0.00028619796
        %v1520 = vmul.f32 %v1517, %v1519
        %v1521 = vadd.f32 %v1520, 0.0036580483
        %v1522 = vmul.f32 %v1517, %v1521
        %v1523 = vadd.f32 %v1522, 0.05243302
        %v1524 = vmul.f32 %v1517, %v1523
        %v1525 = vadd.f32 %v1524, 0.18741608
        %v1526 = vmul.f32 %v1517, %v1525
        %v1527 = vadd.f32 %v1526, 1.1283791
        %v1528 = vmul.f32 %v470, %v1527
        %v1529 = vmul.f32 %v1517, 3.8918573e-05
        %v1530 = vadd.f32 %v1529, 0.001143296
        %v1531 = vmul.f32 %v1517, %v1530
        %v1532 = vadd.f32 %v1531, 0.014752088
        %v1533 = vmul.f32 %v1517, %v1532
        %v1534 = vadd.f32 %v1533, 0.112945676
        %v1535 = vmul.f32 %v1517, %v1534
        %v1536 = vadd.f32 %v1535, 0.4994258
        %v1537 = vmul.f32 %v1517, %v1536
        %v1538 = vadd.f32 %v1537, 1.0
        %v1539 = vrcp.pop %v1538
        %v1540 = vmul.f32 %v1538, %v1539
        %v1541 = vsub.f32 1.0, %v1540
        %v1542 = vmul.f32 %v1539, %v1541
        %v1543 = vadd.f32 %v1539, %v1542
        %vm1544 = vweird.f32 %v1538
        %vm1545 = vweird.f32 %v1539
        %vm1546 = vmor %vm1544, %vm1545
        %v1547 = vsel %vm1546, %v1539, %v1543
        %v1548 = vand.u32 2147483647, %v1538
        %vm1549 = vcmp.eq.f32.partialorder %v1548, 8.507059e+37
        %v1550 = vand.u32 %v1538, 2147483648
        %v1551 = vor.u32 1.1754944e-38, %v1550
        %v1552 = vsel %vm1549, %v1551, %v1547
        %v1553 = vmul.f32 %v1528, %v1552
        %v1554 = vmin.f32 %v1553, 1.0
        %v1555 = vmax.f32 %v1554, -1.0
        %v1556 = vmul.f32 %v471, %v471
        %v1557 = vmin.f32 16.0, %v1556
        %v1558 = vmul.f32 %v1557, 2.1237322e-06
        %v1559 = vadd.f32 %v1558, 0.00028619796
        %v1560 = vmul.f32 %v1557, %v1559
        %v1561 = vadd.f32 %v1560, 0.0036580483
        %v1562 = vmul.f32 %v1557, %v1561
        %v1563 = vadd.f32 %v1562, 0.05243302
        %v1564 = vmul.f32 %v1557, %v1563
        %v1565 = vadd.f32 %v1564, 0.18741608
        %v1566 = vmul.f32 %v1557, %v1565
        %v1567 = vadd.f32 %v1566, 1.1283791
        %v1568 = vmul.f32 %v471, %v1567
        %v1569 = vmul.f32 %v1557, 3.8918573e-05
        %v1570 = vadd.f32 %v1569, 0.001143296
        %v1571 = vmul.f32 %v1557, %v1570
        %v1572 = vadd.f32 %v1571, 0.014752088
        %v1573 = vmul.f32 %v1557, %v1572
        %v1574 = vadd.f32 %v1573, 0.112945676
        %v1575 = vmul.f32 %v1557, %v1574
        %v1576 = vadd.f32 %v1575, 0.4994258
        %v1577 = vmul.f32 %v1557, %v1576
        %v1578 = vadd.f32 %v1577, 1.0
        %v1579 = vrcp.pop %v1578
        %v1580 = vmul.f32 %v1578, %v1579
        %v1581 = vsub.f32 1.0, %v1580
        %v1582 = vmul.f32 %v1579, %v1581
        %v1583 = vadd.f32 %v1579, %v1582
        %vm1584 = vweird.f32 %v1578
        %vm1585 = vweird.f32 %v1579
        %vm1586 = vmor %vm1584, %vm1585
        %v1587 = vsel %vm1586, %v1579, %v1583
        %v1588 = vand.u32 2147483647, %v1578
        %vm1589 = vcmp.eq.f32.partialorder %v1588, 8.507059e+37
        %v1590 = vand.u32 %v1578, 2147483648
        %v1591 = vor.u32 1.1754944e-38, %v1590
        %v1592 = vsel %vm1589, %v1591, %v1587
        %v1593 = vmul.f32 %v1568, %v1592
        %v1594 = vmin.f32 %v1593, 1.0
        %v1595 = vmax.f32 %v1594, -1.0
        %v1596 = vmul.f32 %v472, %v472
        %v1597 = vmin.f32 16.0, %v1596
        %v1598 = vmul.f32 %v1597, 2.1237322e-06
        %v1599 = vadd.f32 %v1598, 0.00028619796
        %v1600 = vmul.f32 %v1597, %v1599
        %v1601 = vadd.f32 %v1600, 0.0036580483
        %v1602 = vmul.f32 %v1597, %v1601
        %v1603 = vadd.f32 %v1602, 0.05243302
        %v1604 = vmul.f32 %v1597, %v1603
        %v1605 = vadd.f32 %v1604, 0.18741608
        %v1606 = vmul.f32 %v1597, %v1605
        %v1607 = vadd.f32 %v1606, 1.1283791
        %v1608 = vmul.f32 %v472, %v1607
        %v1609 = vmul.f32 %v1597, 3.8918573e-05
        %v1610 = vadd.f32 %v1609, 0.001143296
        %v1611 = vmul.f32 %v1597, %v1610
        %v1612 = vadd.f32 %v1611, 0.014752088
        %v1613 = vmul.f32 %v1597, %v1612
        %v1614 = vadd.f32 %v1613, 0.112945676
        %v1615 = vmul.f32 %v1597, %v1614
        %v1616 = vadd.f32 %v1615, 0.4994258
        %v1617 = vmul.f32 %v1597, %v1616
        %v1618 = vadd.f32 %v1617, 1.0
        %v1619 = vrcp.pop %v1618
        %v1620 = vmul.f32 %v1618, %v1619
        %v1621 = vsub.f32 1.0, %v1620
        %v1622 = vmul.f32 %v1619, %v1621
        %v1623 = vadd.f32 %v1619, %v1622
        %vm1624 = vweird.f32 %v1618
        %vm1625 = vweird.f32 %v1619
        %vm1626 = vmor %vm1624, %vm1625
        %v1627 = vsel %vm1626, %v1619, %v1623
        %v1628 = vand.u32 2147483647, %v1618
        %vm1629 = vcmp.eq.f32.partialorder %v1628, 8.507059e+37
        %v1630 = vand.u32 %v1618, 2147483648
        %v1631 = vor.u32 1.1754944e-38, %v1630
        %v1632 = vsel %vm1629, %v1631, %v1627
        %v1633 = vmul.f32 %v1608, %v1632
        %v1634 = vmin.f32 %v1633, 1.0
        %v1635 = vmax.f32 %v1634, -1.0
        %v1636 = vmul.f32 %v473, %v473
        %v1637 = vmin.f32 16.0, %v1636
        %v1638 = vmul.f32 %v1637, 2.1237322e-06
        %v1639 = vadd.f32 %v1638, 0.00028619796
        %v1640 = vmul.f32 %v1637, %v1639
        %v1641 = vadd.f32 %v1640, 0.0036580483
        %v1642 = vmul.f32 %v1637, %v1641
        %v1643 = vadd.f32 %v1642, 0.05243302
        %v1644 = vmul.f32 %v1637, %v1643
        %v1645 = vadd.f32 %v1644, 0.18741608
        %v1646 = vmul.f32 %v1637, %v1645
        %v1647 = vadd.f32 %v1646, 1.1283791
        %v1648 = vmul.f32 %v473, %v1647
        %v1649 = vmul.f32 %v1637, 3.8918573e-05
        %v1650 = vadd.f32 %v1649, 0.001143296
        %v1651 = vmul.f32 %v1637, %v1650
        %v1652 = vadd.f32 %v1651, 0.014752088
        %v1653 = vmul.f32 %v1637, %v1652
        %v1654 = vadd.f32 %v1653, 0.112945676
        %v1655 = vmul.f32 %v1637, %v1654
        %v1656 = vadd.f32 %v1655, 0.4994258
        %v1657 = vmul.f32 %v1637, %v1656
        %v1658 = vadd.f32 %v1657, 1.0
        %v1659 = vrcp.pop %v1658
        %v1660 = vmul.f32 %v1658, %v1659
        %v1661 = vsub.f32 1.0, %v1660
        %v1662 = vmul.f32 %v1659, %v1661
        %v1663 = vadd.f32 %v1659, %v1662
        %vm1664 = vweird.f32 %v1658
        %vm1665 = vweird.f32 %v1659
        %vm1666 = vmor %vm1664, %vm1665
        %v1667 = vsel %vm1666, %v1659, %v1663
        %v1668 = vand.u32 2147483647, %v1658
        %vm1669 = vcmp.eq.f32.partialorder %v1668, 8.507059e+37
        %v1670 = vand.u32 %v1658, 2147483648
        %v1671 = vor.u32 1.1754944e-38, %v1670
        %v1672 = vsel %vm1669, %v1671, %v1667
        %v1673 = vmul.f32 %v1648, %v1672
        %v1674 = vmin.f32 %v1673, 1.0
        %v1675 = vmax.f32 %v1674, -1.0
        %v1676 = vmul.f32 %v474, %v474
        %v1677 = vmin.f32 16.0, %v1676
        %v1678 = vmul.f32 %v1677, 2.1237322e-06
        %v1679 = vadd.f32 %v1678, 0.00028619796
        %v1680 = vmul.f32 %v1677, %v1679
        %v1681 = vadd.f32 %v1680, 0.0036580483
        %v1682 = vmul.f32 %v1677, %v1681
        %v1683 = vadd.f32 %v1682, 0.05243302
        %v1684 = vmul.f32 %v1677, %v1683
        %v1685 = vadd.f32 %v1684, 0.18741608
        %v1686 = vmul.f32 %v1677, %v1685
        %v1687 = vadd.f32 %v1686, 1.1283791
        %v1688 = vmul.f32 %v474, %v1687
        %v1689 = vmul.f32 %v1677, 3.8918573e-05
        %v1690 = vadd.f32 %v1689, 0.001143296
        %v1691 = vmul.f32 %v1677, %v1690
        %v1692 = vadd.f32 %v1691, 0.014752088
        %v1693 = vmul.f32 %v1677, %v1692
        %v1694 = vadd.f32 %v1693, 0.112945676
        %v1695 = vmul.f32 %v1677, %v1694
        %v1696 = vadd.f32 %v1695, 0.4994258
        %v1697 = vmul.f32 %v1677, %v1696
        %v1698 = vadd.f32 %v1697, 1.0
        %v1699 = vrcp.pop %v1698
        %v1700 = vmul.f32 %v1698, %v1699
        %v1701 = vsub.f32 1.0, %v1700
        %v1702 = vmul.f32 %v1699, %v1701
        %v1703 = vadd.f32 %v1699, %v1702
        %vm1704 = vweird.f32 %v1698
        %vm1705 = vweird.f32 %v1699
        %vm1706 = vmor %vm1704, %vm1705
        %v1707 = vsel %vm1706, %v1699, %v1703
        %v1708 = vand.u32 2147483647, %v1698
        %vm1709 = vcmp.eq.f32.partialorder %v1708, 8.507059e+37
        %v1710 = vand.u32 %v1698, 2147483648
        %v1711 = vor.u32 1.1754944e-38, %v1710
        %v1712 = vsel %vm1709, %v1711, %v1707
        %v1713 = vmul.f32 %v1688, %v1712
        %v1714 = vmin.f32 %v1713, 1.0
        %v1715 = vmax.f32 %v1714, -1.0
        %v1716 = vmul.f32 %v475, %v475
        %v1717 = vmin.f32 16.0, %v1716
        %v1718 = vmul.f32 %v1717, 2.1237322e-06
        %v1719 = vadd.f32 %v1718, 0.00028619796
        %v1720 = vmul.f32 %v1717, %v1719
        %v1721 = vadd.f32 %v1720, 0.0036580483
        %v1722 = vmul.f32 %v1717, %v1721
        %v1723 = vadd.f32 %v1722, 0.05243302
        %v1724 = vmul.f32 %v1717, %v1723
        %v1725 = vadd.f32 %v1724, 0.18741608
        %v1726 = vmul.f32 %v1717, %v1725
        %v1727 = vadd.f32 %v1726, 1.1283791
        %v1728 = vmul.f32 %v475, %v1727
        %v1729 = vmul.f32 %v1717, 3.8918573e-05
        %v1730 = vadd.f32 %v1729, 0.001143296
        %v1731 = vmul.f32 %v1717, %v1730
        %v1732 = vadd.f32 %v1731, 0.014752088
        %v1733 = vmul.f32 %v1717, %v1732
        %v1734 = vadd.f32 %v1733, 0.112945676
        %v1735 = vmul.f32 %v1717, %v1734
        %v1736 = vadd.f32 %v1735, 0.4994258
        %v1737 = vmul.f32 %v1717, %v1736
        %v1738 = vadd.f32 %v1737, 1.0
        %v1739 = vrcp.pop %v1738
        %v1740 = vmul.f32 %v1738, %v1739
        %v1741 = vsub.f32 1.0, %v1740
        %v1742 = vmul.f32 %v1739, %v1741
        %v1743 = vadd.f32 %v1739, %v1742
        %vm1744 = vweird.f32 %v1738
        %vm1745 = vweird.f32 %v1739
        %vm1746 = vmor %vm1744, %vm1745
        %v1747 = vsel %vm1746, %v1739, %v1743
        %v1748 = vand.u32 2147483647, %v1738
        %vm1749 = vcmp.eq.f32.partialorder %v1748, 8.507059e+37
        %v1750 = vand.u32 %v1738, 2147483648
        %v1751 = vor.u32 1.1754944e-38, %v1750
        %v1752 = vsel %vm1749, %v1751, %v1747
        %v1753 = vmul.f32 %v1728, %v1752
        %v1754 = vmin.f32 %v1753, 1.0
        %v1755 = vmax.f32 %v1754, -1.0
        %v1756 = vadd.f32 %v515, 1.0
        %v1757 = vadd.f32 %v555, 1.0
        %v1758 = vadd.f32 %v595, 1.0
        %v1759 = vadd.f32 %v635, 1.0
        %v1760 = vadd.f32 %v675, 1.0
        %v1761 = vadd.f32 %v715, 1.0
        %v1762 = vadd.f32 %v755, 1.0
        %v1763 = vadd.f32 %v795, 1.0
        %v1764 = vadd.f32 %v835, 1.0
        %v1765 = vadd.f32 %v875, 1.0
        %v1766 = vadd.f32 %v915, 1.0
        %v1767 = vadd.f32 %v955, 1.0
        %v1768 = vadd.f32 %v995, 1.0
        %v1769 = vadd.f32 %v1035, 1.0
        %v1770 = vadd.f32 %v1075, 1.0
        %v1771 = vadd.f32 %v1115, 1.0
        %v1772 = vadd.f32 %v1155, 1.0
        %v1773 = vadd.f32 %v1195, 1.0
        %v1774 = vadd.f32 %v1235, 1.0
        %v1775 = vadd.f32 %v1275, 1.0
        %v1776 = vadd.f32 %v1315, 1.0
        %v1777 = vadd.f32 %v1355, 1.0
        %v1778 = vadd.f32 %v1395, 1.0
        %v1779 = vadd.f32 %v1435, 1.0
        %v1780 = vadd.f32 %v1475, 1.0
        %v1781 = vadd.f32 %v1515, 1.0
        %v1782 = vadd.f32 %v1555, 1.0
        %v1783 = vadd.f32 %v1595, 1.0
        %v1784 = vadd.f32 %v1635, 1.0
        %v1785 = vadd.f32 %v1675, 1.0
        %v1786 = vadd.f32 %v1715, 1.0
        %v1787 = vadd.f32 %v1755, 1.0
        %v1788 = vmul.f32 %v412, %v1756
        %v1789 = vmul.f32 %v413, %v1757
        %v1790 = vmul.f32 %v414, %v1758
        %v1791 = vmul.f32 %v415, %v1759
        %v1792 = vmul.f32 %v416, %v1760
        %v1793 = vmul.f32 %v417, %v1761
        %v1794 = vmul.f32 %v418, %v1762
        %v1795 = vmul.f32 %v419, %v1763
        %v1796 = vmul.f32 %v420, %v1764
        %v1797 = vmul.f32 %v421, %v1765
        %v1798 = vmul.f32 %v422, %v1766
        %v1799 = vmul.f32 %v423, %v1767
        %v1800 = vmul.f32 %v424, %v1768
        %v1801 = vmul.f32 %v425, %v1769
        %v1802 = vmul.f32 %v426, %v1770
        %v1803 = vmul.f32 %v427, %v1771
        %v1804 = vmul.f32 %v428, %v1772
        %v1805 = vmul.f32 %v429, %v1773
        %v1806 = vmul.f32 %v430, %v1774
        %v1807 = vmul.f32 %v431, %v1775
        %v1808 = vmul.f32 %v432, %v1776
        %v1809 = vmul.f32 %v433, %v1777
        %v1810 = vmul.f32 %v434, %v1778
        %v1811 = vmul.f32 %v435, %v1779
        %v1812 = vmul.f32 %v436, %v1780
        %v1813 = vmul.f32 %v437, %v1781
        %v1814 = vmul.f32 %v438, %v1782
        %v1815 = vmul.f32 %v439, %v1783
        %v1816 = vmul.f32 %v440, %v1784
        %v1817 = vmul.f32 %v441, %v1785
        %v1818 = vmul.f32 %v442, %v1786
        %v1819 = vmul.f32 %v443, %v1787
        %v1820 = vpack.c.bf16 %v1788, %v1788
        %v1821 = vpack.c.bf16 %v1789, %v1789
        %v1822 = vpack.c.bf16 %v1790, %v1790
        %v1823 = vpack.c.bf16 %v1791, %v1791
        %v1824 = vpack.c.bf16 %v1792, %v1792
        %v1825 = vpack.c.bf16 %v1793, %v1793
        %v1826 = vpack.c.bf16 %v1794, %v1794
        %v1827 = vpack.c.bf16 %v1795, %v1795
        %v1828 = vpack.c.bf16 %v1796, %v1796
        %v1829 = vpack.c.bf16 %v1797, %v1797
        %v1830 = vpack.c.bf16 %v1798, %v1798
        %v1831 = vpack.c.bf16 %v1799, %v1799
        %v1832 = vpack.c.bf16 %v1800, %v1800
        %v1833 = vpack.c.bf16 %v1801, %v1801
        %v1834 = vpack.c.bf16 %v1802, %v1802
        %v1835 = vpack.c.bf16 %v1803, %v1803
        %v1836 = vpack.c.bf16 %v1804, %v1804
        %v1837 = vpack.c.bf16 %v1805, %v1805
        %v1838 = vpack.c.bf16 %v1806, %v1806
        %v1839 = vpack.c.bf16 %v1807, %v1807
        %v1840 = vpack.c.bf16 %v1808, %v1808
        %v1841 = vpack.c.bf16 %v1809, %v1809
        %v1842 = vpack.c.bf16 %v1810, %v1810
        %v1843 = vpack.c.bf16 %v1811, %v1811
        %v1844 = vpack.c.bf16 %v1812, %v1812
        %v1845 = vpack.c.bf16 %v1813, %v1813
        %v1846 = vpack.c.bf16 %v1814, %v1814
        %v1847 = vpack.c.bf16 %v1815, %v1815
        %v1848 = vpack.c.bf16 %v1816, %v1816
        %v1849 = vpack.c.bf16 %v1817, %v1817
        %v1850 = vpack.c.bf16 %v1818, %v1818
        %v1851 = vpack.c.bf16 %v1819, %v1819
        %v1852 = vld [vmem:[%s3] sm:$0xf]
        %v1853 = vld [vmem:[%s3 + $0x4] sm:$0xf]
        %v1854 = vld [vmem:[%s3 + $0x8] sm:$0xf]
        %v1855 = vld [vmem:[%s3 + $0xc] sm:$0xf]
        %v1856 = vld [vmem:[%s4] sm:$0x1]
        %v1858 = vperm.slane %v1856, 0
        %v1892 = vunpack.c.l.b16 %v1820
        %v1893 = vunpack.c.l.b16 %v1821
        %v1894 = vunpack.c.l.b16 %v1822
        %v1895 = vunpack.c.l.b16 %v1823
        %v1896 = vunpack.c.l.b16 %v1824
        %v1897 = vunpack.c.l.b16 %v1825
        %v1898 = vunpack.c.l.b16 %v1826
        %v1899 = vunpack.c.l.b16 %v1827
        %v1900 = vunpack.c.l.b16 %v1828
        %v1901 = vunpack.c.l.b16 %v1829
        %v1902 = vunpack.c.l.b16 %v1830
        %v1903 = vunpack.c.l.b16 %v1831
        %v1904 = vunpack.c.l.b16 %v1832
        %v1905 = vunpack.c.l.b16 %v1833
        %v1906 = vunpack.c.l.b16 %v1834
        %v1907 = vunpack.c.l.b16 %v1835
        %v1908 = vunpack.c.l.b16 %v1836
        %v1909 = vunpack.c.l.b16 %v1837
        %v1910 = vunpack.c.l.b16 %v1838
        %v1911 = vunpack.c.l.b16 %v1839
        %v1912 = vunpack.c.l.b16 %v1840
        %v1913 = vunpack.c.l.b16 %v1841
        %v1914 = vunpack.c.l.b16 %v1842
        %v1915 = vunpack.c.l.b16 %v1843
        %v1916 = vunpack.c.l.b16 %v1844
        %v1917 = vunpack.c.l.b16 %v1845
        %v1918 = vunpack.c.l.b16 %v1846
        %v1919 = vunpack.c.l.b16 %v1847
        %v1920 = vunpack.c.l.b16 %v1848
        %v1921 = vunpack.c.l.b16 %v1849
        %v1922 = vunpack.c.l.b16 %v1850
        %v1923 = vunpack.c.l.b16 %v1851
        %v1924 = vpack.c.b16 %v1893, %v1892
        %v1925 = vpack.c.b16 %v1895, %v1894
        %v1926 = vpack.c.b16 %v1897, %v1896
        %v1927 = vpack.c.b16 %v1899, %v1898
        %v1928 = vpack.c.b16 %v1901, %v1900
        %v1929 = vpack.c.b16 %v1903, %v1902
        %v1930 = vpack.c.b16 %v1905, %v1904
        %v1931 = vpack.c.b16 %v1907, %v1906
        %v1932 = vpack.c.b16 %v1909, %v1908
        %v1933 = vpack.c.b16 %v1911, %v1910
        %v1934 = vpack.c.b16 %v1913, %v1912
        %v1935 = vpack.c.b16 %v1915, %v1914
        %v1936 = vpack.c.b16 %v1917, %v1916
        %v1937 = vpack.c.b16 %v1919, %v1918
        %v1938 = vpack.c.b16 %v1921, %v1920
        %v1939 = vpack.c.b16 %v1923, %v1922
        %v1944 = vunpack.c.l.b16 %v1852
        %v1945 = vunpack.c.l.b16 %v1853
        %v1946 = vunpack.c.l.b16 %v1854
        %v1947 = vunpack.c.l.b16 %v1855
        %v1948 = vpack.c.b16 %v1945, %v1944
        %v1949 = vpack.c.b16 %v1947, %v1946
        %vm1952 = vcmask 261120
        %v1954 = vsel %vm1952, %v1924, 0
        %v1957 = vsel %vm1952, %v1925, 0
        %v1960 = vsel %vm1952, %v1926, 0
        %v1963 = vsel %vm1952, %v1927, 0
        %v1966 = vsel %vm1952, %v1928, 0
        %v1969 = vsel %vm1952, %v1929, 0
        %v1972 = vsel %vm1952, %v1930, 0
        %v1975 = vsel %vm1952, %v1931, 0
        %v1978 = vsel %vm1952, %v1932, 0
        %v1981 = vsel %vm1952, %v1933, 0
        %v1984 = vsel %vm1952, %v1934, 0
        %v1987 = vsel %vm1952, %v1935, 0
        %v1990 = vsel %vm1952, %v1936, 0
        %v1993 = vsel %vm1952, %v1937, 0
        %v1996 = vsel %vm1952, %v1938, 0
        %v1999 = vsel %vm1952, %v1939, 0
        %2001 = vmatpush.bf16.msra.mxu0 0
        %2002 = vmatpush.bf16.msra.mxu0 0
        %2003 = vmatpush.bf16.msra.mxu0 0
        %2004 = vmatpush.bf16.msra.mxu0 0
        %2005 = vmatpush.bf16.msra.mxu0 0
        %2006 = vmatpush.bf16.msra.mxu0 0
        %2007 = vmatpush.bf16.msra.mxu0 %v1949
        %2008 = vmatpush.bf16.msra.mxu0 %v1948
        %2009 = vmatmul.bf16.gmra.mxu0 %v1954
        %v2010 = vpop.f32.mrf.mxu0
        %v2011 = vadd.f32 %v1858, %v2010
        %v2012 = vpop.f32.mrf.mxu0
        %v2013 = vadd.f32 %v1858, %v2012
        %2014 = vmatmul.bf16.gmra.mxu0 %v1957
        %v2015 = vpop.f32.mrf.mxu0
        %v2016 = vadd.f32 %v1858, %v2015
        %v2017 = vpop.f32.mrf.mxu0
        %v2018 = vadd.f32 %v1858, %v2017
        %2019 = vmatmul.bf16.gmra.mxu0 %v1960
        %v2020 = vpop.f32.mrf.mxu0
        %v2021 = vadd.f32 %v1858, %v2020
        %v2022 = vpop.f32.mrf.mxu0
        %v2023 = vadd.f32 %v1858, %v2022
        %2024 = vmatmul.bf16.gmra.mxu0 %v1963
        %v2025 = vpop.f32.mrf.mxu0
        %v2026 = vadd.f32 %v1858, %v2025
        %v2027 = vpop.f32.mrf.mxu0
        %v2028 = vadd.f32 %v1858, %v2027
        %2029 = vmatmul.bf16.gmra.mxu0 %v1966
        %v2030 = vpop.f32.mrf.mxu0
        %v2031 = vadd.f32 %v1858, %v2030
        %v2032 = vpop.f32.mrf.mxu0
        %v2033 = vadd.f32 %v1858, %v2032
        %2034 = vmatmul.bf16.gmra.mxu0 %v1969
        %v2035 = vpop.f32.mrf.mxu0
        %v2036 = vadd.f32 %v1858, %v2035
        %v2037 = vpop.f32.mrf.mxu0
        %v2038 = vadd.f32 %v1858, %v2037
        %2039 = vmatmul.bf16.gmra.mxu0 %v1972
        %v2040 = vpop.f32.mrf.mxu0
        %v2041 = vadd.f32 %v1858, %v2040
        %v2042 = vpop.f32.mrf.mxu0
        %v2043 = vadd.f32 %v1858, %v2042
        %2044 = vmatmul.bf16.gmra.mxu0 %v1975
        %v2045 = vpop.f32.mrf.mxu0
        %v2046 = vadd.f32 %v1858, %v2045
        %v2047 = vpop.f32.mrf.mxu0
        %v2048 = vadd.f32 %v1858, %v2047
        %2049 = vmatmul.bf16.gmra.mxu0 %v1978
        %v2050 = vpop.f32.mrf.mxu0
        %v2051 = vadd.f32 %v1858, %v2050
        %v2052 = vpop.f32.mrf.mxu0
        %v2053 = vadd.f32 %v1858, %v2052
        %2054 = vmatmul.bf16.gmra.mxu0 %v1981
        %v2055 = vpop.f32.mrf.mxu0
        %v2056 = vadd.f32 %v1858, %v2055
        %v2057 = vpop.f32.mrf.mxu0
        %v2058 = vadd.f32 %v1858, %v2057
        %2059 = vmatmul.bf16.gmra.mxu0 %v1984
        %v2060 = vpop.f32.mrf.mxu0
        %v2061 = vadd.f32 %v1858, %v2060
        %v2062 = vpop.f32.mrf.mxu0
        %v2063 = vadd.f32 %v1858, %v2062
        %2064 = vmatmul.bf16.gmra.mxu0 %v1987
        %v2065 = vpop.f32.mrf.mxu0
        %v2066 = vadd.f32 %v1858, %v2065
        %v2067 = vpop.f32.mrf.mxu0
        %v2068 = vadd.f32 %v1858, %v2067
        %2069 = vmatmul.bf16.gmra.mxu0 %v1990
        %v2070 = vpop.f32.mrf.mxu0
        %v2071 = vadd.f32 %v1858, %v2070
        %v2072 = vpop.f32.mrf.mxu0
        %v2073 = vadd.f32 %v1858, %v2072
        %2074 = vmatmul.bf16.gmra.mxu0 %v1993
        %v2075 = vpop.f32.mrf.mxu0
        %v2076 = vadd.f32 %v1858, %v2075
        %v2077 = vpop.f32.mrf.mxu0
        %v2078 = vadd.f32 %v1858, %v2077
        %2079 = vmatmul.bf16.gmra.mxu0 %v1996
        %v2080 = vpop.f32.mrf.mxu0
        %v2081 = vadd.f32 %v1858, %v2080
        %v2082 = vpop.f32.mrf.mxu0
        %v2083 = vadd.f32 %v1858, %v2082
        %2084 = vmatmul.bf16.gmra.mxu0 %v1999
        %v2085 = vpop.f32.mrf.mxu0
        %v2086 = vadd.f32 %v1858, %v2085
        %v2087 = vpop.f32.mrf.mxu0
        %v2088 = vadd.f32 %v1858, %v2087
        %2089 = vdwg.mxu0
        %v2090 = vld [vmem:[%s5] sm:$0xff]
        %v2091 = vld [vmem:[%s5 + $0x8] sm:$0xff]
        %v2092 = vld [vmem:[%s5 + $0x10] sm:$0xff]
        %v2093 = vld [vmem:[%s5 + $0x18] sm:$0xff]
        %v2094 = vld [vmem:[%s5 + $0x20] sm:$0xff]
        %v2095 = vld [vmem:[%s5 + $0x28] sm:$0xff]
        %v2096 = vld [vmem:[%s5 + $0x30] sm:$0xff]
        %v2097 = vld [vmem:[%s5 + $0x38] sm:$0xff]
        %v2098 = vld [vmem:[%s5 + $0x40] sm:$0xff]
        %v2099 = vld [vmem:[%s5 + $0x48] sm:$0xff]
        %v2100 = vld [vmem:[%s5 + $0x50] sm:$0xff]
        %v2101 = vld [vmem:[%s5 + $0x58] sm:$0xff]
        %v2102 = vld [vmem:[%s5 + $0x60] sm:$0xff]
        %v2103 = vld [vmem:[%s5 + $0x68] sm:$0xff]
        %v2104 = vld [vmem:[%s5 + $0x70] sm:$0xff]
        %v2105 = vld [vmem:[%s5 + $0x78] sm:$0xff]
        %v2106 = vld [vmem:[%s5 + $0x80] sm:$0xff]
        %v2107 = vld [vmem:[%s5 + $0x88] sm:$0xff]
        %v2108 = vld [vmem:[%s5 + $0x90] sm:$0xff]
        %v2109 = vld [vmem:[%s5 + $0x98] sm:$0xff]
        %v2110 = vld [vmem:[%s5 + $0xa0] sm:$0xff]
        %v2111 = vld [vmem:[%s5 + $0xa8] sm:$0xff]
        %v2112 = vld [vmem:[%s5 + $0xb0] sm:$0xff]
        %v2113 = vld [vmem:[%s5 + $0xb8] sm:$0xff]
        %v2114 = vld [vmem:[%s5 + $0xc0] sm:$0xff]
        %v2115 = vld [vmem:[%s5 + $0xc8] sm:$0xff]
        %v2116 = vld [vmem:[%s5 + $0xd0] sm:$0xff]
        %v2117 = vld [vmem:[%s5 + $0xd8] sm:$0xff]
        %v2118 = vld [vmem:[%s5 + $0xe0] sm:$0xff]
        %v2119 = vld [vmem:[%s5 + $0xe8] sm:$0xff]
        %v2120 = vld [vmem:[%s5 + $0xf0] sm:$0xff]
        %v2121 = vld [vmem:[%s5 + $0xf8] sm:$0xff]
        %v2122 = vld [vmem:[%s5 + $0x100] sm:$0xff]
        %v2123 = vld [vmem:[%s5 + $0x108] sm:$0xff]
        %v2124 = vld [vmem:[%s5 + $0x110] sm:$0xff]
        %v2125 = vld [vmem:[%s5 + $0x118] sm:$0xff]
        %v2126 = vld [vmem:[%s5 + $0x120] sm:$0xff]
        %v2127 = vld [vmem:[%s5 + $0x128] sm:$0xff]
        %v2128 = vld [vmem:[%s5 + $0x130] sm:$0xff]
        %v2129 = vld [vmem:[%s5 + $0x138] sm:$0xff]
        %v2130 = vld [vmem:[%s5 + $0x140] sm:$0xff]
        %v2131 = vld [vmem:[%s5 + $0x148] sm:$0xff]
        %v2132 = vld [vmem:[%s5 + $0x150] sm:$0xff]
        %v2133 = vld [vmem:[%s5 + $0x158] sm:$0xff]
        %v2134 = vld [vmem:[%s5 + $0x160] sm:$0xff]
        %v2135 = vld [vmem:[%s5 + $0x168] sm:$0xff]
        %v2136 = vld [vmem:[%s5 + $0x170] sm:$0xff]
        %v2137 = vld [vmem:[%s5 + $0x178] sm:$0xff]
        %v2138 = vld [vmem:[%s5 + $0x180] sm:$0xff]
        %v2139 = vld [vmem:[%s5 + $0x188] sm:$0xff]
        %v2140 = vld [vmem:[%s5 + $0x190] sm:$0xff]
        %v2141 = vld [vmem:[%s5 + $0x198] sm:$0xff]
        %v2142 = vld [vmem:[%s5 + $0x1a0] sm:$0xff]
        %v2143 = vld [vmem:[%s5 + $0x1a8] sm:$0xff]
        %v2144 = vld [vmem:[%s5 + $0x1b0] sm:$0xff]
        %v2145 = vld [vmem:[%s5 + $0x1b8] sm:$0xff]
        %v2146 = vld [vmem:[%s5 + $0x1c0] sm:$0xff]
        %v2147 = vld [vmem:[%s5 + $0x1c8] sm:$0xff]
        %v2148 = vld [vmem:[%s5 + $0x1d0] sm:$0xff]
        %v2149 = vld [vmem:[%s5 + $0x1d8] sm:$0xff]
        %v2150 = vld [vmem:[%s5 + $0x1e0] sm:$0xff]
        %v2151 = vld [vmem:[%s5 + $0x1e8] sm:$0xff]
        %v2152 = vld [vmem:[%s5 + $0x1f0] sm:$0xff]
        %v2153 = vld [vmem:[%s5 + $0x1f8] sm:$0xff]
        %v2154 = vpack.c.bf16 %v2013, %v2011
        %v2155 = vpack.c.bf16 %v2018, %v2016
        %v2156 = vpack.c.bf16 %v2023, %v2021
        %v2157 = vpack.c.bf16 %v2028, %v2026
        %v2158 = vpack.c.bf16 %v2033, %v2031
        %v2159 = vpack.c.bf16 %v2038, %v2036
        %v2160 = vpack.c.bf16 %v2043, %v2041
        %v2161 = vpack.c.bf16 %v2048, %v2046
        %v2162 = vpack.c.bf16 %v2053, %v2051
        %v2163 = vpack.c.bf16 %v2058, %v2056
        %v2164 = vpack.c.bf16 %v2063, %v2061
        %v2165 = vpack.c.bf16 %v2068, %v2066
        %v2166 = vpack.c.bf16 %v2073, %v2071
        %v2167 = vpack.c.bf16 %v2078, %v2076
        %v2168 = vpack.c.bf16 %v2083, %v2081
        %v2169 = vpack.c.bf16 %v2088, %v2086
        %2186 = vrot.lane.b32.xlu0 %v2154, 96
        %v2187 = vpop.permute.xlu0 %2186
        %2188 = vrot.lane.b32.xlu0 %v2155, 96
        %v2189 = vpop.permute.xlu0 %2188
        %2190 = vrot.lane.b32.xlu0 %v2156, 96
        %v2191 = vpop.permute.xlu0 %2190
        %2192 = vrot.lane.b32.xlu0 %v2157, 96
        %v2193 = vpop.permute.xlu0 %2192
        %2194 = vrot.lane.b32.xlu0 %v2158, 96
        %v2195 = vpop.permute.xlu0 %2194
        %2196 = vrot.lane.b32.xlu0 %v2159, 96
        %v2197 = vpop.permute.xlu0 %2196
        %2198 = vrot.lane.b32.xlu0 %v2160, 96
        %v2199 = vpop.permute.xlu0 %2198
        %2200 = vrot.lane.b32.xlu0 %v2161, 96
        %v2201 = vpop.permute.xlu0 %2200
        %2202 = vrot.lane.b32.xlu0 %v2162, 96
        %v2203 = vpop.permute.xlu0 %2202
        %2204 = vrot.lane.b32.xlu0 %v2163, 96
        %v2205 = vpop.permute.xlu0 %2204
        %2206 = vrot.lane.b32.xlu0 %v2164, 96
        %v2207 = vpop.permute.xlu0 %2206
        %2208 = vrot.lane.b32.xlu0 %v2165, 96
        %v2209 = vpop.permute.xlu0 %2208
        %2210 = vrot.lane.b32.xlu0 %v2166, 96
        %v2211 = vpop.permute.xlu0 %2210
        %2212 = vrot.lane.b32.xlu0 %v2167, 96
        %v2213 = vpop.permute.xlu0 %2212
        %2214 = vrot.lane.b32.xlu0 %v2168, 96
        %v2215 = vpop.permute.xlu0 %2214
        %2216 = vrot.lane.b32.xlu0 %v2169, 96
        %v2217 = vpop.permute.xlu0 %2216
        %vm2218 = vcmask 130048
        %v2220 = vsel %vm2218, %v2154, 0
        %v2223 = vsel %vm2218, %v2155, 0
        %v2226 = vsel %vm2218, %v2156, 0
        %v2229 = vsel %vm2218, %v2157, 0
        %v2232 = vsel %vm2218, %v2158, 0
        %v2235 = vsel %vm2218, %v2159, 0
        %v2238 = vsel %vm2218, %v2160, 0
        %v2241 = vsel %vm2218, %v2161, 0
        %v2244 = vsel %vm2218, %v2162, 0
        %v2247 = vsel %vm2218, %v2163, 0
        %v2250 = vsel %vm2218, %v2164, 0
        %v2253 = vsel %vm2218, %v2165, 0
        %v2256 = vsel %vm2218, %v2166, 0
        %v2259 = vsel %vm2218, %v2167, 0
        %v2262 = vsel %vm2218, %v2168, 0
        %v2265 = vsel %vm2218, %v2169, 0
        %v2268 = vsel %vm2218, %v2187, 0
        %v2271 = vsel %vm2218, %v2189, 0
        %v2274 = vsel %vm2218, %v2191, 0
        %v2277 = vsel %vm2218, %v2193, 0
        %v2280 = vsel %vm2218, %v2195, 0
        %v2283 = vsel %vm2218, %v2197, 0
        %v2286 = vsel %vm2218, %v2199, 0
        %v2289 = vsel %vm2218, %v2201, 0
        %v2292 = vsel %vm2218, %v2203, 0
        %v2295 = vsel %vm2218, %v2205, 0
        %v2298 = vsel %vm2218, %v2207, 0
        %v2301 = vsel %vm2218, %v2209, 0
        %v2304 = vsel %vm2218, %v2211, 0
        %v2307 = vsel %vm2218, %v2213, 0
        %v2310 = vsel %vm2218, %v2215, 0
        %v2313 = vsel %vm2218, %v2217, 0
        %2315 = vmatpush.bf16.xpose.msra.mxu0 %v2289
        %2316 = vmatpush.bf16.xpose.msra.mxu0 %v2286
        %2317 = vmatpush.bf16.xpose.msra.mxu0 %v2283
        %2318 = vmatpush.bf16.xpose.msra.mxu0 %v2280
        %2319 = vmatpush.bf16.xpose.msra.mxu0 %v2277
        %2320 = vmatpush.bf16.xpose.msra.mxu0 %v2274
        %2321 = vmatpush.bf16.xpose.msra.mxu0 %v2271
        %2322 = vmatpush.bf16.xpose.msra.mxu0 %v2268
        %2323 = vmatmul.bf16.gmra.mxu0 %v2220
        %v2324 = vpop.f32.mrf.mxu0
        %v2325 = vadd.f32 %v2090, %v2324
        %v2326 = vpop.f32.mrf.mxu0
        %v2327 = vadd.f32 %v2092, %v2326
        %2328 = vmatmul.bf16.gmra.mxu0 %v2223
        %v2329 = vpop.f32.mrf.mxu0
        %v2330 = vadd.f32 %v2094, %v2329
        %v2331 = vpop.f32.mrf.mxu0
        %v2332 = vadd.f32 %v2096, %v2331
        %2333 = vmatmul.bf16.gmra.mxu0 %v2226
        %v2334 = vpop.f32.mrf.mxu0
        %v2335 = vadd.f32 %v2098, %v2334
        %v2336 = vpop.f32.mrf.mxu0
        %v2337 = vadd.f32 %v2100, %v2336
        %2338 = vmatmul.bf16.gmra.mxu0 %v2229
        %v2339 = vpop.f32.mrf.mxu0
        %v2340 = vadd.f32 %v2102, %v2339
        %v2341 = vpop.f32.mrf.mxu0
        %v2342 = vadd.f32 %v2104, %v2341
        %2343 = vmatmul.bf16.gmra.mxu0 %v2232
        %v2344 = vpop.f32.mrf.mxu0
        %v2345 = vadd.f32 %v2106, %v2344
        %v2346 = vpop.f32.mrf.mxu0
        %v2347 = vadd.f32 %v2108, %v2346
        %2348 = vmatmul.bf16.gmra.mxu0 %v2235
        %v2349 = vpop.f32.mrf.mxu0
        %v2350 = vadd.f32 %v2110, %v2349
        %v2351 = vpop.f32.mrf.mxu0
        %v2352 = vadd.f32 %v2112, %v2351
        %2353 = vmatmul.bf16.gmra.mxu0 %v2238
        %v2354 = vpop.f32.mrf.mxu0
        %v2355 = vadd.f32 %v2114, %v2354
        %v2356 = vpop.f32.mrf.mxu0
        %v2357 = vadd.f32 %v2116, %v2356
        %2358 = vmatmul.bf16.gmra.mxu0 %v2241
        %v2359 = vpop.f32.mrf.mxu0
        %v2360 = vadd.f32 %v2118, %v2359
        %v2361 = vpop.f32.mrf.mxu0
        %v2362 = vadd.f32 %v2120, %v2361
        %2363 = vmatmul.bf16.gmra.mxu0 %v2244
        %v2364 = vpop.f32.mrf.mxu0
        %v2365 = vadd.f32 %v2122, %v2364
        %v2366 = vpop.f32.mrf.mxu0
        %v2367 = vadd.f32 %v2124, %v2366
        %2368 = vmatmul.bf16.gmra.mxu0 %v2247
        %v2369 = vpop.f32.mrf.mxu0
        %v2370 = vadd.f32 %v2126, %v2369
        %v2371 = vpop.f32.mrf.mxu0
        %v2372 = vadd.f32 %v2128, %v2371
        %2373 = vmatmul.bf16.gmra.mxu0 %v2250
        %v2374 = vpop.f32.mrf.mxu0
        %v2375 = vadd.f32 %v2130, %v2374
        %v2376 = vpop.f32.mrf.mxu0
        %v2377 = vadd.f32 %v2132, %v2376
        %2378 = vmatmul.bf16.gmra.mxu0 %v2253
        %v2379 = vpop.f32.mrf.mxu0
        %v2380 = vadd.f32 %v2134, %v2379
        %v2381 = vpop.f32.mrf.mxu0
        %v2382 = vadd.f32 %v2136, %v2381
        %2383 = vmatmul.bf16.gmra.mxu0 %v2256
        %v2384 = vpop.f32.mrf.mxu0
        %v2385 = vadd.f32 %v2138, %v2384
        %v2386 = vpop.f32.mrf.mxu0
        %v2387 = vadd.f32 %v2140, %v2386
        %2388 = vmatmul.bf16.gmra.mxu0 %v2259
        %v2389 = vpop.f32.mrf.mxu0
        %v2390 = vadd.f32 %v2142, %v2389
        %v2391 = vpop.f32.mrf.mxu0
        %v2392 = vadd.f32 %v2144, %v2391
        %2393 = vmatmul.bf16.gmra.mxu0 %v2262
        %v2394 = vpop.f32.mrf.mxu0
        %v2395 = vadd.f32 %v2146, %v2394
        %v2396 = vpop.f32.mrf.mxu0
        %v2397 = vadd.f32 %v2148, %v2396
        %2398 = vmatmul.bf16.gmra.mxu0 %v2265
        %v2399 = vpop.f32.mrf.mxu0
        %v2400 = vadd.f32 %v2150, %v2399
        %v2401 = vpop.f32.mrf.mxu0
        %v2402 = vadd.f32 %v2152, %v2401
        %2403 = vdwg.mxu0
        %2404 = vmatpush.bf16.xpose.msra.mxu0 %v2313
        %2405 = vmatpush.bf16.xpose.msra.mxu0 %v2310
        %2406 = vmatpush.bf16.xpose.msra.mxu0 %v2307
        %2407 = vmatpush.bf16.xpose.msra.mxu0 %v2304
        %2408 = vmatpush.bf16.xpose.msra.mxu0 %v2301
        %2409 = vmatpush.bf16.xpose.msra.mxu0 %v2298
        %2410 = vmatpush.bf16.xpose.msra.mxu0 %v2295
        %2411 = vmatpush.bf16.xpose.msra.mxu0 %v2292
        %2412 = vmatmul.bf16.gmra.mxu0 %v2220
        %v2413 = vpop.f32.mrf.mxu0
        %v2414 = vadd.f32 %v2091, %v2413
        %v2415 = vpop.f32.mrf.mxu0
        %v2416 = vadd.f32 %v2093, %v2415
        %2417 = vmatmul.bf16.gmra.mxu0 %v2223
        %v2418 = vpop.f32.mrf.mxu0
        %v2419 = vadd.f32 %v2095, %v2418
        %v2420 = vpop.f32.mrf.mxu0
        %v2421 = vadd.f32 %v2097, %v2420
        %2422 = vmatmul.bf16.gmra.mxu0 %v2226
        %v2423 = vpop.f32.mrf.mxu0
        %v2424 = vadd.f32 %v2099, %v2423
        %v2425 = vpop.f32.mrf.mxu0
        %v2426 = vadd.f32 %v2101, %v2425
        %2427 = vmatmul.bf16.gmra.mxu0 %v2229
        %v2428 = vpop.f32.mrf.mxu0
        %v2429 = vadd.f32 %v2103, %v2428
        %v2430 = vpop.f32.mrf.mxu0
        %v2431 = vadd.f32 %v2105, %v2430
        %2432 = vmatmul.bf16.gmra.mxu0 %v2232
        %v2433 = vpop.f32.mrf.mxu0
        %v2434 = vadd.f32 %v2107, %v2433
        %v2435 = vpop.f32.mrf.mxu0
        %v2436 = vadd.f32 %v2109, %v2435
        %2437 = vmatmul.bf16.gmra.mxu0 %v2235
        %v2438 = vpop.f32.mrf.mxu0
        %v2439 = vadd.f32 %v2111, %v2438
        %v2440 = vpop.f32.mrf.mxu0
        %v2441 = vadd.f32 %v2113, %v2440
        %2442 = vmatmul.bf16.gmra.mxu0 %v2238
        %v2443 = vpop.f32.mrf.mxu0
        %v2444 = vadd.f32 %v2115, %v2443
        %v2445 = vpop.f32.mrf.mxu0
        %v2446 = vadd.f32 %v2117, %v2445
        %2447 = vmatmul.bf16.gmra.mxu0 %v2241
        %v2448 = vpop.f32.mrf.mxu0
        %v2449 = vadd.f32 %v2119, %v2448
        %v2450 = vpop.f32.mrf.mxu0
        %v2451 = vadd.f32 %v2121, %v2450
        %2452 = vmatmul.bf16.gmra.mxu0 %v2244
        %v2453 = vpop.f32.mrf.mxu0
        %v2454 = vadd.f32 %v2123, %v2453
        %v2455 = vpop.f32.mrf.mxu0
        %v2456 = vadd.f32 %v2125, %v2455
        %2457 = vmatmul.bf16.gmra.mxu0 %v2247
        %v2458 = vpop.f32.mrf.mxu0
        %v2459 = vadd.f32 %v2127, %v2458
        %v2460 = vpop.f32.mrf.mxu0
        %v2461 = vadd.f32 %v2129, %v2460
        %2462 = vmatmul.bf16.gmra.mxu0 %v2250
        %v2463 = vpop.f32.mrf.mxu0
        %v2464 = vadd.f32 %v2131, %v2463
        %v2465 = vpop.f32.mrf.mxu0
        %v2466 = vadd.f32 %v2133, %v2465
        %2467 = vmatmul.bf16.gmra.mxu0 %v2253
        %v2468 = vpop.f32.mrf.mxu0
        %v2469 = vadd.f32 %v2135, %v2468
        %v2470 = vpop.f32.mrf.mxu0
        %v2471 = vadd.f32 %v2137, %v2470
        %2472 = vmatmul.bf16.gmra.mxu0 %v2256
        %v2473 = vpop.f32.mrf.mxu0
        %v2474 = vadd.f32 %v2139, %v2473
        %v2475 = vpop.f32.mrf.mxu0
        %v2476 = vadd.f32 %v2141, %v2475
        %2477 = vmatmul.bf16.gmra.mxu0 %v2259
        %v2478 = vpop.f32.mrf.mxu0
        %v2479 = vadd.f32 %v2143, %v2478
        %v2480 = vpop.f32.mrf.mxu0
        %v2481 = vadd.f32 %v2145, %v2480
        %2482 = vmatmul.bf16.gmra.mxu0 %v2262
        %v2483 = vpop.f32.mrf.mxu0
        %v2484 = vadd.f32 %v2147, %v2483
        %v2485 = vpop.f32.mrf.mxu0
        %v2486 = vadd.f32 %v2149, %v2485
        %2487 = vmatmul.bf16.gmra.mxu0 %v2265
        %v2488 = vpop.f32.mrf.mxu0
        %v2489 = vadd.f32 %v2151, %v2488
        %v2490 = vpop.f32.mrf.mxu0
        %v2491 = vadd.f32 %v2153, %v2490
        %2492 = vdwg.mxu0
        %v2493 = vmax.f32 %v2325, %v2414
        %2494 = vmax.xlane.f32.xlu0 %v2493
        %v2495 = vpop.xlane.xlu0 %2494
        %v2496 = vmax.f32 %v2327, %v2416
        %2497 = vmax.xlane.f32.xlu0 %v2496
        %v2498 = vpop.xlane.xlu0 %2497
        %v2499 = vmax.f32 %v2330, %v2419
        %2500 = vmax.xlane.f32.xlu0 %v2499
        %v2501 = vpop.xlane.xlu0 %2500
        %v2502 = vmax.f32 %v2332, %v2421
        %2503 = vmax.xlane.f32.xlu0 %v2502
        %v2504 = vpop.xlane.xlu0 %2503
        %v2505 = vmax.f32 %v2335, %v2424
        %2506 = vmax.xlane.f32.xlu0 %v2505
        %v2507 = vpop.xlane.xlu0 %2506
        %v2508 = vmax.f32 %v2337, %v2426
        %2509 = vmax.xlane.f32.xlu0 %v2508
        %v2510 = vpop.xlane.xlu0 %2509
        %v2511 = vmax.f32 %v2340, %v2429
        %2512 = vmax.xlane.f32.xlu0 %v2511
        %v2513 = vpop.xlane.xlu0 %2512
        %v2514 = vmax.f32 %v2342, %v2431
        %2515 = vmax.xlane.f32.xlu0 %v2514
        %v2516 = vpop.xlane.xlu0 %2515
        %v2517 = vmax.f32 %v2345, %v2434
        %2518 = vmax.xlane.f32.xlu0 %v2517
        %v2519 = vpop.xlane.xlu0 %2518
        %v2520 = vmax.f32 %v2347, %v2436
        %2521 = vmax.xlane.f32.xlu0 %v2520
        %v2522 = vpop.xlane.xlu0 %2521
        %v2523 = vmax.f32 %v2350, %v2439
        %2524 = vmax.xlane.f32.xlu0 %v2523
        %v2525 = vpop.xlane.xlu0 %2524
        %v2526 = vmax.f32 %v2352, %v2441
        %2527 = vmax.xlane.f32.xlu0 %v2526
        %v2528 = vpop.xlane.xlu0 %2527
        %v2529 = vmax.f32 %v2355, %v2444
        %2530 = vmax.xlane.f32.xlu0 %v2529
        %v2531 = vpop.xlane.xlu0 %2530
        %v2532 = vmax.f32 %v2357, %v2446
        %2533 = vmax.xlane.f32.xlu0 %v2532
        %v2534 = vpop.xlane.xlu0 %2533
        %v2535 = vmax.f32 %v2360, %v2449
        %2536 = vmax.xlane.f32.xlu0 %v2535
        %v2537 = vpop.xlane.xlu0 %2536
        %v2538 = vmax.f32 %v2362, %v2451
        %2539 = vmax.xlane.f32.xlu0 %v2538
        %v2540 = vpop.xlane.xlu0 %2539
        %v2541 = vmax.f32 %v2365, %v2454
        %2542 = vmax.xlane.f32.xlu0 %v2541
        %v2543 = vpop.xlane.xlu0 %2542
        %v2544 = vmax.f32 %v2367, %v2456
        %2545 = vmax.xlane.f32.xlu0 %v2544
        %v2546 = vpop.xlane.xlu0 %2545
        %v2547 = vmax.f32 %v2370, %v2459
        %2548 = vmax.xlane.f32.xlu0 %v2547
        %v2549 = vpop.xlane.xlu0 %2548
        %v2550 = vmax.f32 %v2372, %v2461
        %2551 = vmax.xlane.f32.xlu0 %v2550
        %v2552 = vpop.xlane.xlu0 %2551
        %v2553 = vmax.f32 %v2375, %v2464
        %2554 = vmax.xlane.f32.xlu0 %v2553
        %v2555 = vpop.xlane.xlu0 %2554
        %v2556 = vmax.f32 %v2377, %v2466
        %2557 = vmax.xlane.f32.xlu0 %v2556
        %v2558 = vpop.xlane.xlu0 %2557
        %v2559 = vmax.f32 %v2380, %v2469
        %2560 = vmax.xlane.f32.xlu0 %v2559
        %v2561 = vpop.xlane.xlu0 %2560
        %v2562 = vmax.f32 %v2382, %v2471
        %2563 = vmax.xlane.f32.xlu0 %v2562
        %v2564 = vpop.xlane.xlu0 %2563
        %v2565 = vmax.f32 %v2385, %v2474
        %2566 = vmax.xlane.f32.xlu0 %v2565
        %v2567 = vpop.xlane.xlu0 %2566
        %v2568 = vmax.f32 %v2387, %v2476
        %2569 = vmax.xlane.f32.xlu0 %v2568
        %v2570 = vpop.xlane.xlu0 %2569
        %v2571 = vmax.f32 %v2390, %v2479
        %2572 = vmax.xlane.f32.xlu0 %v2571
        %v2573 = vpop.xlane.xlu0 %2572
        %v2574 = vmax.f32 %v2392, %v2481
        %2575 = vmax.xlane.f32.xlu0 %v2574
        %v2576 = vpop.xlane.xlu0 %2575
        %v2577 = vmax.f32 %v2395, %v2484
        %2578 = vmax.xlane.f32.xlu0 %v2577
        %v2579 = vpop.xlane.xlu0 %2578
        %v2580 = vmax.f32 %v2397, %v2486
        %2581 = vmax.xlane.f32.xlu0 %v2580
        %v2582 = vpop.xlane.xlu0 %2581
        %v2583 = vmax.f32 %v2400, %v2489
        %2584 = vmax.xlane.f32.xlu0 %v2583
        %v2585 = vpop.xlane.xlu0 %2584
        %v2586 = vmax.f32 %v2402, %v2491
        %2587 = vmax.xlane.f32.xlu0 %v2586
        %v2588 = vpop.xlane.xlu0 %2587
        %v2589 = vsub.f32 %v2325, %v2495
        %v2590 = vsub.f32 %v2414, %v2495
        %v2591 = vsub.f32 %v2327, %v2498
        %v2592 = vsub.f32 %v2416, %v2498
        %v2593 = vsub.f32 %v2330, %v2501
        %v2594 = vsub.f32 %v2419, %v2501
        %v2595 = vsub.f32 %v2332, %v2504
        %v2596 = vsub.f32 %v2421, %v2504
        %v2597 = vsub.f32 %v2335, %v2507
        %v2598 = vsub.f32 %v2424, %v2507
        %v2599 = vsub.f32 %v2337, %v2510
        %v2600 = vsub.f32 %v2426, %v2510
        %v2601 = vsub.f32 %v2340, %v2513
        %v2602 = vsub.f32 %v2429, %v2513
        %v2603 = vsub.f32 %v2342, %v2516
        %v2604 = vsub.f32 %v2431, %v2516
        %v2605 = vsub.f32 %v2345, %v2519
        %v2606 = vsub.f32 %v2434, %v2519
        %v2607 = vsub.f32 %v2347, %v2522
        %v2608 = vsub.f32 %v2436, %v2522
        %v2609 = vsub.f32 %v2350, %v2525
        %v2610 = vsub.f32 %v2439, %v2525
        %v2611 = vsub.f32 %v2352, %v2528
        %v2612 = vsub.f32 %v2441, %v2528
        %v2613 = vsub.f32 %v2355, %v2531
        %v2614 = vsub.f32 %v2444, %v2531
        %v2615 = vsub.f32 %v2357, %v2534
        %v2616 = vsub.f32 %v2446, %v2534
        %v2617 = vsub.f32 %v2360, %v2537
        %v2618 = vsub.f32 %v2449, %v2537
        %v2619 = vsub.f32 %v2362, %v2540
        %v2620 = vsub.f32 %v2451, %v2540
        %v2621 = vsub.f32 %v2365, %v2543
        %v2622 = vsub.f32 %v2454, %v2543
        %v2623 = vsub.f32 %v2367, %v2546
        %v2624 = vsub.f32 %v2456, %v2546
        %v2625 = vsub.f32 %v2370, %v2549
        %v2626 = vsub.f32 %v2459, %v2549
        %v2627 = vsub.f32 %v2372, %v2552
        %v2628 = vsub.f32 %v2461, %v2552
        %v2629 = vsub.f32 %v2375, %v2555
        %v2630 = vsub.f32 %v2464, %v2555
        %v2631 = vsub.f32 %v2377, %v2558
        %v2632 = vsub.f32 %v2466, %v2558
        %v2633 = vsub.f32 %v2380, %v2561
        %v2634 = vsub.f32 %v2469, %v2561
        %v2635 = vsub.f32 %v2382, %v2564
        %v2636 = vsub.f32 %v2471, %v2564
        %v2637 = vsub.f32 %v2385, %v2567
        %v2638 = vsub.f32 %v2474, %v2567
        %v2639 = vsub.f32 %v2387, %v2570
        %v2640 = vsub.f32 %v2476, %v2570
        %v2641 = vsub.f32 %v2390, %v2573
        %v2642 = vsub.f32 %v2479, %v2573
        %v2643 = vsub.f32 %v2392, %v2576
        %v2644 = vsub.f32 %v2481, %v2576
        %v2645 = vsub.f32 %v2395, %v2579
        %v2646 = vsub.f32 %v2484, %v2579
        %v2647 = vsub.f32 %v2397, %v2582
        %v2648 = vsub.f32 %v2486, %v2582
        %v2649 = vsub.f32 %v2400, %v2585
        %v2650 = vsub.f32 %v2489, %v2585
        %v2651 = vsub.f32 %v2402, %v2588
        %v2652 = vsub.f32 %v2491, %v2588
        %v2653 = vmul.f32 %v2589, 1.442695
        %v2654 = vpow.pop %v2653
        %v2655 = vmul.f32 %v2590, 1.442695
        %v2656 = vpow.pop %v2655
        %v2657 = vmul.f32 %v2591, 1.442695
        %v2658 = vpow.pop %v2657
        %v2659 = vmul.f32 %v2592, 1.442695
        %v2660 = vpow.pop %v2659
        %v2661 = vmul.f32 %v2593, 1.442695
        %v2662 = vpow.pop %v2661
        %v2663 = vmul.f32 %v2594, 1.442695
        %v2664 = vpow.pop %v2663
        %v2665 = vmul.f32 %v2595, 1.442695
        %v2666 = vpow.pop %v2665
        %v2667 = vmul.f32 %v2596, 1.442695
        %v2668 = vpow.pop %v2667
        %v2669 = vmul.f32 %v2597, 1.442695
        %v2670 = vpow.pop %v2669
        %v2671 = vmul.f32 %v2598, 1.442695
        %v2672 = vpow.pop %v2671
        %v2673 = vmul.f32 %v2599, 1.442695
        %v2674 = vpow.pop %v2673
        %v2675 = vmul.f32 %v2600, 1.442695
        %v2676 = vpow.pop %v2675
        %v2677 = vmul.f32 %v2601, 1.442695
        %v2678 = vpow.pop %v2677
        %v2679 = vmul.f32 %v2602, 1.442695
        %v2680 = vpow.pop %v2679
        %v2681 = vmul.f32 %v2603, 1.442695
        %v2682 = vpow.pop %v2681
        %v2683 = vmul.f32 %v2604, 1.442695
        %v2684 = vpow.pop %v2683
        %v2685 = vmul.f32 %v2605, 1.442695
        %v2686 = vpow.pop %v2685
        %v2687 = vmul.f32 %v2606, 1.442695
        %v2688 = vpow.pop %v2687
        %v2689 = vmul.f32 %v2607, 1.442695
        %v2690 = vpow.pop %v2689
        %v2691 = vmul.f32 %v2608, 1.442695
        %v2692 = vpow.pop %v2691
        %v2693 = vmul.f32 %v2609, 1.442695
        %v2694 = vpow.pop %v2693
        %v2695 = vmul.f32 %v2610, 1.442695
        %v2696 = vpow.pop %v2695
        %v2697 = vmul.f32 %v2611, 1.442695
        %v2698 = vpow.pop %v2697
        %v2699 = vmul.f32 %v2612, 1.442695
        %v2700 = vpow.pop %v2699
        %v2701 = vmul.f32 %v2613, 1.442695
        %v2702 = vpow.pop %v2701
        %v2703 = vmul.f32 %v2614, 1.442695
        %v2704 = vpow.pop %v2703
        %v2705 = vmul.f32 %v2615, 1.442695
        %v2706 = vpow.pop %v2705
        %v2707 = vmul.f32 %v2616, 1.442695
        %v2708 = vpow.pop %v2707
        %v2709 = vmul.f32 %v2617, 1.442695
        %v2710 = vpow.pop %v2709
        %v2711 = vmul.f32 %v2618, 1.442695
        %v2712 = vpow.pop %v2711
        %v2713 = vmul.f32 %v2619, 1.442695
        %v2714 = vpow.pop %v2713
        %v2715 = vmul.f32 %v2620, 1.442695
        %v2716 = vpow.pop %v2715
        %v2717 = vmul.f32 %v2621, 1.442695
        %v2718 = vpow.pop %v2717
        %v2719 = vmul.f32 %v2622, 1.442695
        %v2720 = vpow.pop %v2719
        %v2721 = vmul.f32 %v2623, 1.442695
        %v2722 = vpow.pop %v2721
        %v2723 = vmul.f32 %v2624, 1.442695
        %v2724 = vpow.pop %v2723
        %v2725 = vmul.f32 %v2625, 1.442695
        %v2726 = vpow.pop %v2725
        %v2727 = vmul.f32 %v2626, 1.442695
        %v2728 = vpow.pop %v2727
        %v2729 = vmul.f32 %v2627, 1.442695
        %v2730 = vpow.pop %v2729
        %v2731 = vmul.f32 %v2628, 1.442695
        %v2732 = vpow.pop %v2731
        %v2733 = vmul.f32 %v2629, 1.442695
        %v2734 = vpow.pop %v2733
        %v2735 = vmul.f32 %v2630, 1.442695
        %v2736 = vpow.pop %v2735
        %v2737 = vmul.f32 %v2631, 1.442695
        %v2738 = vpow.pop %v2737
        %v2739 = vmul.f32 %v2632, 1.442695
        %v2740 = vpow.pop %v2739
        %v2741 = vmul.f32 %v2633, 1.442695
        %v2742 = vpow.pop %v2741
        %v2743 = vmul.f32 %v2634, 1.442695
        %v2744 = vpow.pop %v2743
        %v2745 = vmul.f32 %v2635, 1.442695
        %v2746 = vpow.pop %v2745
        %v2747 = vmul.f32 %v2636, 1.442695
        %v2748 = vpow.pop %v2747
        %v2749 = vmul.f32 %v2637, 1.442695
        %v2750 = vpow.pop %v2749
        %v2751 = vmul.f32 %v2638, 1.442695
        %v2752 = vpow.pop %v2751
        %v2753 = vmul.f32 %v2639, 1.442695
        %v2754 = vpow.pop %v2753
        %v2755 = vmul.f32 %v2640, 1.442695
        %v2756 = vpow.pop %v2755
        %v2757 = vmul.f32 %v2641, 1.442695
        %v2758 = vpow.pop %v2757
        %v2759 = vmul.f32 %v2642, 1.442695
        %v2760 = vpow.pop %v2759
        %v2761 = vmul.f32 %v2643, 1.442695
        %v2762 = vpow.pop %v2761
        %v2763 = vmul.f32 %v2644, 1.442695
        %v2764 = vpow.pop %v2763
        %v2765 = vmul.f32 %v2645, 1.442695
        %v2766 = vpow.pop %v2765
        %v2767 = vmul.f32 %v2646, 1.442695
        %v2768 = vpow.pop %v2767
        %v2769 = vmul.f32 %v2647, 1.442695
        %v2770 = vpow.pop %v2769
        %v2771 = vmul.f32 %v2648, 1.442695
        %v2772 = vpow.pop %v2771
        %v2773 = vmul.f32 %v2649, 1.442695
        %v2774 = vpow.pop %v2773
        %v2775 = vmul.f32 %v2650, 1.442695
        %v2776 = vpow.pop %v2775
        %v2777 = vmul.f32 %v2651, 1.442695
        %v2778 = vpow.pop %v2777
        %v2779 = vmul.f32 %v2652, 1.442695
        %v2780 = vpow.pop %v2779
        %v2781 = vadd.f32 %v2654, %v2656
        %2782 = vadd.xlane.f32.xlu0 %v2781
        %v2783 = vpop.xlane.xlu0 %2782
        %v2784 = vadd.f32 %v2658, %v2660
        %2785 = vadd.xlane.f32.xlu0 %v2784
        %v2786 = vpop.xlane.xlu0 %2785
        %v2787 = vadd.f32 %v2662, %v2664
        %2788 = vadd.xlane.f32.xlu0 %v2787
        %v2789 = vpop.xlane.xlu0 %2788
        %v2790 = vadd.f32 %v2666, %v2668
        %2791 = vadd.xlane.f32.xlu0 %v2790
        %v2792 = vpop.xlane.xlu0 %2791
        %v2793 = vadd.f32 %v2670, %v2672
        %2794 = vadd.xlane.f32.xlu0 %v2793
        %v2795 = vpop.xlane.xlu0 %2794
        %v2796 = vadd.f32 %v2674, %v2676
        %2797 = vadd.xlane.f32.xlu0 %v2796
        %v2798 = vpop.xlane.xlu0 %2797
        %v2799 = vadd.f32 %v2678, %v2680
        %2800 = vadd.xlane.f32.xlu0 %v2799
        %v2801 = vpop.xlane.xlu0 %2800
        %v2802 = vadd.f32 %v2682, %v2684
        %2803 = vadd.xlane.f32.xlu0 %v2802
        %v2804 = vpop.xlane.xlu0 %2803
        %v2805 = vadd.f32 %v2686, %v2688
        %2806 = vadd.xlane.f32.xlu0 %v2805
        %v2807 = vpop.xlane.xlu0 %2806
        %v2808 = vadd.f32 %v2690, %v2692
        %2809 = vadd.xlane.f32.xlu0 %v2808
        %v2810 = vpop.xlane.xlu0 %2809
        %v2811 = vadd.f32 %v2694, %v2696
        %2812 = vadd.xlane.f32.xlu0 %v2811
        %v2813 = vpop.xlane.xlu0 %2812
        %v2814 = vadd.f32 %v2698, %v2700
        %2815 = vadd.xlane.f32.xlu0 %v2814
        %v2816 = vpop.xlane.xlu0 %2815
        %v2817 = vadd.f32 %v2702, %v2704
        %2818 = vadd.xlane.f32.xlu0 %v2817
        %v2819 = vpop.xlane.xlu0 %2818
        %v2820 = vadd.f32 %v2706, %v2708
        %2821 = vadd.xlane.f32.xlu0 %v2820
        %v2822 = vpop.xlane.xlu0 %2821
        %v2823 = vadd.f32 %v2710, %v2712
        %2824 = vadd.xlane.f32.xlu0 %v2823
        %v2825 = vpop.xlane.xlu0 %2824
        %v2826 = vadd.f32 %v2714, %v2716
        %2827 = vadd.xlane.f32.xlu0 %v2826
        %v2828 = vpop.xlane.xlu0 %2827
        %v2829 = vadd.f32 %v2718, %v2720
        %2830 = vadd.xlane.f32.xlu0 %v2829
        %v2831 = vpop.xlane.xlu0 %2830
        %v2832 = vadd.f32 %v2722, %v2724
        %2833 = vadd.xlane.f32.xlu0 %v2832
        %v2834 = vpop.xlane.xlu0 %2833
        %v2835 = vadd.f32 %v2726, %v2728
        %2836 = vadd.xlane.f32.xlu0 %v2835
        %v2837 = vpop.xlane.xlu0 %2836
        %v2838 = vadd.f32 %v2730, %v2732
        %2839 = vadd.xlane.f32.xlu0 %v2838
        %v2840 = vpop.xlane.xlu0 %2839
        %v2841 = vadd.f32 %v2734, %v2736
        %2842 = vadd.xlane.f32.xlu0 %v2841
        %v2843 = vpop.xlane.xlu0 %2842
        %v2844 = vadd.f32 %v2738, %v2740
        %2845 = vadd.xlane.f32.xlu0 %v2844
        %v2846 = vpop.xlane.xlu0 %2845
        %v2847 = vadd.f32 %v2742, %v2744
        %2848 = vadd.xlane.f32.xlu0 %v2847
        %v2849 = vpop.xlane.xlu0 %2848
        %v2850 = vadd.f32 %v2746, %v2748
        %2851 = vadd.xlane.f32.xlu0 %v2850
        %v2852 = vpop.xlane.xlu0 %2851
        %v2853 = vadd.f32 %v2750, %v2752
        %2854 = vadd.xlane.f32.xlu0 %v2853
        %v2855 = vpop.xlane.xlu0 %2854
        %v2856 = vadd.f32 %v2754, %v2756
        %2857 = vadd.xlane.f32.xlu0 %v2856
        %v2858 = vpop.xlane.xlu0 %2857
        %v2859 = vadd.f32 %v2758, %v2760
        %2860 = vadd.xlane.f32.xlu0 %v2859
        %v2861 = vpop.xlane.xlu0 %2860
        %v2862 = vadd.f32 %v2762, %v2764
        %2863 = vadd.xlane.f32.xlu0 %v2862
        %v2864 = vpop.xlane.xlu0 %2863
        %v2865 = vadd.f32 %v2766, %v2768
        %2866 = vadd.xlane.f32.xlu0 %v2865
        %v2867 = vpop.xlane.xlu0 %2866
        %v2868 = vadd.f32 %v2770, %v2772
        %2869 = vadd.xlane.f32.xlu0 %v2868
        %v2870 = vpop.xlane.xlu0 %2869
        %v2871 = vadd.f32 %v2774, %v2776
        %2872 = vadd.xlane.f32.xlu0 %v2871
        %v2873 = vpop.xlane.xlu0 %2872
        %v2874 = vadd.f32 %v2778, %v2780
        %2875 = vadd.xlane.f32.xlu0 %v2874
        %v2876 = vpop.xlane.xlu0 %2875
        %v2877 = vrcp.pop %v2783
        %v2878 = vrcp.pop %v2786
        %v2879 = vrcp.pop %v2789
        %v2880 = vrcp.pop %v2792
        %v2881 = vrcp.pop %v2795
        %v2882 = vrcp.pop %v2798
        %v2883 = vrcp.pop %v2801
        %v2884 = vrcp.pop %v2804
        %v2885 = vrcp.pop %v2807
        %v2886 = vrcp.pop %v2810
        %v2887 = vrcp.pop %v2813
        %v2888 = vrcp.pop %v2816
        %v2889 = vrcp.pop %v2819
        %v2890 = vrcp.pop %v2822
        %v2891 = vrcp.pop %v2825
        %v2892 = vrcp.pop %v2828
        %v2893 = vrcp.pop %v2831
        %v2894 = vrcp.pop %v2834
        %v2895 = vrcp.pop %v2837
        %v2896 = vrcp.pop %v2840
        %v2897 = vrcp.pop %v2843
        %v2898 = vrcp.pop %v2846
        %v2899 = vrcp.pop %v2849
        %v2900 = vrcp.pop %v2852
        %v2901 = vrcp.pop %v2855
        %v2902 = vrcp.pop %v2858
        %v2903 = vrcp.pop %v2861
        %v2904 = vrcp.pop %v2864
        %v2905 = vrcp.pop %v2867
        %v2906 = vrcp.pop %v2870
        %v2907 = vrcp.pop %v2873
        %v2908 = vrcp.pop %v2876
        %v2909 = vmul.f32 %v2654, %v2877
        %v2910 = vmul.f32 %v2656, %v2877
        %v2911 = vmul.f32 %v2658, %v2878
        %v2912 = vmul.f32 %v2660, %v2878
        %v2913 = vmul.f32 %v2662, %v2879
        %v2914 = vmul.f32 %v2664, %v2879
        %v2915 = vmul.f32 %v2666, %v2880
        %v2916 = vmul.f32 %v2668, %v2880
        %v2917 = vmul.f32 %v2670, %v2881
        %v2918 = vmul.f32 %v2672, %v2881
        %v2919 = vmul.f32 %v2674, %v2882
        %v2920 = vmul.f32 %v2676, %v2882
        %v2921 = vmul.f32 %v2678, %v2883
        %v2922 = vmul.f32 %v2680, %v2883
        %v2923 = vmul.f32 %v2682, %v2884
        %v2924 = vmul.f32 %v2684, %v2884
        %v2925 = vmul.f32 %v2686, %v2885
        %v2926 = vmul.f32 %v2688, %v2885
        %v2927 = vmul.f32 %v2690, %v2886
        %v2928 = vmul.f32 %v2692, %v2886
        %v2929 = vmul.f32 %v2694, %v2887
        %v2930 = vmul.f32 %v2696, %v2887
        %v2931 = vmul.f32 %v2698, %v2888
        %v2932 = vmul.f32 %v2700, %v2888
        %v2933 = vmul.f32 %v2702, %v2889
        %v2934 = vmul.f32 %v2704, %v2889
        %v2935 = vmul.f32 %v2706, %v2890
        %v2936 = vmul.f32 %v2708, %v2890
        %v2937 = vmul.f32 %v2710, %v2891
        %v2938 = vmul.f32 %v2712, %v2891
        %v2939 = vmul.f32 %v2714, %v2892
        %v2940 = vmul.f32 %v2716, %v2892
        %v2941 = vmul.f32 %v2718, %v2893
        %v2942 = vmul.f32 %v2720, %v2893
        %v2943 = vmul.f32 %v2722, %v2894
        %v2944 = vmul.f32 %v2724, %v2894
        %v2945 = vmul.f32 %v2726, %v2895
        %v2946 = vmul.f32 %v2728, %v2895
        %v2947 = vmul.f32 %v2730, %v2896
        %v2948 = vmul.f32 %v2732, %v2896
        %v2949 = vmul.f32 %v2734, %v2897
        %v2950 = vmul.f32 %v2736, %v2897
        %v2951 = vmul.f32 %v2738, %v2898
        %v2952 = vmul.f32 %v2740, %v2898
        %v2953 = vmul.f32 %v2742, %v2899
        %v2954 = vmul.f32 %v2744, %v2899
        %v2955 = vmul.f32 %v2746, %v2900
        %v2956 = vmul.f32 %v2748, %v2900
        %v2957 = vmul.f32 %v2750, %v2901
        %v2958 = vmul.f32 %v2752, %v2901
        %v2959 = vmul.f32 %v2754, %v2902
        %v2960 = vmul.f32 %v2756, %v2902
        %v2961 = vmul.f32 %v2758, %v2903
        %v2962 = vmul.f32 %v2760, %v2903
        %v2963 = vmul.f32 %v2762, %v2904
        %v2964 = vmul.f32 %v2764, %v2904
        %v2965 = vmul.f32 %v2766, %v2905
        %v2966 = vmul.f32 %v2768, %v2905
        %v2967 = vmul.f32 %v2770, %v2906
        %v2968 = vmul.f32 %v2772, %v2906
        %v2969 = vmul.f32 %v2774, %v2907
        %v2970 = vmul.f32 %v2776, %v2907
        %v2971 = vmul.f32 %v2778, %v2908
        %v2972 = vmul.f32 %v2780, %v2908
        %v2973 = vpack.c.bf16 %v2911, %v2909
        %v2974 = vpack.c.bf16 %v2912, %v2910
        %v2975 = vpack.c.bf16 %v2915, %v2913
        %v2976 = vpack.c.bf16 %v2916, %v2914
        %v2977 = vpack.c.bf16 %v2919, %v2917
        %v2978 = vpack.c.bf16 %v2920, %v2918
        %v2979 = vpack.c.bf16 %v2923, %v2921
        %v2980 = vpack.c.bf16 %v2924, %v2922
        %v2981 = vpack.c.bf16 %v2927, %v2925
        %v2982 = vpack.c.bf16 %v2928, %v2926
        %v2983 = vpack.c.bf16 %v2931, %v2929
        %v2984 = vpack.c.bf16 %v2932, %v2930
        %v2985 = vpack.c.bf16 %v2935, %v2933
        %v2986 = vpack.c.bf16 %v2936, %v2934
        %v2987 = vpack.c.bf16 %v2939, %v2937
        %v2988 = vpack.c.bf16 %v2940, %v2938
        %v2989 = vpack.c.bf16 %v2943, %v2941
        %v2990 = vpack.c.bf16 %v2944, %v2942
        %v2991 = vpack.c.bf16 %v2947, %v2945
        %v2992 = vpack.c.bf16 %v2948, %v2946
        %v2993 = vpack.c.bf16 %v2951, %v2949
        %v2994 = vpack.c.bf16 %v2952, %v2950
        %v2995 = vpack.c.bf16 %v2955, %v2953
        %v2996 = vpack.c.bf16 %v2956, %v2954
        %v2997 = vpack.c.bf16 %v2959, %v2957
        %v2998 = vpack.c.bf16 %v2960, %v2958
        %v2999 = vpack.c.bf16 %v2963, %v2961
        %v3000 = vpack.c.bf16 %v2964, %v2962
        %v3001 = vpack.c.bf16 %v2967, %v2965
        %v3002 = vpack.c.bf16 %v2968, %v2966
        %v3003 = vpack.c.bf16 %v2971, %v2969
        %v3004 = vpack.c.bf16 %v2972, %v2970
        %3005 = vrot.lane.b32.xlu0 %v2154, 64
        %v3006 = vpop.permute.xlu0 %3005
        %3007 = vrot.lane.b32.xlu0 %v2155, 64
        %v3008 = vpop.permute.xlu0 %3007
        %3009 = vrot.lane.b32.xlu0 %v2156, 64
        %v3010 = vpop.permute.xlu0 %3009
        %3011 = vrot.lane.b32.xlu0 %v2157, 64
        %v3012 = vpop.permute.xlu0 %3011
        %3013 = vrot.lane.b32.xlu0 %v2158, 64
        %v3014 = vpop.permute.xlu0 %3013
        %3015 = vrot.lane.b32.xlu0 %v2159, 64
        %v3016 = vpop.permute.xlu0 %3015
        %3017 = vrot.lane.b32.xlu0 %v2160, 64
        %v3018 = vpop.permute.xlu0 %3017
        %3019 = vrot.lane.b32.xlu0 %v2161, 64
        %v3020 = vpop.permute.xlu0 %3019
        %3021 = vrot.lane.b32.xlu0 %v2162, 64
        %v3022 = vpop.permute.xlu0 %3021
        %3023 = vrot.lane.b32.xlu0 %v2163, 64
        %v3024 = vpop.permute.xlu0 %3023
        %3025 = vrot.lane.b32.xlu0 %v2164, 64
        %v3026 = vpop.permute.xlu0 %3025
        %3027 = vrot.lane.b32.xlu0 %v2165, 64
        %v3028 = vpop.permute.xlu0 %3027
        %3029 = vrot.lane.b32.xlu0 %v2166, 64
        %v3030 = vpop.permute.xlu0 %3029
        %3031 = vrot.lane.b32.xlu0 %v2167, 64
        %v3032 = vpop.permute.xlu0 %3031
        %3033 = vrot.lane.b32.xlu0 %v2168, 64
        %v3034 = vpop.permute.xlu0 %3033
        %3035 = vrot.lane.b32.xlu0 %v2169, 64
        %v3036 = vpop.permute.xlu0 %3035
        %3053 = vmatpush.bf16.msra.mxu0 %v3020
        %3054 = vmatpush.bf16.msra.mxu0 %v3018
        %3055 = vmatpush.bf16.msra.mxu0 %v3016
        %3056 = vmatpush.bf16.msra.mxu0 %v3014
        %3057 = vmatpush.bf16.msra.mxu0 %v3012
        %3058 = vmatpush.bf16.msra.mxu0 %v3010
        %3059 = vmatpush.bf16.msra.mxu0 %v3008
        %3060 = vmatpush.bf16.msra.mxu0 %v3006
        %3061 = vmatmul.bf16.gmra.mxu0 %v2973
        %v3062 = vpop.f32.mrf.mxu0
        %v3063 = vadd.f32 0.0, %v3062
        %v3064 = vpop.f32.mrf.mxu0
        %v3065 = vadd.f32 0.0, %v3064
        %3066 = vmatmul.bf16.gmra.mxu0 %v2975
        %v3067 = vpop.f32.mrf.mxu0
        %v3068 = vadd.f32 0.0, %v3067
        %v3069 = vpop.f32.mrf.mxu0
        %v3070 = vadd.f32 0.0, %v3069
        %3071 = vmatmul.bf16.gmra.mxu0 %v2977
        %v3072 = vpop.f32.mrf.mxu0
        %v3073 = vadd.f32 0.0, %v3072
        %v3074 = vpop.f32.mrf.mxu0
        %v3075 = vadd.f32 0.0, %v3074
        %3076 = vmatmul.bf16.gmra.mxu0 %v2979
        %v3077 = vpop.f32.mrf.mxu0
        %v3078 = vadd.f32 0.0, %v3077
        %v3079 = vpop.f32.mrf.mxu0
        %v3080 = vadd.f32 0.0, %v3079
        %3081 = vmatmul.bf16.gmra.mxu0 %v2981
        %v3082 = vpop.f32.mrf.mxu0
        %v3083 = vadd.f32 0.0, %v3082
        %v3084 = vpop.f32.mrf.mxu0
        %v3085 = vadd.f32 0.0, %v3084
        %3086 = vmatmul.bf16.gmra.mxu0 %v2983
        %v3087 = vpop.f32.mrf.mxu0
        %v3088 = vadd.f32 0.0, %v3087
        %v3089 = vpop.f32.mrf.mxu0
        %v3090 = vadd.f32 0.0, %v3089
        %3091 = vmatmul.bf16.gmra.mxu0 %v2985
        %v3092 = vpop.f32.mrf.mxu0
        %v3093 = vadd.f32 0.0, %v3092
        %v3094 = vpop.f32.mrf.mxu0
        %v3095 = vadd.f32 0.0, %v3094
        %3096 = vmatmul.bf16.gmra.mxu0 %v2987
        %v3097 = vpop.f32.mrf.mxu0
        %v3098 = vadd.f32 0.0, %v3097
        %v3099 = vpop.f32.mrf.mxu0
        %v3100 = vadd.f32 0.0, %v3099
        %3101 = vmatmul.bf16.gmra.mxu0 %v2989
        %v3102 = vpop.f32.mrf.mxu0
        %v3103 = vadd.f32 0.0, %v3102
        %v3104 = vpop.f32.mrf.mxu0
        %v3105 = vadd.f32 0.0, %v3104
        %3106 = vmatmul.bf16.gmra.mxu0 %v2991
        %v3107 = vpop.f32.mrf.mxu0
        %v3108 = vadd.f32 0.0, %v3107
        %v3109 = vpop.f32.mrf.mxu0
        %v3110 = vadd.f32 0.0, %v3109
        %3111 = vmatmul.bf16.gmra.mxu0 %v2993
        %v3112 = vpop.f32.mrf.mxu0
        %v3113 = vadd.f32 0.0, %v3112
        %v3114 = vpop.f32.mrf.mxu0
        %v3115 = vadd.f32 0.0, %v3114
        %3116 = vmatmul.bf16.gmra.mxu0 %v2995
        %v3117 = vpop.f32.mrf.mxu0
        %v3118 = vadd.f32 0.0, %v3117
        %v3119 = vpop.f32.mrf.mxu0
        %v3120 = vadd.f32 0.0, %v3119
        %3121 = vmatmul.bf16.gmra.mxu0 %v2997
        %v3122 = vpop.f32.mrf.mxu0
        %v3123 = vadd.f32 0.0, %v3122
        %v3124 = vpop.f32.mrf.mxu0
        %v3125 = vadd.f32 0.0, %v3124
        %3126 = vmatmul.bf16.gmra.mxu0 %v2999
        %v3127 = vpop.f32.mrf.mxu0
        %v3128 = vadd.f32 0.0, %v3127
        %v3129 = vpop.f32.mrf.mxu0
        %v3130 = vadd.f32 0.0, %v3129
        %3131 = vmatmul.bf16.gmra.mxu0 %v3001
        %v3132 = vpop.f32.mrf.mxu0
        %v3133 = vadd.f32 0.0, %v3132
        %v3134 = vpop.f32.mrf.mxu0
        %v3135 = vadd.f32 0.0, %v3134
        %3136 = vmatmul.bf16.gmra.mxu0 %v3003
        %v3137 = vpop.f32.mrf.mxu0
        %v3138 = vadd.f32 0.0, %v3137
        %v3139 = vpop.f32.mrf.mxu0
        %v3140 = vadd.f32 0.0, %v3139
        %3141 = vdwg.mxu0
        %3142 = vmatpush.bf16.msra.mxu0 %v3036
        %3143 = vmatpush.bf16.msra.mxu0 %v3034
        %3144 = vmatpush.bf16.msra.mxu0 %v3032
        %3145 = vmatpush.bf16.msra.mxu0 %v3030
        %3146 = vmatpush.bf16.msra.mxu0 %v3028
        %3147 = vmatpush.bf16.msra.mxu0 %v3026
        %3148 = vmatpush.bf16.msra.mxu0 %v3024
        %3149 = vmatpush.bf16.msra.mxu0 %v3022
        %3150 = vmatmul.bf16.gmra.mxu0 %v2974
        %v3151 = vpop.f32.mrf.mxu0
        %v3152 = vadd.f32 %v3063, %v3151
        %v3153 = vpop.f32.mrf.mxu0
        %v3154 = vadd.f32 %v3065, %v3153
        %3155 = vmatmul.bf16.gmra.mxu0 %v2976
        %v3156 = vpop.f32.mrf.mxu0
        %v3157 = vadd.f32 %v3068, %v3156
        %v3158 = vpop.f32.mrf.mxu0
        %v3159 = vadd.f32 %v3070, %v3158
        %3160 = vmatmul.bf16.gmra.mxu0 %v2978
        %v3161 = vpop.f32.mrf.mxu0
        %v3162 = vadd.f32 %v3073, %v3161
        %v3163 = vpop.f32.mrf.mxu0
        %v3164 = vadd.f32 %v3075, %v3163
        %3165 = vmatmul.bf16.gmra.mxu0 %v2980
        %v3166 = vpop.f32.mrf.mxu0
        %v3167 = vadd.f32 %v3078, %v3166
        %v3168 = vpop.f32.mrf.mxu0
        %v3169 = vadd.f32 %v3080, %v3168
        %3170 = vmatmul.bf16.gmra.mxu0 %v2982
        %v3171 = vpop.f32.mrf.mxu0
        %v3172 = vadd.f32 %v3083, %v3171
        %v3173 = vpop.f32.mrf.mxu0
        %v3174 = vadd.f32 %v3085, %v3173
        %3175 = vmatmul.bf16.gmra.mxu0 %v2984
        %v3176 = vpop.f32.mrf.mxu0
        %v3177 = vadd.f32 %v3088, %v3176
        %v3178 = vpop.f32.mrf.mxu0
        %v3179 = vadd.f32 %v3090, %v3178
        %3180 = vmatmul.bf16.gmra.mxu0 %v2986
        %v3181 = vpop.f32.mrf.mxu0
        %v3182 = vadd.f32 %v3093, %v3181
        %v3183 = vpop.f32.mrf.mxu0
        %v3184 = vadd.f32 %v3095, %v3183
        %3185 = vmatmul.bf16.gmra.mxu0 %v2988
        %v3186 = vpop.f32.mrf.mxu0
        %v3187 = vadd.f32 %v3098, %v3186
        %v3188 = vpop.f32.mrf.mxu0
        %v3189 = vadd.f32 %v3100, %v3188
        %3190 = vmatmul.bf16.gmra.mxu0 %v2990
        %v3191 = vpop.f32.mrf.mxu0
        %v3192 = vadd.f32 %v3103, %v3191
        %v3193 = vpop.f32.mrf.mxu0
        %v3194 = vadd.f32 %v3105, %v3193
        %3195 = vmatmul.bf16.gmra.mxu0 %v2992
        %v3196 = vpop.f32.mrf.mxu0
        %v3197 = vadd.f32 %v3108, %v3196
        %v3198 = vpop.f32.mrf.mxu0
        %v3199 = vadd.f32 %v3110, %v3198
        %3200 = vmatmul.bf16.gmra.mxu0 %v2994
        %v3201 = vpop.f32.mrf.mxu0
        %v3202 = vadd.f32 %v3113, %v3201
        %v3203 = vpop.f32.mrf.mxu0
        %v3204 = vadd.f32 %v3115, %v3203
        %3205 = vmatmul.bf16.gmra.mxu0 %v2996
        %v3206 = vpop.f32.mrf.mxu0
        %v3207 = vadd.f32 %v3118, %v3206
        %v3208 = vpop.f32.mrf.mxu0
        %v3209 = vadd.f32 %v3120, %v3208
        %3210 = vmatmul.bf16.gmra.mxu0 %v2998
        %v3211 = vpop.f32.mrf.mxu0
        %v3212 = vadd.f32 %v3123, %v3211
        %v3213 = vpop.f32.mrf.mxu0
        %v3214 = vadd.f32 %v3125, %v3213
        %3215 = vmatmul.bf16.gmra.mxu0 %v3000
        %v3216 = vpop.f32.mrf.mxu0
        %v3217 = vadd.f32 %v3128, %v3216
        %v3218 = vpop.f32.mrf.mxu0
        %v3219 = vadd.f32 %v3130, %v3218
        %3220 = vmatmul.bf16.gmra.mxu0 %v3002
        %v3221 = vpop.f32.mrf.mxu0
        %v3222 = vadd.f32 %v3133, %v3221
        %v3223 = vpop.f32.mrf.mxu0
        %v3224 = vadd.f32 %v3135, %v3223
        %3225 = vmatmul.bf16.gmra.mxu0 %v3004
        %v3226 = vpop.f32.mrf.mxu0
        %v3227 = vadd.f32 %v3138, %v3226
        %v3228 = vpop.f32.mrf.mxu0
        %v3229 = vadd.f32 %v3140, %v3228
        %3230 = vdwg.mxu0
        %3231 = vrot.lane.b32.xlu0 %v2154, 112
        %v3232 = vpop.permute.xlu0 %3231
        %3233 = vrot.lane.b32.xlu0 %v2155, 112
        %v3234 = vpop.permute.xlu0 %3233
        %3235 = vrot.lane.b32.xlu0 %v2156, 112
        %v3236 = vpop.permute.xlu0 %3235
        %3237 = vrot.lane.b32.xlu0 %v2157, 112
        %v3238 = vpop.permute.xlu0 %3237
        %3239 = vrot.lane.b32.xlu0 %v2158, 112
        %v3240 = vpop.permute.xlu0 %3239
        %3241 = vrot.lane.b32.xlu0 %v2159, 112
        %v3242 = vpop.permute.xlu0 %3241
        %3243 = vrot.lane.b32.xlu0 %v2160, 112
        %v3244 = vpop.permute.xlu0 %3243
        %3245 = vrot.lane.b32.xlu0 %v2161, 112
        %v3246 = vpop.permute.xlu0 %3245
        %3247 = vrot.lane.b32.xlu0 %v2162, 112
        %v3248 = vpop.permute.xlu0 %3247
        %3249 = vrot.lane.b32.xlu0 %v2163, 112
        %v3250 = vpop.permute.xlu0 %3249
        %3251 = vrot.lane.b32.xlu0 %v2164, 112
        %v3252 = vpop.permute.xlu0 %3251
        %3253 = vrot.lane.b32.xlu0 %v2165, 112
        %v3254 = vpop.permute.xlu0 %3253
        %3255 = vrot.lane.b32.xlu0 %v2166, 112
        %v3256 = vpop.permute.xlu0 %3255
        %3257 = vrot.lane.b32.xlu0 %v2167, 112
        %v3258 = vpop.permute.xlu0 %3257
        %3259 = vrot.lane.b32.xlu0 %v2168, 112
        %v3260 = vpop.permute.xlu0 %3259
        %3261 = vrot.lane.b32.xlu0 %v2169, 112
        %v3262 = vpop.permute.xlu0 %3261
        %3263 = vrot.lane.b32.xlu0 %v2154, 80
        %v3264 = vpop.permute.xlu0 %3263
        %3265 = vrot.lane.b32.xlu0 %v2155, 80
        %v3266 = vpop.permute.xlu0 %3265
        %3267 = vrot.lane.b32.xlu0 %v2156, 80
        %v3268 = vpop.permute.xlu0 %3267
        %3269 = vrot.lane.b32.xlu0 %v2157, 80
        %v3270 = vpop.permute.xlu0 %3269
        %3271 = vrot.lane.b32.xlu0 %v2158, 80
        %v3272 = vpop.permute.xlu0 %3271
        %3273 = vrot.lane.b32.xlu0 %v2159, 80
        %v3274 = vpop.permute.xlu0 %3273
        %3275 = vrot.lane.b32.xlu0 %v2160, 80
        %v3276 = vpop.permute.xlu0 %3275
        %3277 = vrot.lane.b32.xlu0 %v2161, 80
        %v3278 = vpop.permute.xlu0 %3277
        %3279 = vrot.lane.b32.xlu0 %v2162, 80
        %v3280 = vpop.permute.xlu0 %3279
        %3281 = vrot.lane.b32.xlu0 %v2163, 80
        %v3282 = vpop.permute.xlu0 %3281
        %3283 = vrot.lane.b32.xlu0 %v2164, 80
        %v3284 = vpop.permute.xlu0 %3283
        %3285 = vrot.lane.b32.xlu0 %v2165, 80
        %v3286 = vpop.permute.xlu0 %3285
        %3287 = vrot.lane.b32.xlu0 %v2166, 80
        %v3288 = vpop.permute.xlu0 %3287
        %3289 = vrot.lane.b32.xlu0 %v2167, 80
        %v3290 = vpop.permute.xlu0 %3289
        %3291 = vrot.lane.b32.xlu0 %v2168, 80
        %v3292 = vpop.permute.xlu0 %3291
        %3293 = vrot.lane.b32.xlu0 %v2169, 80
        %v3294 = vpop.permute.xlu0 %3293
        %v3296 = vsel %vm2218, %v3232, 0
        %v3299 = vsel %vm2218, %v3234, 0
        %v3302 = vsel %vm2218, %v3236, 0
        %v3305 = vsel %vm2218, %v3238, 0
        %v3308 = vsel %vm2218, %v3240, 0
        %v3311 = vsel %vm2218, %v3242, 0
        %v3314 = vsel %vm2218, %v3244, 0
        %v3317 = vsel %vm2218, %v3246, 0
        %v3320 = vsel %vm2218, %v3248, 0
        %v3323 = vsel %vm2218, %v3250, 0
        %v3326 = vsel %vm2218, %v3252, 0
        %v3329 = vsel %vm2218, %v3254, 0
        %v3332 = vsel %vm2218, %v3256, 0
        %v3335 = vsel %vm2218, %v3258, 0
        %v3338 = vsel %vm2218, %v3260, 0
        %v3341 = vsel %vm2218, %v3262, 0
        %v3344 = vsel %vm2218, %v3264, 0
        %v3347 = vsel %vm2218, %v3266, 0
        %v3350 = vsel %vm2218, %v3268, 0
        %v3353 = vsel %vm2218, %v3270, 0
        %v3356 = vsel %vm2218, %v3272, 0
        %v3359 = vsel %vm2218, %v3274, 0
        %v3362 = vsel %vm2218, %v3276, 0
        %v3365 = vsel %vm2218, %v3278, 0
        %v3368 = vsel %vm2218, %v3280, 0
        %v3371 = vsel %vm2218, %v3282, 0
        %v3374 = vsel %vm2218, %v3284, 0
        %v3377 = vsel %vm2218, %v3286, 0
        %v3380 = vsel %vm2218, %v3288, 0
        %v3383 = vsel %vm2218, %v3290, 0
        %v3386 = vsel %vm2218, %v3292, 0
        %v3389 = vsel %vm2218, %v3294, 0
        %3391 = vmatpush.bf16.xpose.msra.mxu0 %v3365
        %3392 = vmatpush.bf16.xpose.msra.mxu0 %v3362
        %3393 = vmatpush.bf16.xpose.msra.mxu0 %v3359
        %3394 = vmatpush.bf16.xpose.msra.mxu0 %v3356
        %3395 = vmatpush.bf16.xpose.msra.mxu0 %v3353
        %3396 = vmatpush.bf16.xpose.msra.mxu0 %v3350
        %3397 = vmatpush.bf16.xpose.msra.mxu0 %v3347
        %3398 = vmatpush.bf16.xpose.msra.mxu0 %v3344
        %3399 = vmatmul.bf16.gmra.mxu0 %v3296
        %v3400 = vpop.f32.mrf.mxu0
        %v3401 = vadd.f32 %v2090, %v3400
        %v3402 = vpop.f32.mrf.mxu0
        %v3403 = vadd.f32 %v2092, %v3402
        %3404 = vmatmul.bf16.gmra.mxu0 %v3299
        %v3405 = vpop.f32.mrf.mxu0
        %v3406 = vadd.f32 %v2094, %v3405
        %v3407 = vpop.f32.mrf.mxu0
        %v3408 = vadd.f32 %v2096, %v3407
        %3409 = vmatmul.bf16.gmra.mxu0 %v3302
        %v3410 = vpop.f32.mrf.mxu0
        %v3411 = vadd.f32 %v2098, %v3410
        %v3412 = vpop.f32.mrf.mxu0
        %v3413 = vadd.f32 %v2100, %v3412
        %3414 = vmatmul.bf16.gmra.mxu0 %v3305
        %v3415 = vpop.f32.mrf.mxu0
        %v3416 = vadd.f32 %v2102, %v3415
        %v3417 = vpop.f32.mrf.mxu0
        %v3418 = vadd.f32 %v2104, %v3417
        %3419 = vmatmul.bf16.gmra.mxu0 %v3308
        %v3420 = vpop.f32.mrf.mxu0
        %v3421 = vadd.f32 %v2106, %v3420
        %v3422 = vpop.f32.mrf.mxu0
        %v3423 = vadd.f32 %v2108, %v3422
        %3424 = vmatmul.bf16.gmra.mxu0 %v3311
        %v3425 = vpop.f32.mrf.mxu0
        %v3426 = vadd.f32 %v2110, %v3425
        %v3427 = vpop.f32.mrf.mxu0
        %v3428 = vadd.f32 %v2112, %v3427
        %3429 = vmatmul.bf16.gmra.mxu0 %v3314
        %v3430 = vpop.f32.mrf.mxu0
        %v3431 = vadd.f32 %v2114, %v3430
        %v3432 = vpop.f32.mrf.mxu0
        %v3433 = vadd.f32 %v2116, %v3432
        %3434 = vmatmul.bf16.gmra.mxu0 %v3317
        %v3435 = vpop.f32.mrf.mxu0
        %v3436 = vadd.f32 %v2118, %v3435
        %v3437 = vpop.f32.mrf.mxu0
        %v3438 = vadd.f32 %v2120, %v3437
        %3439 = vmatmul.bf16.gmra.mxu0 %v3320
        %v3440 = vpop.f32.mrf.mxu0
        %v3441 = vadd.f32 %v2122, %v3440
        %v3442 = vpop.f32.mrf.mxu0
        %v3443 = vadd.f32 %v2124, %v3442
        %3444 = vmatmul.bf16.gmra.mxu0 %v3323
        %v3445 = vpop.f32.mrf.mxu0
        %v3446 = vadd.f32 %v2126, %v3445
        %v3447 = vpop.f32.mrf.mxu0
        %v3448 = vadd.f32 %v2128, %v3447
        %3449 = vmatmul.bf16.gmra.mxu0 %v3326
        %v3450 = vpop.f32.mrf.mxu0
        %v3451 = vadd.f32 %v2130, %v3450
        %v3452 = vpop.f32.mrf.mxu0
        %v3453 = vadd.f32 %v2132, %v3452
        %3454 = vmatmul.bf16.gmra.mxu0 %v3329
        %v3455 = vpop.f32.mrf.mxu0
        %v3456 = vadd.f32 %v2134, %v3455
        %v3457 = vpop.f32.mrf.mxu0
        %v3458 = vadd.f32 %v2136, %v3457
        %3459 = vmatmul.bf16.gmra.mxu0 %v3332
        %v3460 = vpop.f32.mrf.mxu0
        %v3461 = vadd.f32 %v2138, %v3460
        %v3462 = vpop.f32.mrf.mxu0
        %v3463 = vadd.f32 %v2140, %v3462
        %3464 = vmatmul.bf16.gmra.mxu0 %v3335
        %v3465 = vpop.f32.mrf.mxu0
        %v3466 = vadd.f32 %v2142, %v3465
        %v3467 = vpop.f32.mrf.mxu0
        %v3468 = vadd.f32 %v2144, %v3467
        %3469 = vmatmul.bf16.gmra.mxu0 %v3338
        %v3470 = vpop.f32.mrf.mxu0
        %v3471 = vadd.f32 %v2146, %v3470
        %v3472 = vpop.f32.mrf.mxu0
        %v3473 = vadd.f32 %v2148, %v3472
        %3474 = vmatmul.bf16.gmra.mxu0 %v3341
        %v3475 = vpop.f32.mrf.mxu0
        %v3476 = vadd.f32 %v2150, %v3475
        %v3477 = vpop.f32.mrf.mxu0
        %v3478 = vadd.f32 %v2152, %v3477
        %3479 = vdwg.mxu0
        %3480 = vmatpush.bf16.xpose.msra.mxu0 %v3389
        %3481 = vmatpush.bf16.xpose.msra.mxu0 %v3386
        %3482 = vmatpush.bf16.xpose.msra.mxu0 %v3383
        %3483 = vmatpush.bf16.xpose.msra.mxu0 %v3380
        %3484 = vmatpush.bf16.xpose.msra.mxu0 %v3377
        %3485 = vmatpush.bf16.xpose.msra.mxu0 %v3374
        %3486 = vmatpush.bf16.xpose.msra.mxu0 %v3371
        %3487 = vmatpush.bf16.xpose.msra.mxu0 %v3368
        %3488 = vmatmul.bf16.gmra.mxu0 %v3296
        %v3489 = vpop.f32.mrf.mxu0
        %v3490 = vadd.f32 %v2091, %v3489
        %v3491 = vpop.f32.mrf.mxu0
        %v3492 = vadd.f32 %v2093, %v3491
        %3493 = vmatmul.bf16.gmra.mxu0 %v3299
        %v3494 = vpop.f32.mrf.mxu0
        %v3495 = vadd.f32 %v2095, %v3494
        %v3496 = vpop.f32.mrf.mxu0
        %v3497 = vadd.f32 %v2097, %v3496
        %3498 = vmatmul.bf16.gmra.mxu0 %v3302
        %v3499 = vpop.f32.mrf.mxu0
        %v3500 = vadd.f32 %v2099, %v3499
        %v3501 = vpop.f32.mrf.mxu0
        %v3502 = vadd.f32 %v2101, %v3501
        %3503 = vmatmul.bf16.gmra.mxu0 %v3305
        %v3504 = vpop.f32.mrf.mxu0
        %v3505 = vadd.f32 %v2103, %v3504
        %v3506 = vpop.f32.mrf.mxu0
        %v3507 = vadd.f32 %v2105, %v3506
        %3508 = vmatmul.bf16.gmra.mxu0 %v3308
        %v3509 = vpop.f32.mrf.mxu0
        %v3510 = vadd.f32 %v2107, %v3509
        %v3511 = vpop.f32.mrf.mxu0
        %v3512 = vadd.f32 %v2109, %v3511
        %3513 = vmatmul.bf16.gmra.mxu0 %v3311
        %v3514 = vpop.f32.mrf.mxu0
        %v3515 = vadd.f32 %v2111, %v3514
        %v3516 = vpop.f32.mrf.mxu0
        %v3517 = vadd.f32 %v2113, %v3516
        %3518 = vmatmul.bf16.gmra.mxu0 %v3314
        %v3519 = vpop.f32.mrf.mxu0
        %v3520 = vadd.f32 %v2115, %v3519
        %v3521 = vpop.f32.mrf.mxu0
        %v3522 = vadd.f32 %v2117, %v3521
        %3523 = vmatmul.bf16.gmra.mxu0 %v3317
        %v3524 = vpop.f32.mrf.mxu0
        %v3525 = vadd.f32 %v2119, %v3524
        %v3526 = vpop.f32.mrf.mxu0
        %v3527 = vadd.f32 %v2121, %v3526
        %3528 = vmatmul.bf16.gmra.mxu0 %v3320
        %v3529 = vpop.f32.mrf.mxu0
        %v3530 = vadd.f32 %v2123, %v3529
        %v3531 = vpop.f32.mrf.mxu0
        %v3532 = vadd.f32 %v2125, %v3531
        %3533 = vmatmul.bf16.gmra.mxu0 %v3323
        %v3534 = vpop.f32.mrf.mxu0
        %v3535 = vadd.f32 %v2127, %v3534
        %v3536 = vpop.f32.mrf.mxu0
        %v3537 = vadd.f32 %v2129, %v3536
        %3538 = vmatmul.bf16.gmra.mxu0 %v3326
        %v3539 = vpop.f32.mrf.mxu0
        %v3540 = vadd.f32 %v2131, %v3539
        %v3541 = vpop.f32.mrf.mxu0
        %v3542 = vadd.f32 %v2133, %v3541
        %3543 = vmatmul.bf16.gmra.mxu0 %v3329
        %v3544 = vpop.f32.mrf.mxu0
        %v3545 = vadd.f32 %v2135, %v3544
        %v3546 = vpop.f32.mrf.mxu0
        %v3547 = vadd.f32 %v2137, %v3546
        %3548 = vmatmul.bf16.gmra.mxu0 %v3332
        %v3549 = vpop.f32.mrf.mxu0
        %v3550 = vadd.f32 %v2139, %v3549
        %v3551 = vpop.f32.mrf.mxu0
        %v3552 = vadd.f32 %v2141, %v3551
        %3553 = vmatmul.bf16.gmra.mxu0 %v3335
        %v3554 = vpop.f32.mrf.mxu0
        %v3555 = vadd.f32 %v2143, %v3554
        %v3556 = vpop.f32.mrf.mxu0
        %v3557 = vadd.f32 %v2145, %v3556
        %3558 = vmatmul.bf16.gmra.mxu0 %v3338
        %v3559 = vpop.f32.mrf.mxu0
        %v3560 = vadd.f32 %v2147, %v3559
        %v3561 = vpop.f32.mrf.mxu0
        %v3562 = vadd.f32 %v2149, %v3561
        %3563 = vmatmul.bf16.gmra.mxu0 %v3341
        %v3564 = vpop.f32.mrf.mxu0
        %v3565 = vadd.f32 %v2151, %v3564
        %v3566 = vpop.f32.mrf.mxu0
        %v3567 = vadd.f32 %v2153, %v3566
        %3568 = vdwg.mxu0
        %v3569 = vmax.f32 %v3401, %v3490
        %3570 = vmax.xlane.f32.xlu0 %v3569
        %v3571 = vpop.xlane.xlu0 %3570
        %v3572 = vmax.f32 %v3403, %v3492
        %3573 = vmax.xlane.f32.xlu0 %v3572
        %v3574 = vpop.xlane.xlu0 %3573
        %v3575 = vmax.f32 %v3406, %v3495
        %3576 = vmax.xlane.f32.xlu0 %v3575
        %v3577 = vpop.xlane.xlu0 %3576
        %v3578 = vmax.f32 %v3408, %v3497
        %3579 = vmax.xlane.f32.xlu0 %v3578
        %v3580 = vpop.xlane.xlu0 %3579
        %v3581 = vmax.f32 %v3411, %v3500
        %3582 = vmax.xlane.f32.xlu0 %v3581
        %v3583 = vpop.xlane.xlu0 %3582
        %v3584 = vmax.f32 %v3413, %v3502
        %3585 = vmax.xlane.f32.xlu0 %v3584
        %v3586 = vpop.xlane.xlu0 %3585
        %v3587 = vmax.f32 %v3416, %v3505
        %3588 = vmax.xlane.f32.xlu0 %v3587
        %v3589 = vpop.xlane.xlu0 %3588
        %v3590 = vmax.f32 %v3418, %v3507
        %3591 = vmax.xlane.f32.xlu0 %v3590
        %v3592 = vpop.xlane.xlu0 %3591
        %v3593 = vmax.f32 %v3421, %v3510
        %3594 = vmax.xlane.f32.xlu0 %v3593
        %v3595 = vpop.xlane.xlu0 %3594
        %v3596 = vmax.f32 %v3423, %v3512
        %3597 = vmax.xlane.f32.xlu0 %v3596
        %v3598 = vpop.xlane.xlu0 %3597
        %v3599 = vmax.f32 %v3426, %v3515
        %3600 = vmax.xlane.f32.xlu0 %v3599
        %v3601 = vpop.xlane.xlu0 %3600
        %v3602 = vmax.f32 %v3428, %v3517
        %3603 = vmax.xlane.f32.xlu0 %v3602
        %v3604 = vpop.xlane.xlu0 %3603
        %v3605 = vmax.f32 %v3431, %v3520
        %3606 = vmax.xlane.f32.xlu0 %v3605
        %v3607 = vpop.xlane.xlu0 %3606
        %v3608 = vmax.f32 %v3433, %v3522
        %3609 = vmax.xlane.f32.xlu0 %v3608
        %v3610 = vpop.xlane.xlu0 %3609
        %v3611 = vmax.f32 %v3436, %v3525
        %3612 = vmax.xlane.f32.xlu0 %v3611
        %v3613 = vpop.xlane.xlu0 %3612
        %v3614 = vmax.f32 %v3438, %v3527
        %3615 = vmax.xlane.f32.xlu0 %v3614
        %v3616 = vpop.xlane.xlu0 %3615
        %v3617 = vmax.f32 %v3441, %v3530
        %3618 = vmax.xlane.f32.xlu0 %v3617
        %v3619 = vpop.xlane.xlu0 %3618
        %v3620 = vmax.f32 %v3443, %v3532
        %3621 = vmax.xlane.f32.xlu0 %v3620
        %v3622 = vpop.xlane.xlu0 %3621
        %v3623 = vmax.f32 %v3446, %v3535
        %3624 = vmax.xlane.f32.xlu0 %v3623
        %v3625 = vpop.xlane.xlu0 %3624
        %v3626 = vmax.f32 %v3448, %v3537
        %3627 = vmax.xlane.f32.xlu0 %v3626
        %v3628 = vpop.xlane.xlu0 %3627
        %v3629 = vmax.f32 %v3451, %v3540
        %3630 = vmax.xlane.f32.xlu0 %v3629
        %v3631 = vpop.xlane.xlu0 %3630
        %v3632 = vmax.f32 %v3453, %v3542
        %3633 = vmax.xlane.f32.xlu0 %v3632
        %v3634 = vpop.xlane.xlu0 %3633
        %v3635 = vmax.f32 %v3456, %v3545
        %3636 = vmax.xlane.f32.xlu0 %v3635
        %v3637 = vpop.xlane.xlu0 %3636
        %v3638 = vmax.f32 %v3458, %v3547
        %3639 = vmax.xlane.f32.xlu0 %v3638
        %v3640 = vpop.xlane.xlu0 %3639
        %v3641 = vmax.f32 %v3461, %v3550
        %3642 = vmax.xlane.f32.xlu0 %v3641
        %v3643 = vpop.xlane.xlu0 %3642
        %v3644 = vmax.f32 %v3463, %v3552
        %3645 = vmax.xlane.f32.xlu0 %v3644
        %v3646 = vpop.xlane.xlu0 %3645
        %v3647 = vmax.f32 %v3466, %v3555
        %3648 = vmax.xlane.f32.xlu0 %v3647
        %v3649 = vpop.xlane.xlu0 %3648
        %v3650 = vmax.f32 %v3468, %v3557
        %3651 = vmax.xlane.f32.xlu0 %v3650
        %v3652 = vpop.xlane.xlu0 %3651
        %v3653 = vmax.f32 %v3471, %v3560
        %3654 = vmax.xlane.f32.xlu0 %v3653
        %v3655 = vpop.xlane.xlu0 %3654
        %v3656 = vmax.f32 %v3473, %v3562
        %3657 = vmax.xlane.f32.xlu0 %v3656
        %v3658 = vpop.xlane.xlu0 %3657
        %v3659 = vmax.f32 %v3476, %v3565
        %3660 = vmax.xlane.f32.xlu0 %v3659
        %v3661 = vpop.xlane.xlu0 %3660
        %v3662 = vmax.f32 %v3478, %v3567
        %3663 = vmax.xlane.f32.xlu0 %v3662
        %v3664 = vpop.xlane.xlu0 %3663
        %v3665 = vsub.f32 %v3401, %v3571
        %v3666 = vsub.f32 %v3490, %v3571
        %v3667 = vsub.f32 %v3403, %v3574
        %v3668 = vsub.f32 %v3492, %v3574
        %v3669 = vsub.f32 %v3406, %v3577
        %v3670 = vsub.f32 %v3495, %v3577
        %v3671 = vsub.f32 %v3408, %v3580
        %v3672 = vsub.f32 %v3497, %v3580
        %v3673 = vsub.f32 %v3411, %v3583
        %v3674 = vsub.f32 %v3500, %v3583
        %v3675 = vsub.f32 %v3413, %v3586
        %v3676 = vsub.f32 %v3502, %v3586
        %v3677 = vsub.f32 %v3416, %v3589
        %v3678 = vsub.f32 %v3505, %v3589
        %v3679 = vsub.f32 %v3418, %v3592
        %v3680 = vsub.f32 %v3507, %v3592
        %v3681 = vsub.f32 %v3421, %v3595
        %v3682 = vsub.f32 %v3510, %v3595
        %v3683 = vsub.f32 %v3423, %v3598
        %v3684 = vsub.f32 %v3512, %v3598
        %v3685 = vsub.f32 %v3426, %v3601
        %v3686 = vsub.f32 %v3515, %v3601
        %v3687 = vsub.f32 %v3428, %v3604
        %v3688 = vsub.f32 %v3517, %v3604
        %v3689 = vsub.f32 %v3431, %v3607
        %v3690 = vsub.f32 %v3520, %v3607
        %v3691 = vsub.f32 %v3433, %v3610
        %v3692 = vsub.f32 %v3522, %v3610
        %v3693 = vsub.f32 %v3436, %v3613
        %v3694 = vsub.f32 %v3525, %v3613
        %v3695 = vsub.f32 %v3438, %v3616
        %v3696 = vsub.f32 %v3527, %v3616
        %v3697 = vsub.f32 %v3441, %v3619
        %v3698 = vsub.f32 %v3530, %v3619
        %v3699 = vsub.f32 %v3443, %v3622
        %v3700 = vsub.f32 %v3532, %v3622
        %v3701 = vsub.f32 %v3446, %v3625
        %v3702 = vsub.f32 %v3535, %v3625
        %v3703 = vsub.f32 %v3448, %v3628
        %v3704 = vsub.f32 %v3537, %v3628
        %v3705 = vsub.f32 %v3451, %v3631
        %v3706 = vsub.f32 %v3540, %v3631
        %v3707 = vsub.f32 %v3453, %v3634
        %v3708 = vsub.f32 %v3542, %v3634
        %v3709 = vsub.f32 %v3456, %v3637
        %v3710 = vsub.f32 %v3545, %v3637
        %v3711 = vsub.f32 %v3458, %v3640
        %v3712 = vsub.f32 %v3547, %v3640
        %v3713 = vsub.f32 %v3461, %v3643
        %v3714 = vsub.f32 %v3550, %v3643
        %v3715 = vsub.f32 %v3463, %v3646
        %v3716 = vsub.f32 %v3552, %v3646
        %v3717 = vsub.f32 %v3466, %v3649
        %v3718 = vsub.f32 %v3555, %v3649
        %v3719 = vsub.f32 %v3468, %v3652
        %v3720 = vsub.f32 %v3557, %v3652
        %v3721 = vsub.f32 %v3471, %v3655
        %v3722 = vsub.f32 %v3560, %v3655
        %v3723 = vsub.f32 %v3473, %v3658
        %v3724 = vsub.f32 %v3562, %v3658
        %v3725 = vsub.f32 %v3476, %v3661
        %v3726 = vsub.f32 %v3565, %v3661
        %v3727 = vsub.f32 %v3478, %v3664
        %v3728 = vsub.f32 %v3567, %v3664
        %v3729 = vmul.f32 %v3665, 1.442695
        %v3730 = vpow.pop %v3729
        %v3731 = vmul.f32 %v3666, 1.442695
        %v3732 = vpow.pop %v3731
        %v3733 = vmul.f32 %v3667, 1.442695
        %v3734 = vpow.pop %v3733
        %v3735 = vmul.f32 %v3668, 1.442695
        %v3736 = vpow.pop %v3735
        %v3737 = vmul.f32 %v3669, 1.442695
        %v3738 = vpow.pop %v3737
        %v3739 = vmul.f32 %v3670, 1.442695
        %v3740 = vpow.pop %v3739
        %v3741 = vmul.f32 %v3671, 1.442695
        %v3742 = vpow.pop %v3741
        %v3743 = vmul.f32 %v3672, 1.442695
        %v3744 = vpow.pop %v3743
        %v3745 = vmul.f32 %v3673, 1.442695
        %v3746 = vpow.pop %v3745
        %v3747 = vmul.f32 %v3674, 1.442695
        %v3748 = vpow.pop %v3747
        %v3749 = vmul.f32 %v3675, 1.442695
        %v3750 = vpow.pop %v3749
        %v3751 = vmul.f32 %v3676, 1.442695
        %v3752 = vpow.pop %v3751
        %v3753 = vmul.f32 %v3677, 1.442695
        %v3754 = vpow.pop %v3753
        %v3755 = vmul.f32 %v3678, 1.442695
        %v3756 = vpow.pop %v3755
        %v3757 = vmul.f32 %v3679, 1.442695
        %v3758 = vpow.pop %v3757
        %v3759 = vmul.f32 %v3680, 1.442695
        %v3760 = vpow.pop %v3759
        %v3761 = vmul.f32 %v3681, 1.442695
        %v3762 = vpow.pop %v3761
        %v3763 = vmul.f32 %v3682, 1.442695
        %v3764 = vpow.pop %v3763
        %v3765 = vmul.f32 %v3683, 1.442695
        %v3766 = vpow.pop %v3765
        %v3767 = vmul.f32 %v3684, 1.442695
        %v3768 = vpow.pop %v3767
        %v3769 = vmul.f32 %v3685, 1.442695
        %v3770 = vpow.pop %v3769
        %v3771 = vmul.f32 %v3686, 1.442695
        %v3772 = vpow.pop %v3771
        %v3773 = vmul.f32 %v3687, 1.442695
        %v3774 = vpow.pop %v3773
        %v3775 = vmul.f32 %v3688, 1.442695
        %v3776 = vpow.pop %v3775
        %v3777 = vmul.f32 %v3689, 1.442695
        %v3778 = vpow.pop %v3777
        %v3779 = vmul.f32 %v3690, 1.442695
        %v3780 = vpow.pop %v3779
        %v3781 = vmul.f32 %v3691, 1.442695
        %v3782 = vpow.pop %v3781
        %v3783 = vmul.f32 %v3692, 1.442695
        %v3784 = vpow.pop %v3783
        %v3785 = vmul.f32 %v3693, 1.442695
        %v3786 = vpow.pop %v3785
        %v3787 = vmul.f32 %v3694, 1.442695
        %v3788 = vpow.pop %v3787
        %v3789 = vmul.f32 %v3695, 1.442695
        %v3790 = vpow.pop %v3789
        %v3791 = vmul.f32 %v3696, 1.442695
        %v3792 = vpow.pop %v3791
        %v3793 = vmul.f32 %v3697, 1.442695
        %v3794 = vpow.pop %v3793
        %v3795 = vmul.f32 %v3698, 1.442695
        %v3796 = vpow.pop %v3795
        %v3797 = vmul.f32 %v3699, 1.442695
        %v3798 = vpow.pop %v3797
        %v3799 = vmul.f32 %v3700, 1.442695
        %v3800 = vpow.pop %v3799
        %v3801 = vmul.f32 %v3701, 1.442695
        %v3802 = vpow.pop %v3801
        %v3803 = vmul.f32 %v3702, 1.442695
        %v3804 = vpow.pop %v3803
        %v3805 = vmul.f32 %v3703, 1.442695
        %v3806 = vpow.pop %v3805
        %v3807 = vmul.f32 %v3704, 1.442695
        %v3808 = vpow.pop %v3807
        %v3809 = vmul.f32 %v3705, 1.442695
        %v3810 = vpow.pop %v3809
        %v3811 = vmul.f32 %v3706, 1.442695
        %v3812 = vpow.pop %v3811
        %v3813 = vmul.f32 %v3707, 1.442695
        %v3814 = vpow.pop %v3813
        %v3815 = vmul.f32 %v3708, 1.442695
        %v3816 = vpow.pop %v3815
        %v3817 = vmul.f32 %v3709, 1.442695
        %v3818 = vpow.pop %v3817
        %v3819 = vmul.f32 %v3710, 1.442695
        %v3820 = vpow.pop %v3819
        %v3821 = vmul.f32 %v3711, 1.442695
        %v3822 = vpow.pop %v3821
        %v3823 = vmul.f32 %v3712, 1.442695
        %v3824 = vpow.pop %v3823
        %v3825 = vmul.f32 %v3713, 1.442695
        %v3826 = vpow.pop %v3825
        %v3827 = vmul.f32 %v3714, 1.442695
        %v3828 = vpow.pop %v3827
        %v3829 = vmul.f32 %v3715, 1.442695
        %v3830 = vpow.pop %v3829
        %v3831 = vmul.f32 %v3716, 1.442695
        %v3832 = vpow.pop %v3831
        %v3833 = vmul.f32 %v3717, 1.442695
        %v3834 = vpow.pop %v3833
        %v3835 = vmul.f32 %v3718, 1.442695
        %v3836 = vpow.pop %v3835
        %v3837 = vmul.f32 %v3719, 1.442695
        %v3838 = vpow.pop %v3837
        %v3839 = vmul.f32 %v3720, 1.442695
        %v3840 = vpow.pop %v3839
        %v3841 = vmul.f32 %v3721, 1.442695
        %v3842 = vpow.pop %v3841
        %v3843 = vmul.f32 %v3722, 1.442695
        %v3844 = vpow.pop %v3843
        %v3845 = vmul.f32 %v3723, 1.442695
        %v3846 = vpow.pop %v3845
        %v3847 = vmul.f32 %v3724, 1.442695
        %v3848 = vpow.pop %v3847
        %v3849 = vmul.f32 %v3725, 1.442695
        %v3850 = vpow.pop %v3849
        %v3851 = vmul.f32 %v3726, 1.442695
        %v3852 = vpow.pop %v3851
        %v3853 = vmul.f32 %v3727, 1.442695
        %v3854 = vpow.pop %v3853
        %v3855 = vmul.f32 %v3728, 1.442695
        %v3856 = vpow.pop %v3855
        %v3857 = vadd.f32 %v3730, %v3732
        %3858 = vadd.xlane.f32.xlu0 %v3857
        %v3859 = vpop.xlane.xlu0 %3858
        %v3860 = vadd.f32 %v3734, %v3736
        %3861 = vadd.xlane.f32.xlu0 %v3860
        %v3862 = vpop.xlane.xlu0 %3861
        %v3863 = vadd.f32 %v3738, %v3740
        %3864 = vadd.xlane.f32.xlu0 %v3863
        %v3865 = vpop.xlane.xlu0 %3864
        %v3866 = vadd.f32 %v3742, %v3744
        %3867 = vadd.xlane.f32.xlu0 %v3866
        %v3868 = vpop.xlane.xlu0 %3867
        %v3869 = vadd.f32 %v3746, %v3748
        %3870 = vadd.xlane.f32.xlu0 %v3869
        %v3871 = vpop.xlane.xlu0 %3870
        %v3872 = vadd.f32 %v3750, %v3752
        %3873 = vadd.xlane.f32.xlu0 %v3872
        %v3874 = vpop.xlane.xlu0 %3873
        %v3875 = vadd.f32 %v3754, %v3756
        %3876 = vadd.xlane.f32.xlu0 %v3875
        %v3877 = vpop.xlane.xlu0 %3876
        %v3878 = vadd.f32 %v3758, %v3760
        %3879 = vadd.xlane.f32.xlu0 %v3878
        %v3880 = vpop.xlane.xlu0 %3879
        %v3881 = vadd.f32 %v3762, %v3764
        %3882 = vadd.xlane.f32.xlu0 %v3881
        %v3883 = vpop.xlane.xlu0 %3882
        %v3884 = vadd.f32 %v3766, %v3768
        %3885 = vadd.xlane.f32.xlu0 %v3884
        %v3886 = vpop.xlane.xlu0 %3885
        %v3887 = vadd.f32 %v3770, %v3772
        %3888 = vadd.xlane.f32.xlu0 %v3887
        %v3889 = vpop.xlane.xlu0 %3888
        %v3890 = vadd.f32 %v3774, %v3776
        %3891 = vadd.xlane.f32.xlu0 %v3890
        %v3892 = vpop.xlane.xlu0 %3891
        %v3893 = vadd.f32 %v3778, %v3780
        %3894 = vadd.xlane.f32.xlu0 %v3893
        %v3895 = vpop.xlane.xlu0 %3894
        %v3896 = vadd.f32 %v3782, %v3784
        %3897 = vadd.xlane.f32.xlu0 %v3896
        %v3898 = vpop.xlane.xlu0 %3897
        %v3899 = vadd.f32 %v3786, %v3788
        %3900 = vadd.xlane.f32.xlu0 %v3899
        %v3901 = vpop.xlane.xlu0 %3900
        %v3902 = vadd.f32 %v3790, %v3792
        %3903 = vadd.xlane.f32.xlu0 %v3902
        %v3904 = vpop.xlane.xlu0 %3903
        %v3905 = vadd.f32 %v3794, %v3796
        %3906 = vadd.xlane.f32.xlu0 %v3905
        %v3907 = vpop.xlane.xlu0 %3906
        %v3908 = vadd.f32 %v3798, %v3800
        %3909 = vadd.xlane.f32.xlu0 %v3908
        %v3910 = vpop.xlane.xlu0 %3909
        %v3911 = vadd.f32 %v3802, %v3804
        %3912 = vadd.xlane.f32.xlu0 %v3911
        %v3913 = vpop.xlane.xlu0 %3912
        %v3914 = vadd.f32 %v3806, %v3808
        %3915 = vadd.xlane.f32.xlu0 %v3914
        %v3916 = vpop.xlane.xlu0 %3915
        %v3917 = vadd.f32 %v3810, %v3812
        %3918 = vadd.xlane.f32.xlu0 %v3917
        %v3919 = vpop.xlane.xlu0 %3918
        %v3920 = vadd.f32 %v3814, %v3816
        %3921 = vadd.xlane.f32.xlu0 %v3920
        %v3922 = vpop.xlane.xlu0 %3921
        %v3923 = vadd.f32 %v3818, %v3820
        %3924 = vadd.xlane.f32.xlu0 %v3923
        %v3925 = vpop.xlane.xlu0 %3924
        %v3926 = vadd.f32 %v3822, %v3824
        %3927 = vadd.xlane.f32.xlu0 %v3926
        %v3928 = vpop.xlane.xlu0 %3927
        %v3929 = vadd.f32 %v3826, %v3828
        %3930 = vadd.xlane.f32.xlu0 %v3929
        %v3931 = vpop.xlane.xlu0 %3930
        %v3932 = vadd.f32 %v3830, %v3832
        %3933 = vadd.xlane.f32.xlu0 %v3932
        %v3934 = vpop.xlane.xlu0 %3933
        %v3935 = vadd.f32 %v3834, %v3836
        %3936 = vadd.xlane.f32.xlu0 %v3935
        %v3937 = vpop.xlane.xlu0 %3936
        %v3938 = vadd.f32 %v3838, %v3840
        %3939 = vadd.xlane.f32.xlu0 %v3938
        %v3940 = vpop.xlane.xlu0 %3939
        %v3941 = vadd.f32 %v3842, %v3844
        %3942 = vadd.xlane.f32.xlu0 %v3941
        %v3943 = vpop.xlane.xlu0 %3942
        %v3944 = vadd.f32 %v3846, %v3848
        %3945 = vadd.xlane.f32.xlu0 %v3944
        %v3946 = vpop.xlane.xlu0 %3945
        %v3947 = vadd.f32 %v3850, %v3852
        %3948 = vadd.xlane.f32.xlu0 %v3947
        %v3949 = vpop.xlane.xlu0 %3948
        %v3950 = vadd.f32 %v3854, %v3856
        %3951 = vadd.xlane.f32.xlu0 %v3950
        %v3952 = vpop.xlane.xlu0 %3951
        %v3953 = vrcp.pop %v3859
        %v3954 = vrcp.pop %v3862
        %v3955 = vrcp.pop %v3865
        %v3956 = vrcp.pop %v3868
        %v3957 = vrcp.pop %v3871
        %v3958 = vrcp.pop %v3874
        %v3959 = vrcp.pop %v3877
        %v3960 = vrcp.pop %v3880
        %v3961 = vrcp.pop %v3883
        %v3962 = vrcp.pop %v3886
        %v3963 = vrcp.pop %v3889
        %v3964 = vrcp.pop %v3892
        %v3965 = vrcp.pop %v3895
        %v3966 = vrcp.pop %v3898
        %v3967 = vrcp.pop %v3901
        %v3968 = vrcp.pop %v3904
        %v3969 = vrcp.pop %v3907
        %v3970 = vrcp.pop %v3910
        %v3971 = vrcp.pop %v3913
        %v3972 = vrcp.pop %v3916
        %v3973 = vrcp.pop %v3919
        %v3974 = vrcp.pop %v3922
        %v3975 = vrcp.pop %v3925
        %v3976 = vrcp.pop %v3928
        %v3977 = vrcp.pop %v3931
        %v3978 = vrcp.pop %v3934
        %v3979 = vrcp.pop %v3937
        %v3980 = vrcp.pop %v3940
        %v3981 = vrcp.pop %v3943
        %v3982 = vrcp.pop %v3946
        %v3983 = vrcp.pop %v3949
        %v3984 = vrcp.pop %v3952
        %v3985 = vmul.f32 %v3730, %v3953
        %v3986 = vmul.f32 %v3732, %v3953
        %v3987 = vmul.f32 %v3734, %v3954
        %v3988 = vmul.f32 %v3736, %v3954
        %v3989 = vmul.f32 %v3738, %v3955
        %v3990 = vmul.f32 %v3740, %v3955
        %v3991 = vmul.f32 %v3742, %v3956
        %v3992 = vmul.f32 %v3744, %v3956
        %v3993 = vmul.f32 %v3746, %v3957
        %v3994 = vmul.f32 %v3748, %v3957
        %v3995 = vmul.f32 %v3750, %v3958
        %v3996 = vmul.f32 %v3752, %v3958
        %v3997 = vmul.f32 %v3754, %v3959
        %v3998 = vmul.f32 %v3756, %v3959
        %v3999 = vmul.f32 %v3758, %v3960
        %v4000 = vmul.f32 %v3760, %v3960
        %v4001 = vmul.f32 %v3762, %v3961
        %v4002 = vmul.f32 %v3764, %v3961
        %v4003 = vmul.f32 %v3766, %v3962
        %v4004 = vmul.f32 %v3768, %v3962
        %v4005 = vmul.f32 %v3770, %v3963
        %v4006 = vmul.f32 %v3772, %v3963
        %v4007 = vmul.f32 %v3774, %v3964
        %v4008 = vmul.f32 %v3776, %v3964
        %v4009 = vmul.f32 %v3778, %v3965
        %v4010 = vmul.f32 %v3780, %v3965
        %v4011 = vmul.f32 %v3782, %v3966
        %v4012 = vmul.f32 %v3784, %v3966
        %v4013 = vmul.f32 %v3786, %v3967
        %v4014 = vmul.f32 %v3788, %v3967
        %v4015 = vmul.f32 %v3790, %v3968
        %v4016 = vmul.f32 %v3792, %v3968
        %v4017 = vmul.f32 %v3794, %v3969
        %v4018 = vmul.f32 %v3796, %v3969
        %v4019 = vmul.f32 %v3798, %v3970
        %v4020 = vmul.f32 %v3800, %v3970
        %v4021 = vmul.f32 %v3802, %v3971
        %v4022 = vmul.f32 %v3804, %v3971
        %v4023 = vmul.f32 %v3806, %v3972
        %v4024 = vmul.f32 %v3808, %v3972
        %v4025 = vmul.f32 %v3810, %v3973
        %v4026 = vmul.f32 %v3812, %v3973
        %v4027 = vmul.f32 %v3814, %v3974
        %v4028 = vmul.f32 %v3816, %v3974
        %v4029 = vmul.f32 %v3818, %v3975
        %v4030 = vmul.f32 %v3820, %v3975
        %v4031 = vmul.f32 %v3822, %v3976
        %v4032 = vmul.f32 %v3824, %v3976
        %v4033 = vmul.f32 %v3826, %v3977
        %v4034 = vmul.f32 %v3828, %v3977
        %v4035 = vmul.f32 %v3830, %v3978
        %v4036 = vmul.f32 %v3832, %v3978
        %v4037 = vmul.f32 %v3834, %v3979
        %v4038 = vmul.f32 %v3836, %v3979
        %v4039 = vmul.f32 %v3838, %v3980
        %v4040 = vmul.f32 %v3840, %v3980
        %v4041 = vmul.f32 %v3842, %v3981
        %v4042 = vmul.f32 %v3844, %v3981
        %v4043 = vmul.f32 %v3846, %v3982
        %v4044 = vmul.f32 %v3848, %v3982
        %v4045 = vmul.f32 %v3850, %v3983
        %v4046 = vmul.f32 %v3852, %v3983
        %v4047 = vmul.f32 %v3854, %v3984
        %v4048 = vmul.f32 %v3856, %v3984
        %v4049 = vpack.c.bf16 %v3987, %v3985
        %v4050 = vpack.c.bf16 %v3988, %v3986
        %v4051 = vpack.c.bf16 %v3991, %v3989
        %v4052 = vpack.c.bf16 %v3992, %v3990
        %v4053 = vpack.c.bf16 %v3995, %v3993
        %v4054 = vpack.c.bf16 %v3996, %v3994
        %v4055 = vpack.c.bf16 %v3999, %v3997
        %v4056 = vpack.c.bf16 %v4000, %v3998
        %v4057 = vpack.c.bf16 %v4003, %v4001
        %v4058 = vpack.c.bf16 %v4004, %v4002
        %v4059 = vpack.c.bf16 %v4007, %v4005
        %v4060 = vpack.c.bf16 %v4008, %v4006
        %v4061 = vpack.c.bf16 %v4011, %v4009
        %v4062 = vpack.c.bf16 %v4012, %v4010
        %v4063 = vpack.c.bf16 %v4015, %v4013
        %v4064 = vpack.c.bf16 %v4016, %v4014
        %v4065 = vpack.c.bf16 %v4019, %v4017
        %v4066 = vpack.c.bf16 %v4020, %v4018
        %v4067 = vpack.c.bf16 %v4023, %v4021
        %v4068 = vpack.c.bf16 %v4024, %v4022
        %v4069 = vpack.c.bf16 %v4027, %v4025
        %v4070 = vpack.c.bf16 %v4028, %v4026
        %v4071 = vpack.c.bf16 %v4031, %v4029
        %v4072 = vpack.c.bf16 %v4032, %v4030
        %v4073 = vpack.c.bf16 %v4035, %v4033
        %v4074 = vpack.c.bf16 %v4036, %v4034
        %v4075 = vpack.c.bf16 %v4039, %v4037
        %v4076 = vpack.c.bf16 %v4040, %v4038
        %v4077 = vpack.c.bf16 %v4043, %v4041
        %v4078 = vpack.c.bf16 %v4044, %v4042
        %v4079 = vpack.c.bf16 %v4047, %v4045
        %v4080 = vpack.c.bf16 %v4048, %v4046
        %4081 = vrot.lane.b32.xlu0 %v2154, 48
        %v4082 = vpop.permute.xlu0 %4081
        %4083 = vrot.lane.b32.xlu0 %v2155, 48
        %v4084 = vpop.permute.xlu0 %4083
        %4085 = vrot.lane.b32.xlu0 %v2156, 48
        %v4086 = vpop.permute.xlu0 %4085
        %4087 = vrot.lane.b32.xlu0 %v2157, 48
        %v4088 = vpop.permute.xlu0 %4087
        %4089 = vrot.lane.b32.xlu0 %v2158, 48
        %v4090 = vpop.permute.xlu0 %4089
        %4091 = vrot.lane.b32.xlu0 %v2159, 48
        %v4092 = vpop.permute.xlu0 %4091
        %4093 = vrot.lane.b32.xlu0 %v2160, 48
        %v4094 = vpop.permute.xlu0 %4093
        %4095 = vrot.lane.b32.xlu0 %v2161, 48
        %v4096 = vpop.permute.xlu0 %4095
        %4097 = vrot.lane.b32.xlu0 %v2162, 48
        %v4098 = vpop.permute.xlu0 %4097
        %4099 = vrot.lane.b32.xlu0 %v2163, 48
        %v4100 = vpop.permute.xlu0 %4099
        %4101 = vrot.lane.b32.xlu0 %v2164, 48
        %v4102 = vpop.permute.xlu0 %4101
        %4103 = vrot.lane.b32.xlu0 %v2165, 48
        %v4104 = vpop.permute.xlu0 %4103
        %4105 = vrot.lane.b32.xlu0 %v2166, 48
        %v4106 = vpop.permute.xlu0 %4105
        %4107 = vrot.lane.b32.xlu0 %v2167, 48
        %v4108 = vpop.permute.xlu0 %4107
        %4109 = vrot.lane.b32.xlu0 %v2168, 48
        %v4110 = vpop.permute.xlu0 %4109
        %4111 = vrot.lane.b32.xlu0 %v2169, 48
        %v4112 = vpop.permute.xlu0 %4111
        %4129 = vmatpush.bf16.msra.mxu0 %v4096
        %4130 = vmatpush.bf16.msra.mxu0 %v4094
        %4131 = vmatpush.bf16.msra.mxu0 %v4092
        %4132 = vmatpush.bf16.msra.mxu0 %v4090
        %4133 = vmatpush.bf16.msra.mxu0 %v4088
        %4134 = vmatpush.bf16.msra.mxu0 %v4086
        %4135 = vmatpush.bf16.msra.mxu0 %v4084
        %4136 = vmatpush.bf16.msra.mxu0 %v4082
        %4137 = vmatmul.bf16.gmra.mxu0 %v4049
        %v4138 = vpop.f32.mrf.mxu0
        %v4139 = vadd.f32 0.0, %v4138
        %v4140 = vpop.f32.mrf.mxu0
        %v4141 = vadd.f32 0.0, %v4140
        %4142 = vmatmul.bf16.gmra.mxu0 %v4051
        %v4143 = vpop.f32.mrf.mxu0
        %v4144 = vadd.f32 0.0, %v4143
        %v4145 = vpop.f32.mrf.mxu0
        %v4146 = vadd.f32 0.0, %v4145
        %4147 = vmatmul.bf16.gmra.mxu0 %v4053
        %v4148 = vpop.f32.mrf.mxu0
        %v4149 = vadd.f32 0.0, %v4148
        %v4150 = vpop.f32.mrf.mxu0
        %v4151 = vadd.f32 0.0, %v4150
        %4152 = vmatmul.bf16.gmra.mxu0 %v4055
        %v4153 = vpop.f32.mrf.mxu0
        %v4154 = vadd.f32 0.0, %v4153
        %v4155 = vpop.f32.mrf.mxu0
        %v4156 = vadd.f32 0.0, %v4155
        %4157 = vmatmul.bf16.gmra.mxu0 %v4057
        %v4158 = vpop.f32.mrf.mxu0
        %v4159 = vadd.f32 0.0, %v4158
        %v4160 = vpop.f32.mrf.mxu0
        %v4161 = vadd.f32 0.0, %v4160
        %4162 = vmatmul.bf16.gmra.mxu0 %v4059
        %v4163 = vpop.f32.mrf.mxu0
        %v4164 = vadd.f32 0.0, %v4163
        %v4165 = vpop.f32.mrf.mxu0
        %v4166 = vadd.f32 0.0, %v4165
        %4167 = vmatmul.bf16.gmra.mxu0 %v4061
        %v4168 = vpop.f32.mrf.mxu0
        %v4169 = vadd.f32 0.0, %v4168
        %v4170 = vpop.f32.mrf.mxu0
        %v4171 = vadd.f32 0.0, %v4170
        %4172 = vmatmul.bf16.gmra.mxu0 %v4063
        %v4173 = vpop.f32.mrf.mxu0
        %v4174 = vadd.f32 0.0, %v4173
        %v4175 = vpop.f32.mrf.mxu0
        %v4176 = vadd.f32 0.0, %v4175
        %4177 = vmatmul.bf16.gmra.mxu0 %v4065
        %v4178 = vpop.f32.mrf.mxu0
        %v4179 = vadd.f32 0.0, %v4178
        %v4180 = vpop.f32.mrf.mxu0
        %v4181 = vadd.f32 0.0, %v4180
        %4182 = vmatmul.bf16.gmra.mxu0 %v4067
        %v4183 = vpop.f32.mrf.mxu0
        %v4184 = vadd.f32 0.0, %v4183
        %v4185 = vpop.f32.mrf.mxu0
        %v4186 = vadd.f32 0.0, %v4185
        %4187 = vmatmul.bf16.gmra.mxu0 %v4069
        %v4188 = vpop.f32.mrf.mxu0
        %v4189 = vadd.f32 0.0, %v4188
        %v4190 = vpop.f32.mrf.mxu0
        %v4191 = vadd.f32 0.0, %v4190
        %4192 = vmatmul.bf16.gmra.mxu0 %v4071
        %v4193 = vpop.f32.mrf.mxu0
        %v4194 = vadd.f32 0.0, %v4193
        %v4195 = vpop.f32.mrf.mxu0
        %v4196 = vadd.f32 0.0, %v4195
        %4197 = vmatmul.bf16.gmra.mxu0 %v4073
        %v4198 = vpop.f32.mrf.mxu0
        %v4199 = vadd.f32 0.0, %v4198
        %v4200 = vpop.f32.mrf.mxu0
        %v4201 = vadd.f32 0.0, %v4200
        %4202 = vmatmul.bf16.gmra.mxu0 %v4075
        %v4203 = vpop.f32.mrf.mxu0
        %v4204 = vadd.f32 0.0, %v4203
        %v4205 = vpop.f32.mrf.mxu0
        %v4206 = vadd.f32 0.0, %v4205
        %4207 = vmatmul.bf16.gmra.mxu0 %v4077
        %v4208 = vpop.f32.mrf.mxu0
        %v4209 = vadd.f32 0.0, %v4208
        %v4210 = vpop.f32.mrf.mxu0
        %v4211 = vadd.f32 0.0, %v4210
        %4212 = vmatmul.bf16.gmra.mxu0 %v4079
        %v4213 = vpop.f32.mrf.mxu0
        %v4214 = vadd.f32 0.0, %v4213
        %v4215 = vpop.f32.mrf.mxu0
        %v4216 = vadd.f32 0.0, %v4215
        %4217 = vdwg.mxu0
        %4218 = vmatpush.bf16.msra.mxu0 %v4112
        %4219 = vmatpush.bf16.msra.mxu0 %v4110
        %4220 = vmatpush.bf16.msra.mxu0 %v4108
        %4221 = vmatpush.bf16.msra.mxu0 %v4106
        %4222 = vmatpush.bf16.msra.mxu0 %v4104
        %4223 = vmatpush.bf16.msra.mxu0 %v4102
        %4224 = vmatpush.bf16.msra.mxu0 %v4100
        %4225 = vmatpush.bf16.msra.mxu0 %v4098
        %4226 = vmatmul.bf16.gmra.mxu0 %v4050
        %v4227 = vpop.f32.mrf.mxu0
        %v4228 = vadd.f32 %v4139, %v4227
        %v4229 = vpop.f32.mrf.mxu0
        %v4230 = vadd.f32 %v4141, %v4229
        %4231 = vmatmul.bf16.gmra.mxu0 %v4052
        %v4232 = vpop.f32.mrf.mxu0
        %v4233 = vadd.f32 %v4144, %v4232
        %v4234 = vpop.f32.mrf.mxu0
        %v4235 = vadd.f32 %v4146, %v4234
        %4236 = vmatmul.bf16.gmra.mxu0 %v4054
        %v4237 = vpop.f32.mrf.mxu0
        %v4238 = vadd.f32 %v4149, %v4237
        %v4239 = vpop.f32.mrf.mxu0
        %v4240 = vadd.f32 %v4151, %v4239
        %4241 = vmatmul.bf16.gmra.mxu0 %v4056
        %v4242 = vpop.f32.mrf.mxu0
        %v4243 = vadd.f32 %v4154, %v4242
        %v4244 = vpop.f32.mrf.mxu0
        %v4245 = vadd.f32 %v4156, %v4244
        %4246 = vmatmul.bf16.gmra.mxu0 %v4058
        %v4247 = vpop.f32.mrf.mxu0
        %v4248 = vadd.f32 %v4159, %v4247
        %v4249 = vpop.f32.mrf.mxu0
        %v4250 = vadd.f32 %v4161, %v4249
        %4251 = vmatmul.bf16.gmra.mxu0 %v4060
        %v4252 = vpop.f32.mrf.mxu0
        %v4253 = vadd.f32 %v4164, %v4252
        %v4254 = vpop.f32.mrf.mxu0
        %v4255 = vadd.f32 %v4166, %v4254
        %4256 = vmatmul.bf16.gmra.mxu0 %v4062
        %v4257 = vpop.f32.mrf.mxu0
        %v4258 = vadd.f32 %v4169, %v4257
        %v4259 = vpop.f32.mrf.mxu0
        %v4260 = vadd.f32 %v4171, %v4259
        %4261 = vmatmul.bf16.gmra.mxu0 %v4064
        %v4262 = vpop.f32.mrf.mxu0
        %v4263 = vadd.f32 %v4174, %v4262
        %v4264 = vpop.f32.mrf.mxu0
        %v4265 = vadd.f32 %v4176, %v4264
        %4266 = vmatmul.bf16.gmra.mxu0 %v4066
        %v4267 = vpop.f32.mrf.mxu0
        %v4268 = vadd.f32 %v4179, %v4267
        %v4269 = vpop.f32.mrf.mxu0
        %v4270 = vadd.f32 %v4181, %v4269
        %4271 = vmatmul.bf16.gmra.mxu0 %v4068
        %v4272 = vpop.f32.mrf.mxu0
        %v4273 = vadd.f32 %v4184, %v4272
        %v4274 = vpop.f32.mrf.mxu0
        %v4275 = vadd.f32 %v4186, %v4274
        %4276 = vmatmul.bf16.gmra.mxu0 %v4070
        %v4277 = vpop.f32.mrf.mxu0
        %v4278 = vadd.f32 %v4189, %v4277
        %v4279 = vpop.f32.mrf.mxu0
        %v4280 = vadd.f32 %v4191, %v4279
        %4281 = vmatmul.bf16.gmra.mxu0 %v4072
        %v4282 = vpop.f32.mrf.mxu0
        %v4283 = vadd.f32 %v4194, %v4282
        %v4284 = vpop.f32.mrf.mxu0
        %v4285 = vadd.f32 %v4196, %v4284
        %4286 = vmatmul.bf16.gmra.mxu0 %v4074
        %v4287 = vpop.f32.mrf.mxu0
        %v4288 = vadd.f32 %v4199, %v4287
        %v4289 = vpop.f32.mrf.mxu0
        %v4290 = vadd.f32 %v4201, %v4289
        %4291 = vmatmul.bf16.gmra.mxu0 %v4076
        %v4292 = vpop.f32.mrf.mxu0
        %v4293 = vadd.f32 %v4204, %v4292
        %v4294 = vpop.f32.mrf.mxu0
        %v4295 = vadd.f32 %v4206, %v4294
        %4296 = vmatmul.bf16.gmra.mxu0 %v4078
        %v4297 = vpop.f32.mrf.mxu0
        %v4298 = vadd.f32 %v4209, %v4297
        %v4299 = vpop.f32.mrf.mxu0
        %v4300 = vadd.f32 %v4211, %v4299
        %4301 = vmatmul.bf16.gmra.mxu0 %v4080
        %v4302 = vpop.f32.mrf.mxu0
        %v4303 = vadd.f32 %v4214, %v4302
        %v4304 = vpop.f32.mrf.mxu0
        %v4305 = vadd.f32 %v4216, %v4304
        %4306 = vdwg.mxu0
        %4339 = vrot.lane.b32.xlu0 %v4228, 16
        %v4340 = vpop.permute.xlu0 %4339
        %4341 = vrot.lane.b32.xlu0 %v4230, 16
        %v4342 = vpop.permute.xlu0 %4341
        %4343 = vrot.lane.b32.xlu0 %v4233, 16
        %v4344 = vpop.permute.xlu0 %4343
        %4345 = vrot.lane.b32.xlu0 %v4235, 16
        %v4346 = vpop.permute.xlu0 %4345
        %4347 = vrot.lane.b32.xlu0 %v4238, 16
        %v4348 = vpop.permute.xlu0 %4347
        %4349 = vrot.lane.b32.xlu0 %v4240, 16
        %v4350 = vpop.permute.xlu0 %4349
        %4351 = vrot.lane.b32.xlu0 %v4243, 16
        %v4352 = vpop.permute.xlu0 %4351
        %4353 = vrot.lane.b32.xlu0 %v4245, 16
        %v4354 = vpop.permute.xlu0 %4353
        %4355 = vrot.lane.b32.xlu0 %v4248, 16
        %v4356 = vpop.permute.xlu0 %4355
        %4357 = vrot.lane.b32.xlu0 %v4250, 16
        %v4358 = vpop.permute.xlu0 %4357
        %4359 = vrot.lane.b32.xlu0 %v4253, 16
        %v4360 = vpop.permute.xlu0 %4359
        %4361 = vrot.lane.b32.xlu0 %v4255, 16
        %v4362 = vpop.permute.xlu0 %4361
        %4363 = vrot.lane.b32.xlu0 %v4258, 16
        %v4364 = vpop.permute.xlu0 %4363
        %4365 = vrot.lane.b32.xlu0 %v4260, 16
        %v4366 = vpop.permute.xlu0 %4365
        %4367 = vrot.lane.b32.xlu0 %v4263, 16
        %v4368 = vpop.permute.xlu0 %4367
        %4369 = vrot.lane.b32.xlu0 %v4265, 16
        %v4370 = vpop.permute.xlu0 %4369
        %4371 = vrot.lane.b32.xlu0 %v4268, 16
        %v4372 = vpop.permute.xlu0 %4371
        %4373 = vrot.lane.b32.xlu0 %v4270, 16
        %v4374 = vpop.permute.xlu0 %4373
        %4375 = vrot.lane.b32.xlu0 %v4273, 16
        %v4376 = vpop.permute.xlu0 %4375
        %4377 = vrot.lane.b32.xlu0 %v4275, 16
        %v4378 = vpop.permute.xlu0 %4377
        %4379 = vrot.lane.b32.xlu0 %v4278, 16
        %v4380 = vpop.permute.xlu0 %4379
        %4381 = vrot.lane.b32.xlu0 %v4280, 16
        %v4382 = vpop.permute.xlu0 %4381
        %4383 = vrot.lane.b32.xlu0 %v4283, 16
        %v4384 = vpop.permute.xlu0 %4383
        %4385 = vrot.lane.b32.xlu0 %v4285, 16
        %v4386 = vpop.permute.xlu0 %4385
        %4387 = vrot.lane.b32.xlu0 %v4288, 16
        %v4388 = vpop.permute.xlu0 %4387
        %4389 = vrot.lane.b32.xlu0 %v4290, 16
        %v4390 = vpop.permute.xlu0 %4389
        %4391 = vrot.lane.b32.xlu0 %v4293, 16
        %v4392 = vpop.permute.xlu0 %4391
        %4393 = vrot.lane.b32.xlu0 %v4295, 16
        %v4394 = vpop.permute.xlu0 %4393
        %4395 = vrot.lane.b32.xlu0 %v4298, 16
        %v4396 = vpop.permute.xlu0 %4395
        %4397 = vrot.lane.b32.xlu0 %v4300, 16
        %v4398 = vpop.permute.xlu0 %4397
        %4399 = vrot.lane.b32.xlu0 %v4303, 16
        %v4400 = vpop.permute.xlu0 %4399
        %4401 = vrot.lane.b32.xlu0 %v4305, 16
        %v4402 = vpop.permute.xlu0 %4401
        %v4435 = vsel %vm2218, %v3152, %v4340
        %v4436 = vsel %vm2218, %v3154, %v4342
        %v4437 = vsel %vm2218, %v3157, %v4344
        %v4438 = vsel %vm2218, %v3159, %v4346
        %v4439 = vsel %vm2218, %v3162, %v4348
        %v4440 = vsel %vm2218, %v3164, %v4350
        %v4441 = vsel %vm2218, %v3167, %v4352
        %v4442 = vsel %vm2218, %v3169, %v4354
        %v4443 = vsel %vm2218, %v3172, %v4356
        %v4444 = vsel %vm2218, %v3174, %v4358
        %v4445 = vsel %vm2218, %v3177, %v4360
        %v4446 = vsel %vm2218, %v3179, %v4362
        %v4447 = vsel %vm2218, %v3182, %v4364
        %v4448 = vsel %vm2218, %v3184, %v4366
        %v4449 = vsel %vm2218, %v3187, %v4368
        %v4450 = vsel %vm2218, %v3189, %v4370
        %v4451 = vsel %vm2218, %v3192, %v4372
        %v4452 = vsel %vm2218, %v3194, %v4374
        %v4453 = vsel %vm2218, %v3197, %v4376
        %v4454 = vsel %vm2218, %v3199, %v4378
        %v4455 = vsel %vm2218, %v3202, %v4380
        %v4456 = vsel %vm2218, %v3204, %v4382
        %v4457 = vsel %vm2218, %v3207, %v4384
        %v4458 = vsel %vm2218, %v3209, %v4386
        %v4459 = vsel %vm2218, %v3212, %v4388
        %v4460 = vsel %vm2218, %v3214, %v4390
        %v4461 = vsel %vm2218, %v3217, %v4392
        %v4462 = vsel %vm2218, %v3219, %v4394
        %v4463 = vsel %vm2218, %v3222, %v4396
        %v4464 = vsel %vm2218, %v3224, %v4398
        %v4465 = vsel %vm2218, %v3227, %v4400
        %v4466 = vsel %vm2218, %v3229, %v4402
        %v4467 = vpack.c.bf16 %v4435, %v4435
        %v4468 = vpack.c.bf16 %v4436, %v4436
        %v4469 = vpack.c.bf16 %v4437, %v4437
        %v4470 = vpack.c.bf16 %v4438, %v4438
        %v4471 = vpack.c.bf16 %v4439, %v4439
        %v4472 = vpack.c.bf16 %v4440, %v4440
        %v4473 = vpack.c.bf16 %v4441, %v4441
        %v4474 = vpack.c.bf16 %v4442, %v4442
        %v4475 = vpack.c.bf16 %v4443, %v4443
        %v4476 = vpack.c.bf16 %v4444, %v4444
        %v4477 = vpack.c.bf16 %v4445, %v4445
        %v4478 = vpack.c.bf16 %v4446, %v4446
        %v4479 = vpack.c.bf16 %v4447, %v4447
        %v4480 = vpack.c.bf16 %v4448, %v4448
        %v4481 = vpack.c.bf16 %v4449, %v4449
        %v4482 = vpack.c.bf16 %v4450, %v4450
        %v4483 = vpack.c.bf16 %v4451, %v4451
        %v4484 = vpack.c.bf16 %v4452, %v4452
        %v4485 = vpack.c.bf16 %v4453, %v4453
        %v4486 = vpack.c.bf16 %v4454, %v4454
        %v4487 = vpack.c.bf16 %v4455, %v4455
        %v4488 = vpack.c.bf16 %v4456, %v4456
        %v4489 = vpack.c.bf16 %v4457, %v4457
        %v4490 = vpack.c.bf16 %v4458, %v4458
        %v4491 = vpack.c.bf16 %v4459, %v4459
        %v4492 = vpack.c.bf16 %v4460, %v4460
        %v4493 = vpack.c.bf16 %v4461, %v4461
        %v4494 = vpack.c.bf16 %v4462, %v4462
        %v4495 = vpack.c.bf16 %v4463, %v4463
        %v4496 = vpack.c.bf16 %v4464, %v4464
        %v4497 = vpack.c.bf16 %v4465, %v4465
        %v4498 = vpack.c.bf16 %v4466, %v4466
        %v4531 = vunpack.c.l.b16 %v4467
        %v4532 = vunpack.c.l.b16 %v4468
        %v4533 = vunpack.c.l.b16 %v4469
        %v4534 = vunpack.c.l.b16 %v4470
        %v4535 = vunpack.c.l.b16 %v4471
        %v4536 = vunpack.c.l.b16 %v4472
        %v4537 = vunpack.c.l.b16 %v4473
        %v4538 = vunpack.c.l.b16 %v4474
        %v4539 = vunpack.c.l.b16 %v4475
        %v4540 = vunpack.c.l.b16 %v4476
        %v4541 = vunpack.c.l.b16 %v4477
        %v4542 = vunpack.c.l.b16 %v4478
        %v4543 = vunpack.c.l.b16 %v4479
        %v4544 = vunpack.c.l.b16 %v4480
        %v4545 = vunpack.c.l.b16 %v4481
        %v4546 = vunpack.c.l.b16 %v4482
        %v4547 = vunpack.c.l.b16 %v4483
        %v4548 = vunpack.c.l.b16 %v4484
        %v4549 = vunpack.c.l.b16 %v4485
        %v4550 = vunpack.c.l.b16 %v4486
        %v4551 = vunpack.c.l.b16 %v4487
        %v4552 = vunpack.c.l.b16 %v4488
        %v4553 = vunpack.c.l.b16 %v4489
        %v4554 = vunpack.c.l.b16 %v4490
        %v4555 = vunpack.c.l.b16 %v4491
        %v4556 = vunpack.c.l.b16 %v4492
        %v4557 = vunpack.c.l.b16 %v4493
        %v4558 = vunpack.c.l.b16 %v4494
        %v4559 = vunpack.c.l.b16 %v4495
        %v4560 = vunpack.c.l.b16 %v4496
        %v4561 = vunpack.c.l.b16 %v4497
        %v4562 = vunpack.c.l.b16 %v4498
        %v4563 = vpack.c.b16 %v4532, %v4531
        %v4564 = vpack.c.b16 %v4534, %v4533
        %v4565 = vpack.c.b16 %v4536, %v4535
        %v4566 = vpack.c.b16 %v4538, %v4537
        %v4567 = vpack.c.b16 %v4540, %v4539
        %v4568 = vpack.c.b16 %v4542, %v4541
        %v4569 = vpack.c.b16 %v4544, %v4543
        %v4570 = vpack.c.b16 %v4546, %v4545
        %v4571 = vpack.c.b16 %v4548, %v4547
        %v4572 = vpack.c.b16 %v4550, %v4549
        %v4573 = vpack.c.b16 %v4552, %v4551
        %v4574 = vpack.c.b16 %v4554, %v4553
        %v4575 = vpack.c.b16 %v4556, %v4555
        %v4576 = vpack.c.b16 %v4558, %v4557
        %v4577 = vpack.c.b16 %v4560, %v4559
        %v4578 = vpack.c.b16 %v4562, %v4561
        %4579 = vrot.lane.b32.xlu0 %v4563, 32
        %v4580 = vpop.permute.xlu0 %4579
        %4581 = vrot.lane.b32.xlu0 %v4564, 32
        %v4582 = vpop.permute.xlu0 %4581
        %4583 = vrot.lane.b32.xlu0 %v4565, 32
        %v4584 = vpop.permute.xlu0 %4583
        %4585 = vrot.lane.b32.xlu0 %v4566, 32
        %v4586 = vpop.permute.xlu0 %4585
        %4587 = vrot.lane.b32.xlu0 %v4567, 32
        %v4588 = vpop.permute.xlu0 %4587
        %4589 = vrot.lane.b32.xlu0 %v4568, 32
        %v4590 = vpop.permute.xlu0 %4589
        %4591 = vrot.lane.b32.xlu0 %v4569, 32
        %v4592 = vpop.permute.xlu0 %4591
        %4593 = vrot.lane.b32.xlu0 %v4570, 32
        %v4594 = vpop.permute.xlu0 %4593
        %4595 = vrot.lane.b32.xlu0 %v4571, 32
        %v4596 = vpop.permute.xlu0 %4595
        %4597 = vrot.lane.b32.xlu0 %v4572, 32
        %v4598 = vpop.permute.xlu0 %4597
        %4599 = vrot.lane.b32.xlu0 %v4573, 32
        %v4600 = vpop.permute.xlu0 %4599
        %4601 = vrot.lane.b32.xlu0 %v4574, 32
        %v4602 = vpop.permute.xlu0 %4601
        %4603 = vrot.lane.b32.xlu0 %v4575, 32
        %v4604 = vpop.permute.xlu0 %4603
        %4605 = vrot.lane.b32.xlu0 %v4576, 32
        %v4606 = vpop.permute.xlu0 %4605
        %4607 = vrot.lane.b32.xlu0 %v4577, 32
        %v4608 = vpop.permute.xlu0 %4607
        %4609 = vrot.lane.b32.xlu0 %v4578, 32
        %v4610 = vpop.permute.xlu0 %4609
        %v4612 = vsel %vm1952, %v1924, %v4580
        %v4614 = vsel %vm1952, %v1925, %v4582
        %v4616 = vsel %vm1952, %v1926, %v4584
        %v4618 = vsel %vm1952, %v1927, %v4586
        %v4620 = vsel %vm1952, %v1928, %v4588
        %v4622 = vsel %vm1952, %v1929, %v4590
        %v4624 = vsel %vm1952, %v1930, %v4592
        %v4626 = vsel %vm1952, %v1931, %v4594
        %v4628 = vsel %vm1952, %v1932, %v4596
        %v4630 = vsel %vm1952, %v1933, %v4598
        %v4632 = vsel %vm1952, %v1934, %v4600
        %v4634 = vsel %vm1952, %v1935, %v4602
        %v4636 = vsel %vm1952, %v1936, %v4604
        %v4638 = vsel %vm1952, %v1937, %v4606
        %v4640 = vsel %vm1952, %v1938, %v4608
        %v4642 = vsel %vm1952, %v1939, %v4610
        %v4643 = vld [vmem:[%s6] sm:$0xf]
        %v4644 = vld [vmem:[%s6 + $0x4] sm:$0xf]
        %v4645 = vld [vmem:[%s6 + $0x8] sm:$0xf]
        %v4646 = vld [vmem:[%s6 + $0xc] sm:$0xf]
        %v4647 = vld [vmem:[%s6 + $0x10] sm:$0xf]
        %v4648 = vld [vmem:[%s6 + $0x14] sm:$0xf]
        %v4649 = vld [vmem:[%s6 + $0x18] sm:$0xf]
        %v4650 = vld [vmem:[%s6 + $0x1c] sm:$0xf]
        %v4651 = vld [vmem:[%s7] sm:$0x1]
        %v4653 = vperm.slane %v4651, 0
        %v4663 = vunpack.c.l.b16 %v4643
        %v4664 = vunpack.c.l.b16 %v4644
        %v4665 = vunpack.c.l.b16 %v4645
        %v4666 = vunpack.c.l.b16 %v4646
        %v4667 = vunpack.c.l.b16 %v4647
        %v4668 = vunpack.c.l.b16 %v4648
        %v4669 = vunpack.c.l.b16 %v4649
        %v4670 = vunpack.c.l.b16 %v4650
        %v4671 = vpack.c.b16 %v4664, %v4663
        %v4672 = vpack.c.b16 %v4666, %v4665
        %v4673 = vpack.c.b16 %v4668, %v4667
        %v4674 = vpack.c.b16 %v4670, %v4669
        %vm4679 = vcmask 523264
        %v4680 = vsel %vm4679, %v4612, 0
        %v4682 = vsel %vm4679, %v4614, 0
        %v4684 = vsel %vm4679, %v4616, 0
        %v4686 = vsel %vm4679, %v4618, 0
        %v4688 = vsel %vm4679, %v4620, 0
        %v4690 = vsel %vm4679, %v4622, 0
        %v4692 = vsel %vm4679, %v4624, 0
        %v4694 = vsel %vm4679, %v4626, 0
        %v4696 = vsel %vm4679, %v4628, 0
        %v4698 = vsel %vm4679, %v4630, 0
        %v4700 = vsel %vm4679, %v4632, 0
        %v4702 = vsel %vm4679, %v4634, 0
        %v4704 = vsel %vm4679, %v4636, 0
        %v4706 = vsel %vm4679, %v4638, 0
        %v4708 = vsel %vm4679, %v4640, 0
        %v4710 = vsel %vm4679, %v4642, 0
        %4712 = vmatpush.bf16.msra.mxu0 0
        %4713 = vmatpush.bf16.msra.mxu0 0
        %4714 = vmatpush.bf16.msra.mxu0 0
        %4715 = vmatpush.bf16.msra.mxu0 0
        %4716 = vmatpush.bf16.msra.mxu0 %v4674
        %4717 = vmatpush.bf16.msra.mxu0 %v4673
        %4718 = vmatpush.bf16.msra.mxu0 %v4672
        %4719 = vmatpush.bf16.msra.mxu0 %v4671
        %4720 = vmatmul.bf16.gmra.mxu0 %v4680
        %v4721 = vpop.f32.mrf.mxu0
        %v4722 = vadd.f32 %v4653, %v4721
        %v4723 = vpop.f32.mrf.mxu0
        %v4724 = vadd.f32 %v4653, %v4723
        %4725 = vmatmul.bf16.gmra.mxu0 %v4682
        %v4726 = vpop.f32.mrf.mxu0
        %v4727 = vadd.f32 %v4653, %v4726
        %v4728 = vpop.f32.mrf.mxu0
        %v4729 = vadd.f32 %v4653, %v4728
        %4730 = vmatmul.bf16.gmra.mxu0 %v4684
        %v4731 = vpop.f32.mrf.mxu0
        %v4732 = vadd.f32 %v4653, %v4731
        %v4733 = vpop.f32.mrf.mxu0
        %v4734 = vadd.f32 %v4653, %v4733
        %4735 = vmatmul.bf16.gmra.mxu0 %v4686
        %v4736 = vpop.f32.mrf.mxu0
        %v4737 = vadd.f32 %v4653, %v4736
        %v4738 = vpop.f32.mrf.mxu0
        %v4739 = vadd.f32 %v4653, %v4738
        %4740 = vmatmul.bf16.gmra.mxu0 %v4688
        %v4741 = vpop.f32.mrf.mxu0
        %v4742 = vadd.f32 %v4653, %v4741
        %v4743 = vpop.f32.mrf.mxu0
        %v4744 = vadd.f32 %v4653, %v4743
        %4745 = vmatmul.bf16.gmra.mxu0 %v4690
        %v4746 = vpop.f32.mrf.mxu0
        %v4747 = vadd.f32 %v4653, %v4746
        %v4748 = vpop.f32.mrf.mxu0
        %v4749 = vadd.f32 %v4653, %v4748
        %4750 = vmatmul.bf16.gmra.mxu0 %v4692
        %v4751 = vpop.f32.mrf.mxu0
        %v4752 = vadd.f32 %v4653, %v4751
        %v4753 = vpop.f32.mrf.mxu0
        %v4754 = vadd.f32 %v4653, %v4753
        %4755 = vmatmul.bf16.gmra.mxu0 %v4694
        %v4756 = vpop.f32.mrf.mxu0
        %v4757 = vadd.f32 %v4653, %v4756
        %v4758 = vpop.f32.mrf.mxu0
        %v4759 = vadd.f32 %v4653, %v4758
        %4760 = vmatmul.bf16.gmra.mxu0 %v4696
        %v4761 = vpop.f32.mrf.mxu0
        %v4762 = vadd.f32 %v4653, %v4761
        %v4763 = vpop.f32.mrf.mxu0
        %v4764 = vadd.f32 %v4653, %v4763
        %4765 = vmatmul.bf16.gmra.mxu0 %v4698
        %v4766 = vpop.f32.mrf.mxu0
        %v4767 = vadd.f32 %v4653, %v4766
        %v4768 = vpop.f32.mrf.mxu0
        %v4769 = vadd.f32 %v4653, %v4768
        %4770 = vmatmul.bf16.gmra.mxu0 %v4700
        %v4771 = vpop.f32.mrf.mxu0
        %v4772 = vadd.f32 %v4653, %v4771
        %v4773 = vpop.f32.mrf.mxu0
        %v4774 = vadd.f32 %v4653, %v4773
        %4775 = vmatmul.bf16.gmra.mxu0 %v4702
        %v4776 = vpop.f32.mrf.mxu0
        %v4777 = vadd.f32 %v4653, %v4776
        %v4778 = vpop.f32.mrf.mxu0
        %v4779 = vadd.f32 %v4653, %v4778
        %4780 = vmatmul.bf16.gmra.mxu0 %v4704
        %v4781 = vpop.f32.mrf.mxu0
        %v4782 = vadd.f32 %v4653, %v4781
        %v4783 = vpop.f32.mrf.mxu0
        %v4784 = vadd.f32 %v4653, %v4783
        %4785 = vmatmul.bf16.gmra.mxu0 %v4706
        %v4786 = vpop.f32.mrf.mxu0
        %v4787 = vadd.f32 %v4653, %v4786
        %v4788 = vpop.f32.mrf.mxu0
        %v4789 = vadd.f32 %v4653, %v4788
        %4790 = vmatmul.bf16.gmra.mxu0 %v4708
        %v4791 = vpop.f32.mrf.mxu0
        %v4792 = vadd.f32 %v4653, %v4791
        %v4793 = vpop.f32.mrf.mxu0
        %v4794 = vadd.f32 %v4653, %v4793
        %4795 = vmatmul.bf16.gmra.mxu0 %v4710
        %v4796 = vpop.f32.mrf.mxu0
        %v4797 = vadd.f32 %v4653, %v4796
        %v4798 = vpop.f32.mrf.mxu0
        %v4799 = vadd.f32 %v4653, %v4798
        %4800 = vdwg.mxu0
        %4801 = vst [vmem:[%s299] sm:$0xff] %v4722
        %4802 = vst [vmem:[%s299 + $0x8] sm:$0xff] %v4724
        %4803 = vst [vmem:[%s299 + $0x10] sm:$0xff] %v4727
        %4804 = vst [vmem:[%s299 + $0x18] sm:$0xff] %v4729
        %4805 = vst [vmem:[%s299 + $0x20] sm:$0xff] %v4732
        %4806 = vst [vmem:[%s299 + $0x28] sm:$0xff] %v4734
        %4807 = vst [vmem:[%s299 + $0x30] sm:$0xff] %v4737
        %4808 = vst [vmem:[%s299 + $0x38] sm:$0xff] %v4739
        %4809 = vst [vmem:[%s299 + $0x40] sm:$0xff] %v4742
        %4810 = vst [vmem:[%s299 + $0x48] sm:$0xff] %v4744
        %4811 = vst [vmem:[%s299 + $0x50] sm:$0xff] %v4747
        %4812 = vst [vmem:[%s299 + $0x58] sm:$0xff] %v4749
        %4813 = vst [vmem:[%s299 + $0x60] sm:$0xff] %v4752
        %4814 = vst [vmem:[%s299 + $0x68] sm:$0xff] %v4754
        %4815 = vst [vmem:[%s299 + $0x70] sm:$0xff] %v4757
        %4816 = vst [vmem:[%s299 + $0x78] sm:$0xff] %v4759
        %4817 = vst [vmem:[%s299 + $0x80] sm:$0xff] %v4762
        %4818 = vst [vmem:[%s299 + $0x88] sm:$0xff] %v4764
        %4819 = vst [vmem:[%s299 + $0x90] sm:$0xff] %v4767
        %4820 = vst [vmem:[%s299 + $0x98] sm:$0xff] %v4769
        %4821 = vst [vmem:[%s299 + $0xa0] sm:$0xff] %v4772
        %4822 = vst [vmem:[%s299 + $0xa8] sm:$0xff] %v4774
        %4823 = vst [vmem:[%s299 + $0xb0] sm:$0xff] %v4777
        %4824 = vst [vmem:[%s299 + $0xb8] sm:$0xff] %v4779
        %4825 = vst [vmem:[%s299 + $0xc0] sm:$0xff] %v4782
        %4826 = vst [vmem:[%s299 + $0xc8] sm:$0xff] %v4784
        %4827 = vst [vmem:[%s299 + $0xd0] sm:$0xff] %v4787
        %4828 = vst [vmem:[%s299 + $0xd8] sm:$0xff] %v4789
        %4829 = vst [vmem:[%s299 + $0xe0] sm:$0xff] %v4792
        %4830 = vst [vmem:[%s299 + $0xe8] sm:$0xff] %v4794
        %4831 = vst [vmem:[%s299 + $0xf0] sm:$0xff] %v4797
        %4832 = vst [vmem:[%s299 + $0xf8] sm:$0xff] %v4799
        %s4833 = sand.u32 %s203, 1
        %s4834 = scalar_lea.sflag [#allocation3], %s4833
        %s4835 = sand.u32 %s203, 1
        %s4836 = smul.addr %s4835, 256
        %s4837 = scalar_lea.vmem [#allocation2], %s4836
        // Predicated region
        $region53: #{tpu_custom_call.1} parent=51 // pred_check
          %p4838 = pneg %p213
        $region54: #{tpu_custom_call.1} parent=51 // pred_check_branch
          %4840 = sbr.rel (%p4838) target = $region56
        $region55: #{tpu_custom_call.1} parent=51 // pred_region
          %s4841 = smul.u32 32, %s22
          %4843 = vsyncadd %s4834, 0
          %s4844 = smul.addr %s4841, 8
          %s4845 = scalar_lea.hbm %s8, %s4844
          %s4846 = sshll.u32 %s4837, 4
          %s4847 = int_to_ptr.vmem [resolvable:$true] %s4846
          %s4848 = sshll.u32 %s4845, 4
          %s4849 = int_to_ptr.hbm [resolvable:$true] %s4848
          %4854 = dma.vmem_to_hbm [thread:$0]  %s4847, 4096, %s4849, %s4834, 128, 128, 8
        $region56: #{tpu_custom_call.1} parent=51 // pred_fallthru
          _
      $region52: #{tpu_custom_call.1} parent=5 // pred_fallthru
        _
      %p4855 = scmp.le.s32.totalorder 2, %s17
      // Predicated region
      $region57: #{tpu_custom_call.1} parent=5 // pred_check
        %p4856 = pneg %p4855
      $region58: #{tpu_custom_call.1} parent=5 // pred_check_branch
        %4858 = sbr.rel (%p4856) target = $region60
      $region59: #{tpu_custom_call.1} parent=5 // pred_region
        %s4859 = ssub.s32 %s17, 2
        // Predicated region
        $region61: #{tpu_custom_call.1} parent=59 // pred_check
          %p4860 = pneg %p219
        $region62: #{tpu_custom_call.1} parent=59 // pred_check_branch
          %4862 = sbr.rel (%p4860) target = $region64
        $region63: #{tpu_custom_call.1} parent=59 // pred_region
          %s4863 = sand.u32 %s204, 1
          %s4864 = scalar_lea.sflag [#allocation3], %s4863
          %s4865 = sand.u32 %s204, 1
          %s4866 = smul.addr %s4865, 256
          %s4867 = scalar_lea.vmem [#allocation2], %s4866
          %4869 = dma.done %s4864, 4096
        $region64: #{tpu_custom_call.1} parent=59 // pred_fallthru
          _
      $region60: #{tpu_custom_call.1} parent=5 // pred_fallthru
        _
    $region6: #{tpu_custom_call.1} parent=1 // loop_footer
      %s21 = sadd.s32 1, %s17
    $region7: #{tpu_custom_call.1} parent=1 // loop_footer_branch
      %16 = sbr.rel target = $region3
    $region8: #{tpu_custom_call.1} parent=1 // loop_exit
      _
    %4870 = vsyncpa [#allocation3], 1
    %s4871 = scalar_lea.sflag [#allocation3], 1
    %4872 = vsyncpa %s4871, 1

</llo_original>
